<compile_context>
chip_gen: v5e
topology: v5e:2x2
jax: 0.10.0
libtpu: 0.0.40
codegen_flags: <defaults>
</compile_context>

<pallas_src>
import functools

import jax
import jax.numpy as jnp
from jax import lax
from jax.experimental import pallas as pl
from jax.experimental.pallas import tpu as pltpu

CP = 128                        # padded channel width (lane-dense outputs)
MATMUL_DTYPE = jnp.bfloat16     # MXU operand dtype; accumulation is always f32


def _get_layer_indices(layers, target_names):
    return [layers.index(n) for n in target_names]


def _ceil_to(x, m):
    return ((x + m - 1) // m) * m


def _pad_last(x, size):
    pad = size - x.shape[-1]
    if pad == 0:
        return x
    widths = [(0, 0)] * (x.ndim - 1) + [(0, pad)]
    return jnp.pad(x, widths)


# ----------------------------------------------------------------------------
# Fused whole-network kernel
# ----------------------------------------------------------------------------

def _make_kernel(h, w, hs, ws, hb, wb, block_cfg, n_chunks, chunk):
    """Build the fused forward kernel.  block_cfg: list of (cin, cout, has_ds)."""
    n_fixed = 13
    n_blk = sum(9 if hd else 6 for (_, _, hd) in block_cfg)
    f32 = jnp.float32
    mm = MATMUL_DTYPE
    nb_sp = hb * wb

    def kernel(*args):
        (xim_ref, last_ref, stem_w_ref, stem_s_ref, stem_b_ref,
         pnm_ref, pool_sel_ref, cmask_ref, g_ref, wmap_ref,
         dwb_ref, head_w_ref, head_b_ref) = args[:n_fixed]
        blk_refs = args[n_fixed:n_fixed + n_blk]
        out_ref = args[n_fixed + n_blk]

        # ---- stem: ONE matmul on the wrapper-built channel-packed im2col,
        #      fused with folded BN + ReLU ----
        y = jnp.dot(xim_ref[0], stem_w_ref[...], preferred_element_type=f32)
        y = jnp.maximum(y * stem_s_ref[...] + stem_b_ref[...], 0.0)

        # ---- MaxPool2d(3,2,1): 3x3 stride-1 max via rolled taps + additive
        #      -BIG masks (no padded scratch), then the stride-2 subsample as a
        #      single bf16 0/1-selection matmul ----
        m = y
        for di in range(3):
            for dj in range(3):
                if di == 1 and dj == 1:
                    continue
                s = (di - 1) * ws + (dj - 1)
                m = jnp.maximum(m, jnp.roll(y, -s, axis=0) + pnm_ref[di * 3 + dj])
        xb = jnp.dot(pool_sel_ref[...], m.astype(mm), preferred_element_type=f32)

        # ---- BasicBlocks: each 3x3 conv is ONE matmul over a channel-packed
        #      K = 9*cin im2col built in-register from rolled + masked taps ----
        cmasks = [cmask_ref[t] for t in range(9)]          # hoisted (16,1) loads

        def conv3x3(act, cin, w_ref):
            kpad = _ceil_to(9 * cin, CP)
            xn = act[:, :cin]                              # real channels only
            pieces = []
            for kh in range(3):
                for kw in range(3):
                    s = (kh - 1) * wb + (kw - 1)
                    r = xn if s == 0 else jnp.roll(xn, -s, axis=0)
                    pieces.append(r * cmasks[kh * 3 + kw])
            if kpad > 9 * cin:
                pieces.append(jnp.zeros((nb_sp, kpad - 9 * cin), f32))
            xcat = jnp.concatenate(pieces, axis=-1).astype(mm)
            return jnp.dot(xcat, w_ref[...], preferred_element_type=f32)

        idx = 0
        for cin, cout, has_ds in block_cfg:
            w1, s1, b1, w2, s2, b2 = blk_refs[idx:idx + 6]
            idx += 6
            if has_ds:
                wd, sd, bd = blk_refs[idx:idx + 3]
                idx += 3
            y1 = jnp.maximum(conv3x3(xb, cin, w1) * s1[...] + b1[...], 0.0)
            y2 = conv3x3(y1, cout, w2) * s2[...] + b2[...]
            if has_ds:
                ident = (jnp.dot(xb.astype(mm), wd[...], preferred_element_type=f32)
                         * sd[...] + bd[...])
            else:
                ident = xb
            xb = jnp.maximum(y2 + ident, 0.0)

        # ---- head: (x4 nearest upsample + depthwise 5x5) folded into 4
        #      gather-matmul x weight-map terms, then 1x1 conv + tanh +
        #      residual add + clamp, strip-mined over 4-output-row chunks ----
        xbm = xb.astype(mm)
        for c in range(n_chunks):
            r0 = c * chunk
            xd = jnp.zeros((chunk, CP), f32)
            for t in range(4):
                g = jnp.dot(g_ref[t, r0:r0 + chunk, :], xbm,
                            preferred_element_type=f32)
                xd = xd + g * wmap_ref[t, r0:r0 + chunk, :]
            xd = xd + dwb_ref[...]
            hv = jnp.dot(xd.astype(mm), head_w_ref[...], preferred_element_type=f32)
            res = jnp.tanh(hv + head_b_ref[...])
            out_ref[0, r0:r0 + chunk, :] = jnp.clip(
                last_ref[0, r0:r0 + chunk, :] + res, 0.0, 1.0)

    return kernel, n_fixed, n_blk


def _const_spec(arr):
    n = arr.ndim
    return pl.BlockSpec(arr.shape, lambda i, _n=n: (0,) * _n)


def _fused_forward_call(xim, last, stem_w, stem_s, stem_b, pool_negmask, pool_sel,
                        conv_mask, g_mat, wmap, dw_b, head_w, head_b,
                        block_args, block_cfg, h, w, hs, ws, hb, wb):
    batch = xim.shape[0]
    rows_per_chunk = 4                       # 4 upsampled rows per head chunk
    chunk = rows_per_chunk * w
    n_chunks = h // rows_per_chunk

    kernel, n_fixed, n_blk = _make_kernel(h, w, hs, ws, hb, wb,
                                          tuple(block_cfg), n_chunks, chunk)
    assert n_blk == len(block_args)

    fixed = [stem_w, stem_s, stem_b, pool_negmask, pool_sel, conv_mask,
             g_mat, wmap, dw_b, head_w, head_b]

    in_specs = [
        pl.BlockSpec((1,) + xim.shape[1:], lambda i: (i, 0, 0)),
        pl.BlockSpec((1, h * w, CP), lambda i: (i, 0, 0)),
    ] + [_const_spec(a) for a in fixed] + [_const_spec(a) for a in block_args]

    out_spec = pl.BlockSpec((1, h * w, CP), lambda i: (i, 0, 0))

    return pl.pallas_call(
        kernel,
        out_shape=jax.ShapeDtypeStruct((batch, h * w, CP), jnp.float32),
        grid_spec=pltpu.PrefetchScalarGridSpec(
            num_scalar_prefetch=0,
            grid=(batch,),
            in_specs=in_specs,
            out_specs=out_spec),
        compiler_params=pltpu.CompilerParams(
            dimension_semantics=("parallel",),   # megacore / v7x: one batch elem / core
            vmem_limit_bytes=32 * 1024 * 1024),
    )(xim, last, *fixed, *block_args)


# ----------------------------------------------------------------------------
# Full ResiduleConvV2 forward (wrapper does one-time layout / weight packing)
# ----------------------------------------------------------------------------

def residule_conv_v2_forward(minimaps, params, *, history_len, in_idx, out_idx):
    b, t, l, h, w = minimaps.shape
    assert h % 2 == 0 and w % 2 == 0
    future_len = 9 - history_len
    lin, lout = len(in_idx), len(out_idx)
    in_ch = history_len * lin
    c0 = params['stem_scale'].shape[-1]
    cout = params['dw_w'].shape[-1]
    assert c0 <= CP and cout <= CP and future_len * lout <= CP

    f32 = jnp.float32
    mmd = MATMUL_DTYPE

    hs, ws = (h - 1) // 2 + 1, (w - 1) // 2 + 1       # stem conv output (stride 2)
    hb, wb = (hs + 1) // 2, (ws + 1) // 2             # after MaxPool2d(3, 2, 1)
    assert h == 4 * hb and w == 4 * wb                # x4 upsample restores input size

    # ---- input: NCHW gather -> NHWC, pad=3, space-to-depth(2), then the full
    #      stride-1 4x4 stem im2col built ONCE here (channel-packed, bf16) ----
    x = minimaps[:, :history_len][:, :, jnp.asarray(in_idx)]
    x = x.reshape(b, in_ch, h, w).transpose(0, 2, 3, 1)            # NHWC
    xp = jnp.pad(x, ((0, 0), (3, 3), (3, 3), (0, 0)))
    hp, wp = h + 6, w + 6
    x2 = xp.reshape(b, hp // 2, 2, wp // 2, 2, in_ch)
    x2 = x2.transpose(0, 1, 3, 2, 4, 5).reshape(b, hp // 2, wp // 2, 4 * in_ch)
    cols = [x2[:, a:a + hs, bb:bb + ws, :] for a in range(4) for bb in range(4)]
    k_stem_real = 16 * 4 * in_ch
    k_stem = _ceil_to(k_stem_real, CP)
    xim = jnp.concatenate(cols, axis=-1).reshape(b, hs * ws, k_stem_real)
    xim = _pad_last(xim, k_stem).astype(mmd)

    # ---- stem weight: (7,7,Cin,C0) -> stride-1 4x4 taps, flattened to one
    #      channel-packed (K_stem, CP) matrix ----
    w7 = params['stem_w'].reshape(7, 7, in_ch, c0)
    w7 = jnp.pad(w7, ((0, 1), (0, 1), (0, 0), (0, 0)))             # 8x8 taps (extras 0)
    w4 = w7.reshape(4, 2, 4, 2, in_ch, c0).transpose(0, 2, 1, 3, 4, 5)
    w4 = w4.reshape(k_stem_real, c0)
    stem_w = jnp.pad(w4, ((0, k_stem - k_stem_real), (0, CP - c0))).astype(mmd)
    stem_s = _pad_last(params['stem_scale'], CP)
    stem_b = _pad_last(params['stem_shift'], CP)

    # ---- maxpool: additive -BIG masks for invalid 3x3 neighbours, and the
    #      stride-2 subsample selection matrix (exact 0/1 in bf16) ----
    ii = jnp.arange(hs * ws) // ws
    jj = jnp.arange(hs * ws) % ws
    neg = []
    for di in range(3):
        for dj in range(3):
            valid = ((ii + di - 1 >= 0) & (ii + di - 1 < hs)
                     & (jj + dj - 1 >= 0) & (jj + dj - 1 < ws))
            neg.append(jnp.where(valid, 0.0, -3e38))
    pool_negmask = jnp.stack(neg).reshape(9, hs * ws, 1).astype(f32)

    rows = jnp.arange(hb * wb)
    src = (rows // wb) * 2 * ws + (rows % wb) * 2
    pool_sel = (src[:, None] == jnp.arange(hs * ws)[None, :]).astype(mmd)

    # ---- 3x3 conv tap validity masks (shared by every BasicBlock conv) ----
    bi = jnp.arange(hb * wb) // wb
    bj = jnp.arange(hb * wb) % wb
    cm = []
    for kh in range(3):
        for kw in range(3):
            valid = ((bi + kh - 1 >= 0) & (bi + kh - 1 < hb)
                     & (bj + kw - 1 >= 0) & (bj + kw - 1 < wb))
            cm.append(valid.astype(f32))
    conv_mask = jnp.stack(cm).reshape(9, hb * wb, 1)

    # ---- fused (x4 nearest upsample + depthwise 5x5): every output pixel reads
    #      at most 2x2 source cells -> 4 gather matrices + 4 weight maps ----
    ar2 = jnp.arange(2)
    iu = jnp.arange(h)
    ju = jnp.arange(w)
    base_r = (iu - 2) // 4
    base_c = (ju - 2) // 4
    dk = jnp.arange(5)
    tap_r = iu[:, None] - 2 + dk[None, :]                          # (h, 5)
    in_r = (tap_r >= 0) & (tap_r < h)
    a_idx = tap_r // 4 - base_r[:, None]
    tap_c = ju[:, None] - 2 + dk[None, :]                          # (w, 5)
    in_c = (tap_c >= 0) & (tap_c < w)
    b_idx = tap_c // 4 - base_c[:, None]
    sel_r = ((a_idx[None] == ar2[:, None, None]) & in_r[None]).astype(f32)   # (2,h,5)
    sel_c = ((b_idx[None] == ar2[:, None, None]) & in_c[None]).astype(f32)   # (2,w,5)
    w5 = params['dw_w']                                                      # (5,5,cout)
    wmap = jnp.einsum('aip,bjq,pqc->abijc', sel_r, sel_c, w5)
    wmap = _pad_last(wmap.reshape(4, h * w, cout), CP).astype(f32)

    gr = base_r[:, None] + ar2[None, :]                            # (h, 2)
    gc = base_c[:, None] + ar2[None, :]                            # (w, 2)
    row_oh = (gr[:, :, None] == jnp.arange(hb)[None, None, :]).astype(f32)   # (h,2,hb)
    col_oh = (gc[:, :, None] == jnp.arange(wb)[None, None, :]).astype(f32)   # (w,2,wb)
    g_mat = jnp.einsum('iar,jbc->abijrc', row_oh, col_oh)
    g_mat = g_mat.reshape(4, h * w, hb * wb).astype(mmd)

    dw_b = _pad_last(params['dw_b'].reshape(1, cout), CP)
    head_w = jnp.pad(params['head_w'],
                     ((0, CP - cout), (0, CP - future_len * lout))).astype(mmd)
    head_b = _pad_last(params['head_b'].reshape(1, -1), CP)

    last = minimaps[:, history_len - 1][:, jnp.asarray(out_idx)]   # (B, Lout, H, W)
    last = last.transpose(0, 2, 3, 1).reshape(b, h * w, lout)
    last = _pad_last(jnp.tile(last, (1, 1, future_len)), CP)       # column order f*lout+l

    # ---- block params: BN folded; each 3x3 conv weight pre-packed to a single
    #      channel-packed (ceil128(9*cin), CP) bf16 matrix ----
    block_args, block_cfg = [], []
    for p in params['blocks']:
        cin_b = p['w1'].shape[0] // 9
        co_b = p['w1'].shape[1]
        assert cin_b <= CP and co_b <= CP
        k1 = _ceil_to(9 * cin_b, CP)
        k2 = _ceil_to(9 * co_b, CP)
        w1 = jnp.pad(p['w1'], ((0, k1 - 9 * cin_b), (0, CP - co_b))).astype(mmd)
        w2 = jnp.pad(p['w2'], ((0, k2 - 9 * co_b), (0, CP - co_b))).astype(mmd)
        args = [w1, _pad_last(p['s1'], CP), _pad_last(p['b1'], CP),
                w2, _pad_last(p['s2'], CP), _pad_last(p['b2'], CP)]
        has_ds = 'wd' in p
        if has_ds:
            wd = jnp.pad(p['wd'], ((0, CP - cin_b), (0, CP - co_b))).astype(mmd)
            args += [wd, _pad_last(p['sd'], CP), _pad_last(p['bd'], CP)]
        block_args.extend(args)
        block_cfg.append((cin_b, co_b, has_ds))

    out = _fused_forward_call(xim, last, stem_w, stem_s, stem_b, pool_negmask,
                              pool_sel, conv_mask, g_mat, wmap, dw_b, head_w,
                              head_b, block_args, block_cfg, h, w, hs, ws, hb, wb)

    pred = out[:, :, :future_len * lout]
    pred = pred.reshape(b, h, w, future_len, lout).transpose(0, 3, 4, 1, 2)
    return pred                                                    # (B, future, Lout, H, W)


# ----------------------------------------------------------------------------
# Deterministic synthetic parameters (shapes from the module __init__)
# ----------------------------------------------------------------------------

def make_params(key, history_len, lin, lout, hidden_chs, num_blocks):
    future_len = 9 - history_len
    in_ch = history_len * lin
    keys = iter(jax.random.split(key, 128))

    def conv_w(cin, cout, k):
        fan_in = k * k * cin
        return jax.random.normal(next(keys), (k * k * cin, cout), jnp.float32) / jnp.sqrt(fan_in)

    def bn(c):
        gamma = jax.random.uniform(next(keys), (c,), jnp.float32, 0.5, 1.5)
        beta = jax.random.normal(next(keys), (c,), jnp.float32) * 0.1
        mean = jax.random.normal(next(keys), (c,), jnp.float32) * 0.1
        var = jax.random.uniform(next(keys), (c,), jnp.float32, 0.5, 1.5)
        scale = gamma / jnp.sqrt(var + 1e-5)
        shift = beta - mean * scale
        return scale.reshape(1, c), shift.reshape(1, c)

    params = {'stem_w': conv_w(in_ch, hidden_chs[0], 7)}
    params['stem_scale'], params['stem_shift'] = bn(hidden_chs[0])

    blocks = []
    for cin, cout, nb in zip(hidden_chs, hidden_chs[1:], num_blocks):
        for bidx in range(nb):
            ci = cin if bidx == 0 else cout
            p = {'w1': conv_w(ci, cout, 3)}
            p['s1'], p['b1'] = bn(cout)
            p['w2'] = conv_w(cout, cout, 3)
            p['s2'], p['b2'] = bn(cout)
            if bidx == 0:  # first block of each stage has a 1x1-conv + BN downsample
                p['wd'] = conv_w(ci, cout, 1)
                p['sd'], p['bd'] = bn(cout)
            blocks.append(p)
    params['blocks'] = blocks

    out_ch = hidden_chs[-1]
    params['dw_w'] = jax.random.normal(next(keys), (5, 5, out_ch), jnp.float32) / 5.0
    params['dw_b'] = jax.random.normal(next(keys), (out_ch,), jnp.float32) * 0.1
    params['head_w'] = conv_w(out_ch, future_len * lout, 1)
    params['head_b'] = jax.random.normal(next(keys), (future_len * lout,), jnp.float32) * 0.1
    return params


# ----------------------------------------------------------------------------
# Pure-JAX reference (lax.conv / reduce_window) for correctness checking
# ----------------------------------------------------------------------------

def ref_forward(minimaps, params, *, history_len, in_idx, out_idx):
    b, t, l, h, w = minimaps.shape
    future_len = 9 - history_len
    lin, lout = len(in_idx), len(out_idx)
    dn = ('NHWC', 'HWIO', 'NHWC')
    prec = jax.lax.Precision.HIGHEST

    def conv(x, w_mat, k, stride, pad):
        wt = w_mat.reshape(k, k, x.shape[-1], -1)
        return lax.conv_general_dilated(x, wt, (stride, stride), [(pad, pad), (pad, pad)],
                                        dimension_numbers=dn, precision=prec)

    x = minimaps[:, :history_len][:, :, jnp.asarray(in_idx)]
    x = x.reshape(b, history_len * lin, h, w).transpose(0, 2, 3, 1)
    x = jax.nn.relu(conv(x, params['stem_w'], 7, 2, 3) * params['stem_scale'] + params['stem_shift'])
    x = lax.reduce_window(x, -jnp.inf, lax.max, (1, 3, 3, 1), (1, 2, 2, 1),
                          ((0, 0), (1, 1), (1, 1), (0, 0)))
    for p in params['blocks']:
        out = jax.nn.relu(conv(x, p['w1'], 3, 1, 1) * p['s1'] + p['b1'])
        out = conv(out, p['w2'], 3, 1, 1) * p['s2'] + p['b2']
        identity = conv(x, p['wd'], 1, 1, 0) * p['sd'] + p['bd'] if 'wd' in p else x
        x = jax.nn.relu(out + identity)
    x = jnp.repeat(jnp.repeat(x, 4, axis=1), 4, axis=2)
    c = x.shape[-1]
    x = lax.conv_general_dilated(x, params['dw_w'][:, :, None, :], (1, 1), [(2, 2), (2, 2)],
                                 dimension_numbers=dn, feature_group_count=c, precision=prec)
    x = x + params['dw_b']
    y = jnp.tanh(conv(x, params['head_w'], 1, 1, 0) + params['head_b'])
    y = y.transpose(0, 3, 1, 2).reshape(b, future_len, lout, h, w)
    last = minimaps[:, history_len - 1][:, jnp.asarray(out_idx)][:, None]
    return jnp.clip(last + y, 0.0, 1.0)


# ----------------------------------------------------------------------------

if __name__ == "__main__":
    HISTORY_LEN = 4                   # future_len = 9 - 4 = 5
    HIDDEN_CHS = [8, 16]
    NUM_BLOCKS = [2]
    INPUT_LAYER_NAMES = ["self_units", "enemy_units", "terrain"]
    IN_LAYER_NAMES = ["self_units", "enemy_units"]     # in_layers
    TARGET_LAYER_NAMES = ["enemy_units", "terrain"]    # target
    in_idx = _get_layer_indices(INPUT_LAYER_NAMES, IN_LAYER_NAMES)
    out_idx = _get_layer_indices(INPUT_LAYER_NAMES, TARGET_LAYER_NAMES)

    B, T, L, H, W = 2, HISTORY_LEN, len(INPUT_LAYER_NAMES), 16, 16
    key = jax.random.PRNGKey(0)
    k_in, k_par = jax.random.split(key)
    minimaps = jax.random.uniform(k_in, (B, T, L, H, W), jnp.float32)

    params = make_params(k_par, HISTORY_LEN, len(in_idx), len(out_idx), HIDDEN_CHS, NUM_BLOCKS)

    fwd = jax.jit(functools.partial(residule_conv_v2_forward,
                                    history_len=HISTORY_LEN,
                                    in_idx=tuple(in_idx), out_idx=tuple(out_idx)))
    pred = fwd(minimaps, params)
    jax.block_until_ready(pred)

    expected_shape = (B, 9 - HISTORY_LEN, len(out_idx), H, W)
    assert pred.shape == expected_shape, (pred.shape, expected_shape)

    ref = ref_forward(minimaps, params, history_len=HISTORY_LEN,
                      in_idx=tuple(in_idx), out_idx=tuple(out_idx))
    max_diff = float(jnp.max(jnp.abs(pred - ref)))
    # bf16 MXU operands (f32 accumulation) introduce ~1e-3..1e-2 absolute error through
    # the conv stack; with MATMUL_DTYPE = jnp.float32 the agreement is ~1e-4.
    tol = 4e-2 if MATMUL_DTYPE == jnp.bfloat16 else 1e-4
    assert max_diff < tol, f"mismatch vs pure-JAX reference: {max_diff}"

    print("KERNEL_OK")
</pallas_src>

<mosaic_0001>
module attributes {stable_mosaic.version = 11 : i64} {
  func.func @kernel(%arg0: i32, %arg1: memref<1x64x512xbf16, #tpu.memory_space<vmem>>, %arg2: memref<1x256x128xf32, #tpu.memory_space<vmem>>, %arg3: memref<512x128xbf16, #tpu.memory_space<vmem>>, %arg4: memref<1x128xf32, #tpu.memory_space<vmem>>, %arg5: memref<1x128xf32, #tpu.memory_space<vmem>>, %arg6: memref<9x64x1xf32, #tpu.memory_space<vmem>>, %arg7: memref<16x64xbf16, #tpu.memory_space<vmem>>, %arg8: memref<9x16x1xf32, #tpu.memory_space<vmem>>, %arg9: memref<4x256x16xbf16, #tpu.memory_space<vmem>>, %arg10: memref<4x256x128xf32, #tpu.memory_space<vmem>>, %arg11: memref<1x128xf32, #tpu.memory_space<vmem>>, %arg12: memref<128x128xbf16, #tpu.memory_space<vmem>>, %arg13: memref<1x128xf32, #tpu.memory_space<vmem>>, %arg14: memref<128x128xbf16, #tpu.memory_space<vmem>>, %arg15: memref<1x128xf32, #tpu.memory_space<vmem>>, %arg16: memref<1x128xf32, #tpu.memory_space<vmem>>, %arg17: memref<256x128xbf16, #tpu.memory_space<vmem>>, %arg18: memref<1x128xf32, #tpu.memory_space<vmem>>, %arg19: memref<1x128xf32, #tpu.memory_space<vmem>>, %arg20: memref<128x128xbf16, #tpu.memory_space<vmem>>, %arg21: memref<1x128xf32, #tpu.memory_space<vmem>>, %arg22: memref<1x128xf32, #tpu.memory_space<vmem>>, %arg23: memref<256x128xbf16, #tpu.memory_space<vmem>>, %arg24: memref<1x128xf32, #tpu.memory_space<vmem>>, %arg25: memref<1x128xf32, #tpu.memory_space<vmem>>, %arg26: memref<256x128xbf16, #tpu.memory_space<vmem>>, %arg27: memref<1x128xf32, #tpu.memory_space<vmem>>, %arg28: memref<1x128xf32, #tpu.memory_space<vmem>>, %arg29: memref<1x256x128xf32, #tpu.memory_space<vmem>>) attributes {dimension_semantics = [#tpu.dimension_semantics<parallel>], iteration_bounds = array<i64: 2>, scalar_prefetch = 0 : i64, scratch_operands = 0 : i64, tpu.core_type = #tpu.core_type<tc>, window_params = [{transform_indices = @transform_0, window_bounds = array<i64: 1, 64, 512>}, {transform_indices = @transform_1, window_bounds = array<i64: 1, 256, 128>}, {pipeline_mode = #tpu.pipeline_mode<synchronous>, transform_indices = @transform_2, window_bounds = array<i64: 512, 128>}, {pipeline_mode = #tpu.pipeline_mode<synchronous>, transform_indices = @transform_3, window_bounds = array<i64: 1, 128>}, {pipeline_mode = #tpu.pipeline_mode<synchronous>, transform_indices = @transform_4, window_bounds = array<i64: 1, 128>}, {pipeline_mode = #tpu.pipeline_mode<synchronous>, transform_indices = @transform_5, window_bounds = array<i64: 9, 64, 1>}, {pipeline_mode = #tpu.pipeline_mode<synchronous>, transform_indices = @transform_6, window_bounds = array<i64: 16, 64>}, {pipeline_mode = #tpu.pipeline_mode<synchronous>, transform_indices = @transform_7, window_bounds = array<i64: 9, 16, 1>}, {pipeline_mode = #tpu.pipeline_mode<synchronous>, transform_indices = @transform_8, window_bounds = array<i64: 4, 256, 16>}, {pipeline_mode = #tpu.pipeline_mode<synchronous>, transform_indices = @transform_9, window_bounds = array<i64: 4, 256, 128>}, {pipeline_mode = #tpu.pipeline_mode<synchronous>, transform_indices = @transform_10, window_bounds = array<i64: 1, 128>}, {pipeline_mode = #tpu.pipeline_mode<synchronous>, transform_indices = @transform_11, window_bounds = array<i64: 128, 128>}, {pipeline_mode = #tpu.pipeline_mode<synchronous>, transform_indices = @transform_12, window_bounds = array<i64: 1, 128>}, {pipeline_mode = #tpu.pipeline_mode<synchronous>, transform_indices = @transform_13, window_bounds = array<i64: 128, 128>}, {pipeline_mode = #tpu.pipeline_mode<synchronous>, transform_indices = @transform_14, window_bounds = array<i64: 1, 128>}, {pipeline_mode = #tpu.pipeline_mode<synchronous>, transform_indices = @transform_15, window_bounds = array<i64: 1, 128>}, {pipeline_mode = #tpu.pipeline_mode<synchronous>, transform_indices = @transform_16, window_bounds = array<i64: 256, 128>}, {pipeline_mode = #tpu.pipeline_mode<synchronous>, transform_indices = @transform_17, window_bounds = array<i64: 1, 128>}, {pipeline_mode = #tpu.pipeline_mode<synchronous>, transform_indices = @transform_18, window_bounds = array<i64: 1, 128>}, {pipeline_mode = #tpu.pipeline_mode<synchronous>, transform_indices = @transform_19, window_bounds = array<i64: 128, 128>}, {pipeline_mode = #tpu.pipeline_mode<synchronous>, transform_indices = @transform_20, window_bounds = array<i64: 1, 128>}, {pipeline_mode = #tpu.pipeline_mode<synchronous>, transform_indices = @transform_21, window_bounds = array<i64: 1, 128>}, {pipeline_mode = #tpu.pipeline_mode<synchronous>, transform_indices = @transform_22, window_bounds = array<i64: 256, 128>}, {pipeline_mode = #tpu.pipeline_mode<synchronous>, transform_indices = @transform_23, window_bounds = array<i64: 1, 128>}, {pipeline_mode = #tpu.pipeline_mode<synchronous>, transform_indices = @transform_24, window_bounds = array<i64: 1, 128>}, {pipeline_mode = #tpu.pipeline_mode<synchronous>, transform_indices = @transform_25, window_bounds = array<i64: 256, 128>}, {pipeline_mode = #tpu.pipeline_mode<synchronous>, transform_indices = @transform_26, window_bounds = array<i64: 1, 128>}, {pipeline_mode = #tpu.pipeline_mode<synchronous>, transform_indices = @transform_27, window_bounds = array<i64: 1, 128>}, {transform_indices = @transform_28, window_bounds = array<i64: 1, 256, 128>}]} {
    %c0 = arith.constant 0 : index
    %c0_0 = arith.constant 0 : index
    %c0_1 = arith.constant 0 : index
    %0 = vector.load %arg1[%c0, %c0_0, %c0_1] : memref<1x64x512xbf16, #tpu.memory_space<vmem>>, vector<1x64x512xbf16>
    %1 = vector.shape_cast %0 : vector<1x64x512xbf16> to vector<64x512xbf16>
    %c0_2 = arith.constant 0 : index
    %c0_3 = arith.constant 0 : index
    %2 = vector.load %arg3[%c0_2, %c0_3] : memref<512x128xbf16, #tpu.memory_space<vmem>>, vector<512x128xbf16>
    %cst = arith.constant dense<0.000000e+00> : vector<64x128xf32>
    %3 = tpu.matmul %1, %2, %cst {dimension_numbers = #tpu.dot_dimension_numbers<[1], [0], [0], [1], [0, 0, 1, 1], [], []>} : vector<64x512xbf16>, vector<512x128xbf16>, vector<64x128xf32> -> vector<64x128xf32>
    %c0_4 = arith.constant 0 : index
    %c0_5 = arith.constant 0 : index
    %4 = vector.load %arg4[%c0_4, %c0_5] : memref<1x128xf32, #tpu.memory_space<vmem>>, vector<1x128xf32>
    %5 = vector.broadcast %4 : vector<1x128xf32> to vector<64x128xf32>
    %6 = arith.mulf %3, %5 : vector<64x128xf32>
    %c0_6 = arith.constant 0 : index
    %c0_7 = arith.constant 0 : index
    %7 = vector.load %arg5[%c0_6, %c0_7] : memref<1x128xf32, #tpu.memory_space<vmem>>, vector<1x128xf32>
    %8 = vector.broadcast %7 : vector<1x128xf32> to vector<64x128xf32>
    %9 = arith.addf %6, %8 : vector<64x128xf32>
    %cst_8 = arith.constant 0.000000e+00 : f32
    %10 = vector.broadcast %cst_8 : f32 to vector<64x128xf32>
    %11 = arith.maximumf %9, %10 : vector<64x128xf32>
    %12 = vector.extract_strided_slice %11 {offsets = [55, 0], sizes = [9, 128], strides = [1, 1]} : vector<64x128xf32> to vector<9x128xf32>
    %13 = vector.extract_strided_slice %11 {offsets = [0, 0], sizes = [55, 128], strides = [1, 1]} : vector<64x128xf32> to vector<55x128xf32>
    %14 = tpu.concatenate %12, %13 in 0 : vector<9x128xf32>, vector<55x128xf32> -> vector<64x128xf32>
    %c0_9 = arith.constant 0 : index
    %c0_10 = arith.constant 0 : index
    %c0_11 = arith.constant 0 : index
    %15 = vector.load %arg6[%c0_9, %c0_10, %c0_11] : memref<9x64x1xf32, #tpu.memory_space<vmem>>, vector<1x64x1xf32>
    %16 = vector.shape_cast %15 : vector<1x64x1xf32> to vector<64x1xf32>
    %17 = vector.broadcast %16 : vector<64x1xf32> to vector<64x128xf32>
    %18 = arith.addf %14, %17 : vector<64x128xf32>
    %19 = arith.maximumf %11, %18 : vector<64x128xf32>
    %20 = vector.extract_strided_slice %11 {offsets = [56, 0], sizes = [8, 128], strides = [1, 1]} : vector<64x128xf32> to vector<8x128xf32>
    %21 = vector.extract_strided_slice %11 {offsets = [0, 0], sizes = [56, 128], strides = [1, 1]} : vector<64x128xf32> to vector<56x128xf32>
    %22 = tpu.concatenate %20, %21 in 0 : vector<8x128xf32>, vector<56x128xf32> -> vector<64x128xf32>
    %c1 = arith.constant 1 : index
    %c0_12 = arith.constant 0 : index
    %c0_13 = arith.constant 0 : index
    %23 = vector.load %arg6[%c1, %c0_12, %c0_13] : memref<9x64x1xf32, #tpu.memory_space<vmem>>, vector<1x64x1xf32>
    %24 = vector.shape_cast %23 : vector<1x64x1xf32> to vector<64x1xf32>
    %25 = vector.broadcast %24 : vector<64x1xf32> to vector<64x128xf32>
    %26 = arith.addf %22, %25 : vector<64x128xf32>
    %27 = arith.maximumf %19, %26 : vector<64x128xf32>
    %28 = vector.extract_strided_slice %11 {offsets = [57, 0], sizes = [7, 128], strides = [1, 1]} : vector<64x128xf32> to vector<7x128xf32>
    %29 = vector.extract_strided_slice %11 {offsets = [0, 0], sizes = [57, 128], strides = [1, 1]} : vector<64x128xf32> to vector<57x128xf32>
    %30 = tpu.concatenate %28, %29 in 0 : vector<7x128xf32>, vector<57x128xf32> -> vector<64x128xf32>
    %c2 = arith.constant 2 : index
    %c0_14 = arith.constant 0 : index
    %c0_15 = arith.constant 0 : index
    %31 = vector.load %arg6[%c2, %c0_14, %c0_15] : memref<9x64x1xf32, #tpu.memory_space<vmem>>, vector<1x64x1xf32>
    %32 = vector.shape_cast %31 : vector<1x64x1xf32> to vector<64x1xf32>
    %33 = vector.broadcast %32 : vector<64x1xf32> to vector<64x128xf32>
    %34 = arith.addf %30, %33 : vector<64x128xf32>
    %35 = arith.maximumf %27, %34 : vector<64x128xf32>
    %36 = vector.extract_strided_slice %11 {offsets = [63, 0], sizes = [1, 128], strides = [1, 1]} : vector<64x128xf32> to vector<1x128xf32>
    %37 = vector.extract_strided_slice %11 {offsets = [0, 0], sizes = [63, 128], strides = [1, 1]} : vector<64x128xf32> to vector<63x128xf32>
    %38 = tpu.concatenate %36, %37 in 0 : vector<1x128xf32>, vector<63x128xf32> -> vector<64x128xf32>
    %c3 = arith.constant 3 : index
    %c0_16 = arith.constant 0 : index
    %c0_17 = arith.constant 0 : index
    %39 = vector.load %arg6[%c3, %c0_16, %c0_17] : memref<9x64x1xf32, #tpu.memory_space<vmem>>, vector<1x64x1xf32>
    %40 = vector.shape_cast %39 : vector<1x64x1xf32> to vector<64x1xf32>
    %41 = vector.broadcast %40 : vector<64x1xf32> to vector<64x128xf32>
    %42 = arith.addf %38, %41 : vector<64x128xf32>
    %43 = arith.maximumf %35, %42 : vector<64x128xf32>
    %44 = vector.extract_strided_slice %11 {offsets = [1, 0], sizes = [63, 128], strides = [1, 1]} : vector<64x128xf32> to vector<63x128xf32>
    %45 = vector.extract_strided_slice %11 {offsets = [0, 0], sizes = [1, 128], strides = [1, 1]} : vector<64x128xf32> to vector<1x128xf32>
    %46 = tpu.concatenate %44, %45 in 0 : vector<63x128xf32>, vector<1x128xf32> -> vector<64x128xf32>
    %c5 = arith.constant 5 : index
    %c0_18 = arith.constant 0 : index
    %c0_19 = arith.constant 0 : index
    %47 = vector.load %arg6[%c5, %c0_18, %c0_19] : memref<9x64x1xf32, #tpu.memory_space<vmem>>, vector<1x64x1xf32>
    %48 = vector.shape_cast %47 : vector<1x64x1xf32> to vector<64x1xf32>
    %49 = vector.broadcast %48 : vector<64x1xf32> to vector<64x128xf32>
    %50 = arith.addf %46, %49 : vector<64x128xf32>
    %51 = arith.maximumf %43, %50 : vector<64x128xf32>
    %52 = vector.extract_strided_slice %11 {offsets = [7, 0], sizes = [57, 128], strides = [1, 1]} : vector<64x128xf32> to vector<57x128xf32>
    %53 = vector.extract_strided_slice %11 {offsets = [0, 0], sizes = [7, 128], strides = [1, 1]} : vector<64x128xf32> to vector<7x128xf32>
    %54 = tpu.concatenate %52, %53 in 0 : vector<57x128xf32>, vector<7x128xf32> -> vector<64x128xf32>
    %c6 = arith.constant 6 : index
    %c0_20 = arith.constant 0 : index
    %c0_21 = arith.constant 0 : index
    %55 = vector.load %arg6[%c6, %c0_20, %c0_21] : memref<9x64x1xf32, #tpu.memory_space<vmem>>, vector<1x64x1xf32>
    %56 = vector.shape_cast %55 : vector<1x64x1xf32> to vector<64x1xf32>
    %57 = vector.broadcast %56 : vector<64x1xf32> to vector<64x128xf32>
    %58 = arith.addf %54, %57 : vector<64x128xf32>
    %59 = arith.maximumf %51, %58 : vector<64x128xf32>
    %60 = vector.extract_strided_slice %11 {offsets = [8, 0], sizes = [56, 128], strides = [1, 1]} : vector<64x128xf32> to vector<56x128xf32>
    %61 = vector.extract_strided_slice %11 {offsets = [0, 0], sizes = [8, 128], strides = [1, 1]} : vector<64x128xf32> to vector<8x128xf32>
    %62 = tpu.concatenate %60, %61 in 0 : vector<56x128xf32>, vector<8x128xf32> -> vector<64x128xf32>
    %c7 = arith.constant 7 : index
    %c0_22 = arith.constant 0 : index
    %c0_23 = arith.constant 0 : index
    %63 = vector.load %arg6[%c7, %c0_22, %c0_23] : memref<9x64x1xf32, #tpu.memory_space<vmem>>, vector<1x64x1xf32>
    %64 = vector.shape_cast %63 : vector<1x64x1xf32> to vector<64x1xf32>
    %65 = vector.broadcast %64 : vector<64x1xf32> to vector<64x128xf32>
    %66 = arith.addf %62, %65 : vector<64x128xf32>
    %67 = arith.maximumf %59, %66 : vector<64x128xf32>
    %68 = vector.extract_strided_slice %11 {offsets = [9, 0], sizes = [55, 128], strides = [1, 1]} : vector<64x128xf32> to vector<55x128xf32>
    %69 = vector.extract_strided_slice %11 {offsets = [0, 0], sizes = [9, 128], strides = [1, 1]} : vector<64x128xf32> to vector<9x128xf32>
    %70 = tpu.concatenate %68, %69 in 0 : vector<55x128xf32>, vector<9x128xf32> -> vector<64x128xf32>
    %c8 = arith.constant 8 : index
    %c0_24 = arith.constant 0 : index
    %c0_25 = arith.constant 0 : index
    %71 = vector.load %arg6[%c8, %c0_24, %c0_25] : memref<9x64x1xf32, #tpu.memory_space<vmem>>, vector<1x64x1xf32>
    %72 = vector.shape_cast %71 : vector<1x64x1xf32> to vector<64x1xf32>
    %73 = vector.broadcast %72 : vector<64x1xf32> to vector<64x128xf32>
    %74 = arith.addf %70, %73 : vector<64x128xf32>
    %75 = arith.maximumf %67, %74 : vector<64x128xf32>
    %c0_26 = arith.constant 0 : index
    %c0_27 = arith.constant 0 : index
    %76 = vector.load %arg7[%c0_26, %c0_27] : memref<16x64xbf16, #tpu.memory_space<vmem>>, vector<16x64xbf16>
    %77 = arith.truncf %75 : vector<64x128xf32> to vector<64x128xbf16>
    %cst_28 = arith.constant dense<0.000000e+00> : vector<16x128xf32>
    %78 = tpu.matmul %76, %77, %cst_28 {dimension_numbers = #tpu.dot_dimension_numbers<[1], [0], [0], [1], [0, 0, 1, 1], [], []>} : vector<16x64xbf16>, vector<64x128xbf16>, vector<16x128xf32> -> vector<16x128xf32>
    %c0_29 = arith.constant 0 : index
    %c0_30 = arith.constant 0 : index
    %c0_31 = arith.constant 0 : index
    %79 = vector.load %arg8[%c0_29, %c0_30, %c0_31] : memref<9x16x1xf32, #tpu.memory_space<vmem>>, vector<1x16x1xf32>
    %80 = vector.shape_cast %79 : vector<1x16x1xf32> to vector<16x1xf32>
    %c1_32 = arith.constant 1 : index
    %c0_33 = arith.constant 0 : index
    %c0_34 = arith.constant 0 : index
    %81 = vector.load %arg8[%c1_32, %c0_33, %c0_34] : memref<9x16x1xf32, #tpu.memory_space<vmem>>, vector<1x16x1xf32>
    %82 = vector.shape_cast %81 : vector<1x16x1xf32> to vector<16x1xf32>
    %c2_35 = arith.constant 2 : index
    %c0_36 = arith.constant 0 : index
    %c0_37 = arith.constant 0 : index
    %83 = vector.load %arg8[%c2_35, %c0_36, %c0_37] : memref<9x16x1xf32, #tpu.memory_space<vmem>>, vector<1x16x1xf32>
    %84 = vector.shape_cast %83 : vector<1x16x1xf32> to vector<16x1xf32>
    %c3_38 = arith.constant 3 : index
    %c0_39 = arith.constant 0 : index
    %c0_40 = arith.constant 0 : index
    %85 = vector.load %arg8[%c3_38, %c0_39, %c0_40] : memref<9x16x1xf32, #tpu.memory_space<vmem>>, vector<1x16x1xf32>
    %86 = vector.shape_cast %85 : vector<1x16x1xf32> to vector<16x1xf32>
    %c4 = arith.constant 4 : index
    %c0_41 = arith.constant 0 : index
    %c0_42 = arith.constant 0 : index
    %87 = vector.load %arg8[%c4, %c0_41, %c0_42] : memref<9x16x1xf32, #tpu.memory_space<vmem>>, vector<1x16x1xf32>
    %88 = vector.shape_cast %87 : vector<1x16x1xf32> to vector<16x1xf32>
    %c5_43 = arith.constant 5 : index
    %c0_44 = arith.constant 0 : index
    %c0_45 = arith.constant 0 : index
    %89 = vector.load %arg8[%c5_43, %c0_44, %c0_45] : memref<9x16x1xf32, #tpu.memory_space<vmem>>, vector<1x16x1xf32>
    %90 = vector.shape_cast %89 : vector<1x16x1xf32> to vector<16x1xf32>
    %c6_46 = arith.constant 6 : index
    %c0_47 = arith.constant 0 : index
    %c0_48 = arith.constant 0 : index
    %91 = vector.load %arg8[%c6_46, %c0_47, %c0_48] : memref<9x16x1xf32, #tpu.memory_space<vmem>>, vector<1x16x1xf32>
    %92 = vector.shape_cast %91 : vector<1x16x1xf32> to vector<16x1xf32>
    %c7_49 = arith.constant 7 : index
    %c0_50 = arith.constant 0 : index
    %c0_51 = arith.constant 0 : index
    %93 = vector.load %arg8[%c7_49, %c0_50, %c0_51] : memref<9x16x1xf32, #tpu.memory_space<vmem>>, vector<1x16x1xf32>
    %94 = vector.shape_cast %93 : vector<1x16x1xf32> to vector<16x1xf32>
    %c8_52 = arith.constant 8 : index
    %c0_53 = arith.constant 0 : index
    %c0_54 = arith.constant 0 : index
    %95 = vector.load %arg8[%c8_52, %c0_53, %c0_54] : memref<9x16x1xf32, #tpu.memory_space<vmem>>, vector<1x16x1xf32>
    %96 = vector.shape_cast %95 : vector<1x16x1xf32> to vector<16x1xf32>
    %97 = vector.extract_strided_slice %78 {offsets = [0, 0], sizes = [16, 8], strides = [1, 1]} : vector<16x128xf32> to vector<16x8xf32>
    %98 = vector.extract_strided_slice %97 {offsets = [11, 0], sizes = [5, 8], strides = [1, 1]} : vector<16x8xf32> to vector<5x8xf32>
    %99 = vector.extract_strided_slice %97 {offsets = [0, 0], sizes = [11, 8], strides = [1, 1]} : vector<16x8xf32> to vector<11x8xf32>
    %100 = tpu.concatenate %98, %99 in 0 : vector<5x8xf32>, vector<11x8xf32> -> vector<16x8xf32>
    %101 = vector.broadcast %80 : vector<16x1xf32> to vector<16x8xf32>
    %102 = arith.mulf %100, %101 : vector<16x8xf32>
    %103 = vector.extract_strided_slice %97 {offsets = [12, 0], sizes = [4, 8], strides = [1, 1]} : vector<16x8xf32> to vector<4x8xf32>
    %104 = vector.extract_strided_slice %97 {offsets = [0, 0], sizes = [12, 8], strides = [1, 1]} : vector<16x8xf32> to vector<12x8xf32>
    %105 = tpu.concatenate %103, %104 in 0 : vector<4x8xf32>, vector<12x8xf32> -> vector<16x8xf32>
    %106 = vector.broadcast %82 : vector<16x1xf32> to vector<16x8xf32>
    %107 = arith.mulf %105, %106 : vector<16x8xf32>
    %108 = vector.extract_strided_slice %97 {offsets = [13, 0], sizes = [3, 8], strides = [1, 1]} : vector<16x8xf32> to vector<3x8xf32>
    %109 = vector.extract_strided_slice %97 {offsets = [0, 0], sizes = [13, 8], strides = [1, 1]} : vector<16x8xf32> to vector<13x8xf32>
    %110 = tpu.concatenate %108, %109 in 0 : vector<3x8xf32>, vector<13x8xf32> -> vector<16x8xf32>
    %111 = vector.broadcast %84 : vector<16x1xf32> to vector<16x8xf32>
    %112 = arith.mulf %110, %111 : vector<16x8xf32>
    %113 = vector.extract_strided_slice %97 {offsets = [15, 0], sizes = [1, 8], strides = [1, 1]} : vector<16x8xf32> to vector<1x8xf32>
    %114 = vector.extract_strided_slice %97 {offsets = [0, 0], sizes = [15, 8], strides = [1, 1]} : vector<16x8xf32> to vector<15x8xf32>
    %115 = tpu.concatenate %113, %114 in 0 : vector<1x8xf32>, vector<15x8xf32> -> vector<16x8xf32>
    %116 = vector.broadcast %86 : vector<16x1xf32> to vector<16x8xf32>
    %117 = arith.mulf %115, %116 : vector<16x8xf32>
    %118 = vector.broadcast %88 : vector<16x1xf32> to vector<16x8xf32>
    %119 = arith.mulf %97, %118 : vector<16x8xf32>
    %120 = vector.extract_strided_slice %97 {offsets = [1, 0], sizes = [15, 8], strides = [1, 1]} : vector<16x8xf32> to vector<15x8xf32>
    %121 = vector.extract_strided_slice %97 {offsets = [0, 0], sizes = [1, 8], strides = [1, 1]} : vector<16x8xf32> to vector<1x8xf32>
    %122 = tpu.concatenate %120, %121 in 0 : vector<15x8xf32>, vector<1x8xf32> -> vector<16x8xf32>
    %123 = vector.broadcast %90 : vector<16x1xf32> to vector<16x8xf32>
    %124 = arith.mulf %122, %123 : vector<16x8xf32>
    %125 = vector.extract_strided_slice %97 {offsets = [3, 0], sizes = [13, 8], strides = [1, 1]} : vector<16x8xf32> to vector<13x8xf32>
    %126 = vector.extract_strided_slice %97 {offsets = [0, 0], sizes = [3, 8], strides = [1, 1]} : vector<16x8xf32> to vector<3x8xf32>
    %127 = tpu.concatenate %125, %126 in 0 : vector<13x8xf32>, vector<3x8xf32> -> vector<16x8xf32>
    %128 = vector.broadcast %92 : vector<16x1xf32> to vector<16x8xf32>
    %129 = arith.mulf %127, %128 : vector<16x8xf32>
    %130 = vector.extract_strided_slice %97 {offsets = [4, 0], sizes = [12, 8], strides = [1, 1]} : vector<16x8xf32> to vector<12x8xf32>
    %131 = vector.extract_strided_slice %97 {offsets = [0, 0], sizes = [4, 8], strides = [1, 1]} : vector<16x8xf32> to vector<4x8xf32>
    %132 = tpu.concatenate %130, %131 in 0 : vector<12x8xf32>, vector<4x8xf32> -> vector<16x8xf32>
    %133 = vector.broadcast %94 : vector<16x1xf32> to vector<16x8xf32>
    %134 = arith.mulf %132, %133 : vector<16x8xf32>
    %135 = vector.extract_strided_slice %97 {offsets = [5, 0], sizes = [11, 8], strides = [1, 1]} : vector<16x8xf32> to vector<11x8xf32>
    %136 = vector.extract_strided_slice %97 {offsets = [0, 0], sizes = [5, 8], strides = [1, 1]} : vector<16x8xf32> to vector<5x8xf32>
    %137 = tpu.concatenate %135, %136 in 0 : vector<11x8xf32>, vector<5x8xf32> -> vector<16x8xf32>
    %138 = vector.broadcast %96 : vector<16x1xf32> to vector<16x8xf32>
    %139 = arith.mulf %137, %138 : vector<16x8xf32>
    %cst_55 = arith.constant 0.000000e+00 : f32
    %140 = vector.broadcast %cst_55 : f32 to vector<16x56xf32>
    %141 = tpu.concatenate %102, %107, %112, %117, %119, %124, %129, %134, %139, %140 in 1 : vector<16x8xf32>, vector<16x8xf32>, vector<16x8xf32>, vector<16x8xf32>, vector<16x8xf32>, vector<16x8xf32>, vector<16x8xf32>, vector<16x8xf32>, vector<16x8xf32>, vector<16x56xf32> -> vector<16x128xf32>
    %142 = arith.truncf %141 : vector<16x128xf32> to vector<16x128xbf16>
    %c0_56 = arith.constant 0 : index
    %c0_57 = arith.constant 0 : index
    %143 = vector.load %arg14[%c0_56, %c0_57] : memref<128x128xbf16, #tpu.memory_space<vmem>>, vector<128x128xbf16>
    %cst_58 = arith.constant dense<0.000000e+00> : vector<16x128xf32>
    %144 = tpu.matmul %142, %143, %cst_58 {dimension_numbers = #tpu.dot_dimension_numbers<[1], [0], [0], [1], [0, 0, 1, 1], [], []>} : vector<16x128xbf16>, vector<128x128xbf16>, vector<16x128xf32> -> vector<16x128xf32>
    %c0_59 = arith.constant 0 : index
    %c0_60 = arith.constant 0 : index
    %145 = vector.load %arg15[%c0_59, %c0_60] : memref<1x128xf32, #tpu.memory_space<vmem>>, vector<1x128xf32>
    %146 = vector.broadcast %145 : vector<1x128xf32> to vector<16x128xf32>
    %147 = arith.mulf %144, %146 : vector<16x128xf32>
    %c0_61 = arith.constant 0 : index
    %c0_62 = arith.constant 0 : index
    %148 = vector.load %arg16[%c0_61, %c0_62] : memref<1x128xf32, #tpu.memory_space<vmem>>, vector<1x128xf32>
    %149 = vector.broadcast %148 : vector<1x128xf32> to vector<16x128xf32>
    %150 = arith.addf %147, %149 : vector<16x128xf32>
    %cst_63 = arith.constant 0.000000e+00 : f32
    %151 = vector.broadcast %cst_63 : f32 to vector<16x128xf32>
    %152 = arith.maximumf %150, %151 : vector<16x128xf32>
    %153 = vector.extract_strided_slice %152 {offsets = [0, 0], sizes = [16, 16], strides = [1, 1]} : vector<16x128xf32> to vector<16x16xf32>
    %154 = vector.extract_strided_slice %153 {offsets = [11, 0], sizes = [5, 16], strides = [1, 1]} : vector<16x16xf32> to vector<5x16xf32>
    %155 = vector.extract_strided_slice %153 {offsets = [0, 0], sizes = [11, 16], strides = [1, 1]} : vector<16x16xf32> to vector<11x16xf32>
    %156 = tpu.concatenate %154, %155 in 0 : vector<5x16xf32>, vector<11x16xf32> -> vector<16x16xf32>
    %157 = vector.broadcast %80 : vector<16x1xf32> to vector<16x16xf32>
    %158 = arith.mulf %156, %157 : vector<16x16xf32>
    %159 = vector.extract_strided_slice %153 {offsets = [12, 0], sizes = [4, 16], strides = [1, 1]} : vector<16x16xf32> to vector<4x16xf32>
    %160 = vector.extract_strided_slice %153 {offsets = [0, 0], sizes = [12, 16], strides = [1, 1]} : vector<16x16xf32> to vector<12x16xf32>
    %161 = tpu.concatenate %159, %160 in 0 : vector<4x16xf32>, vector<12x16xf32> -> vector<16x16xf32>
    %162 = vector.broadcast %82 : vector<16x1xf32> to vector<16x16xf32>
    %163 = arith.mulf %161, %162 : vector<16x16xf32>
    %164 = vector.extract_strided_slice %153 {offsets = [13, 0], sizes = [3, 16], strides = [1, 1]} : vector<16x16xf32> to vector<3x16xf32>
    %165 = vector.extract_strided_slice %153 {offsets = [0, 0], sizes = [13, 16], strides = [1, 1]} : vector<16x16xf32> to vector<13x16xf32>
    %166 = tpu.concatenate %164, %165 in 0 : vector<3x16xf32>, vector<13x16xf32> -> vector<16x16xf32>
    %167 = vector.broadcast %84 : vector<16x1xf32> to vector<16x16xf32>
    %168 = arith.mulf %166, %167 : vector<16x16xf32>
    %169 = vector.extract_strided_slice %153 {offsets = [15, 0], sizes = [1, 16], strides = [1, 1]} : vector<16x16xf32> to vector<1x16xf32>
    %170 = vector.extract_strided_slice %153 {offsets = [0, 0], sizes = [15, 16], strides = [1, 1]} : vector<16x16xf32> to vector<15x16xf32>
    %171 = tpu.concatenate %169, %170 in 0 : vector<1x16xf32>, vector<15x16xf32> -> vector<16x16xf32>
    %172 = vector.broadcast %86 : vector<16x1xf32> to vector<16x16xf32>
    %173 = arith.mulf %171, %172 : vector<16x16xf32>
    %174 = vector.broadcast %88 : vector<16x1xf32> to vector<16x16xf32>
    %175 = arith.mulf %153, %174 : vector<16x16xf32>
    %176 = vector.extract_strided_slice %153 {offsets = [1, 0], sizes = [15, 16], strides = [1, 1]} : vector<16x16xf32> to vector<15x16xf32>
    %177 = vector.extract_strided_slice %153 {offsets = [0, 0], sizes = [1, 16], strides = [1, 1]} : vector<16x16xf32> to vector<1x16xf32>
    %178 = tpu.concatenate %176, %177 in 0 : vector<15x16xf32>, vector<1x16xf32> -> vector<16x16xf32>
    %179 = vector.broadcast %90 : vector<16x1xf32> to vector<16x16xf32>
    %180 = arith.mulf %178, %179 : vector<16x16xf32>
    %181 = vector.extract_strided_slice %153 {offsets = [3, 0], sizes = [13, 16], strides = [1, 1]} : vector<16x16xf32> to vector<13x16xf32>
    %182 = vector.extract_strided_slice %153 {offsets = [0, 0], sizes = [3, 16], strides = [1, 1]} : vector<16x16xf32> to vector<3x16xf32>
    %183 = tpu.concatenate %181, %182 in 0 : vector<13x16xf32>, vector<3x16xf32> -> vector<16x16xf32>
    %184 = vector.broadcast %92 : vector<16x1xf32> to vector<16x16xf32>
    %185 = arith.mulf %183, %184 : vector<16x16xf32>
    %186 = vector.extract_strided_slice %153 {offsets = [4, 0], sizes = [12, 16], strides = [1, 1]} : vector<16x16xf32> to vector<12x16xf32>
    %187 = vector.extract_strided_slice %153 {offsets = [0, 0], sizes = [4, 16], strides = [1, 1]} : vector<16x16xf32> to vector<4x16xf32>
    %188 = tpu.concatenate %186, %187 in 0 : vector<12x16xf32>, vector<4x16xf32> -> vector<16x16xf32>
    %189 = vector.broadcast %94 : vector<16x1xf32> to vector<16x16xf32>
    %190 = arith.mulf %188, %189 : vector<16x16xf32>
    %191 = vector.extract_strided_slice %153 {offsets = [5, 0], sizes = [11, 16], strides = [1, 1]} : vector<16x16xf32> to vector<11x16xf32>
    %192 = vector.extract_strided_slice %153 {offsets = [0, 0], sizes = [5, 16], strides = [1, 1]} : vector<16x16xf32> to vector<5x16xf32>
    %193 = tpu.concatenate %191, %192 in 0 : vector<11x16xf32>, vector<5x16xf32> -> vector<16x16xf32>
    %194 = vector.broadcast %96 : vector<16x1xf32> to vector<16x16xf32>
    %195 = arith.mulf %193, %194 : vector<16x16xf32>
    %cst_64 = arith.constant 0.000000e+00 : f32
    %196 = vector.broadcast %cst_64 : f32 to vector<16x112xf32>
    %197 = tpu.concatenate %158, %163, %168, %173, %175, %180, %185, %190, %195, %196 in 1 : vector<16x16xf32>, vector<16x16xf32>, vector<16x16xf32>, vector<16x16xf32>, vector<16x16xf32>, vector<16x16xf32>, vector<16x16xf32>, vector<16x16xf32>, vector<16x16xf32>, vector<16x112xf32> -> vector<16x256xf32>
    %198 = arith.truncf %197 : vector<16x256xf32> to vector<16x256xbf16>
    %c0_65 = arith.constant 0 : index
    %c0_66 = arith.constant 0 : index
    %199 = vector.load %arg17[%c0_65, %c0_66] : memref<256x128xbf16, #tpu.memory_space<vmem>>, vector<256x128xbf16>
    %cst_67 = arith.constant dense<0.000000e+00> : vector<16x128xf32>
    %200 = tpu.matmul %198, %199, %cst_67 {dimension_numbers = #tpu.dot_dimension_numbers<[1], [0], [0], [1], [0, 0, 1, 1], [], []>} : vector<16x256xbf16>, vector<256x128xbf16>, vector<16x128xf32> -> vector<16x128xf32>
    %c0_68 = arith.constant 0 : index
    %c0_69 = arith.constant 0 : index
    %201 = vector.load %arg18[%c0_68, %c0_69] : memref<1x128xf32, #tpu.memory_space<vmem>>, vector<1x128xf32>
    %202 = vector.broadcast %201 : vector<1x128xf32> to vector<16x128xf32>
    %203 = arith.mulf %200, %202 : vector<16x128xf32>
    %c0_70 = arith.constant 0 : index
    %c0_71 = arith.constant 0 : index
    %204 = vector.load %arg19[%c0_70, %c0_71] : memref<1x128xf32, #tpu.memory_space<vmem>>, vector<1x128xf32>
    %205 = vector.broadcast %204 : vector<1x128xf32> to vector<16x128xf32>
    %206 = arith.addf %203, %205 : vector<16x128xf32>
    %207 = arith.truncf %78 : vector<16x128xf32> to vector<16x128xbf16>
    %c0_72 = arith.constant 0 : index
    %c0_73 = arith.constant 0 : index
    %208 = vector.load %arg20[%c0_72, %c0_73] : memref<128x128xbf16, #tpu.memory_space<vmem>>, vector<128x128xbf16>
    %cst_74 = arith.constant dense<0.000000e+00> : vector<16x128xf32>
    %209 = tpu.matmul %207, %208, %cst_74 {dimension_numbers = #tpu.dot_dimension_numbers<[1], [0], [0], [1], [0, 0, 1, 1], [], []>} : vector<16x128xbf16>, vector<128x128xbf16>, vector<16x128xf32> -> vector<16x128xf32>
    %c0_75 = arith.constant 0 : index
    %c0_76 = arith.constant 0 : index
    %210 = vector.load %arg21[%c0_75, %c0_76] : memref<1x128xf32, #tpu.memory_space<vmem>>, vector<1x128xf32>
    %211 = vector.broadcast %210 : vector<1x128xf32> to vector<16x128xf32>
    %212 = arith.mulf %209, %211 : vector<16x128xf32>
    %c0_77 = arith.constant 0 : index
    %c0_78 = arith.constant 0 : index
    %213 = vector.load %arg22[%c0_77, %c0_78] : memref<1x128xf32, #tpu.memory_space<vmem>>, vector<1x128xf32>
    %214 = vector.broadcast %213 : vector<1x128xf32> to vector<16x128xf32>
    %215 = arith.addf %212, %214 : vector<16x128xf32>
    %216 = arith.addf %206, %215 : vector<16x128xf32>
    %cst_79 = arith.constant 0.000000e+00 : f32
    %217 = vector.broadcast %cst_79 : f32 to vector<16x128xf32>
    %218 = arith.maximumf %216, %217 : vector<16x128xf32>
    %219 = vector.extract_strided_slice %218 {offsets = [0, 0], sizes = [16, 16], strides = [1, 1]} : vector<16x128xf32> to vector<16x16xf32>
    %220 = vector.extract_strided_slice %219 {offsets = [11, 0], sizes = [5, 16], strides = [1, 1]} : vector<16x16xf32> to vector<5x16xf32>
    %221 = vector.extract_strided_slice %219 {offsets = [0, 0], sizes = [11, 16], strides = [1, 1]} : vector<16x16xf32> to vector<11x16xf32>
    %222 = tpu.concatenate %220, %221 in 0 : vector<5x16xf32>, vector<11x16xf32> -> vector<16x16xf32>
    %223 = vector.broadcast %80 : vector<16x1xf32> to vector<16x16xf32>
    %224 = arith.mulf %222, %223 : vector<16x16xf32>
    %225 = vector.extract_strided_slice %219 {offsets = [12, 0], sizes = [4, 16], strides = [1, 1]} : vector<16x16xf32> to vector<4x16xf32>
    %226 = vector.extract_strided_slice %219 {offsets = [0, 0], sizes = [12, 16], strides = [1, 1]} : vector<16x16xf32> to vector<12x16xf32>
    %227 = tpu.concatenate %225, %226 in 0 : vector<4x16xf32>, vector<12x16xf32> -> vector<16x16xf32>
    %228 = vector.broadcast %82 : vector<16x1xf32> to vector<16x16xf32>
    %229 = arith.mulf %227, %228 : vector<16x16xf32>
    %230 = vector.extract_strided_slice %219 {offsets = [13, 0], sizes = [3, 16], strides = [1, 1]} : vector<16x16xf32> to vector<3x16xf32>
    %231 = vector.extract_strided_slice %219 {offsets = [0, 0], sizes = [13, 16], strides = [1, 1]} : vector<16x16xf32> to vector<13x16xf32>
    %232 = tpu.concatenate %230, %231 in 0 : vector<3x16xf32>, vector<13x16xf32> -> vector<16x16xf32>
    %233 = vector.broadcast %84 : vector<16x1xf32> to vector<16x16xf32>
    %234 = arith.mulf %232, %233 : vector<16x16xf32>
    %235 = vector.extract_strided_slice %219 {offsets = [15, 0], sizes = [1, 16], strides = [1, 1]} : vector<16x16xf32> to vector<1x16xf32>
    %236 = vector.extract_strided_slice %219 {offsets = [0, 0], sizes = [15, 16], strides = [1, 1]} : vector<16x16xf32> to vector<15x16xf32>
    %237 = tpu.concatenate %235, %236 in 0 : vector<1x16xf32>, vector<15x16xf32> -> vector<16x16xf32>
    %238 = vector.broadcast %86 : vector<16x1xf32> to vector<16x16xf32>
    %239 = arith.mulf %237, %238 : vector<16x16xf32>
    %240 = vector.broadcast %88 : vector<16x1xf32> to vector<16x16xf32>
    %241 = arith.mulf %219, %240 : vector<16x16xf32>
    %242 = vector.extract_strided_slice %219 {offsets = [1, 0], sizes = [15, 16], strides = [1, 1]} : vector<16x16xf32> to vector<15x16xf32>
    %243 = vector.extract_strided_slice %219 {offsets = [0, 0], sizes = [1, 16], strides = [1, 1]} : vector<16x16xf32> to vector<1x16xf32>
    %244 = tpu.concatenate %242, %243 in 0 : vector<15x16xf32>, vector<1x16xf32> -> vector<16x16xf32>
    %245 = vector.broadcast %90 : vector<16x1xf32> to vector<16x16xf32>
    %246 = arith.mulf %244, %245 : vector<16x16xf32>
    %247 = vector.extract_strided_slice %219 {offsets = [3, 0], sizes = [13, 16], strides = [1, 1]} : vector<16x16xf32> to vector<13x16xf32>
    %248 = vector.extract_strided_slice %219 {offsets = [0, 0], sizes = [3, 16], strides = [1, 1]} : vector<16x16xf32> to vector<3x16xf32>
    %249 = tpu.concatenate %247, %248 in 0 : vector<13x16xf32>, vector<3x16xf32> -> vector<16x16xf32>
    %250 = vector.broadcast %92 : vector<16x1xf32> to vector<16x16xf32>
    %251 = arith.mulf %249, %250 : vector<16x16xf32>
    %252 = vector.extract_strided_slice %219 {offsets = [4, 0], sizes = [12, 16], strides = [1, 1]} : vector<16x16xf32> to vector<12x16xf32>
    %253 = vector.extract_strided_slice %219 {offsets = [0, 0], sizes = [4, 16], strides = [1, 1]} : vector<16x16xf32> to vector<4x16xf32>
    %254 = tpu.concatenate %252, %253 in 0 : vector<12x16xf32>, vector<4x16xf32> -> vector<16x16xf32>
    %255 = vector.broadcast %94 : vector<16x1xf32> to vector<16x16xf32>
    %256 = arith.mulf %254, %255 : vector<16x16xf32>
    %257 = vector.extract_strided_slice %219 {offsets = [5, 0], sizes = [11, 16], strides = [1, 1]} : vector<16x16xf32> to vector<11x16xf32>
    %258 = vector.extract_strided_slice %219 {offsets = [0, 0], sizes = [5, 16], strides = [1, 1]} : vector<16x16xf32> to vector<5x16xf32>
    %259 = tpu.concatenate %257, %258 in 0 : vector<11x16xf32>, vector<5x16xf32> -> vector<16x16xf32>
    %260 = vector.broadcast %96 : vector<16x1xf32> to vector<16x16xf32>
    %261 = arith.mulf %259, %260 : vector<16x16xf32>
    %cst_80 = arith.constant 0.000000e+00 : f32
    %262 = vector.broadcast %cst_80 : f32 to vector<16x112xf32>
    %263 = tpu.concatenate %224, %229, %234, %239, %241, %246, %251, %256, %261, %262 in 1 : vector<16x16xf32>, vector<16x16xf32>, vector<16x16xf32>, vector<16x16xf32>, vector<16x16xf32>, vector<16x16xf32>, vector<16x16xf32>, vector<16x16xf32>, vector<16x16xf32>, vector<16x112xf32> -> vector<16x256xf32>
    %264 = arith.truncf %263 : vector<16x256xf32> to vector<16x256xbf16>
    %c0_81 = arith.constant 0 : index
    %c0_82 = arith.constant 0 : index
    %265 = vector.load %arg23[%c0_81, %c0_82] : memref<256x128xbf16, #tpu.memory_space<vmem>>, vector<256x128xbf16>
    %cst_83 = arith.constant dense<0.000000e+00> : vector<16x128xf32>
    %266 = tpu.matmul %264, %265, %cst_83 {dimension_numbers = #tpu.dot_dimension_numbers<[1], [0], [0], [1], [0, 0, 1, 1], [], []>} : vector<16x256xbf16>, vector<256x128xbf16>, vector<16x128xf32> -> vector<16x128xf32>
    %c0_84 = arith.constant 0 : index
    %c0_85 = arith.constant 0 : index
    %267 = vector.load %arg24[%c0_84, %c0_85] : memref<1x128xf32, #tpu.memory_space<vmem>>, vector<1x128xf32>
    %268 = vector.broadcast %267 : vector<1x128xf32> to vector<16x128xf32>
    %269 = arith.mulf %266, %268 : vector<16x128xf32>
    %c0_86 = arith.constant 0 : index
    %c0_87 = arith.constant 0 : index
    %270 = vector.load %arg25[%c0_86, %c0_87] : memref<1x128xf32, #tpu.memory_space<vmem>>, vector<1x128xf32>
    %271 = vector.broadcast %270 : vector<1x128xf32> to vector<16x128xf32>
    %272 = arith.addf %269, %271 : vector<16x128xf32>
    %cst_88 = arith.constant 0.000000e+00 : f32
    %273 = vector.broadcast %cst_88 : f32 to vector<16x128xf32>
    %274 = arith.maximumf %272, %273 : vector<16x128xf32>
    %275 = vector.extract_strided_slice %274 {offsets = [0, 0], sizes = [16, 16], strides = [1, 1]} : vector<16x128xf32> to vector<16x16xf32>
    %276 = vector.extract_strided_slice %275 {offsets = [11, 0], sizes = [5, 16], strides = [1, 1]} : vector<16x16xf32> to vector<5x16xf32>
    %277 = vector.extract_strided_slice %275 {offsets = [0, 0], sizes = [11, 16], strides = [1, 1]} : vector<16x16xf32> to vector<11x16xf32>
    %278 = tpu.concatenate %276, %277 in 0 : vector<5x16xf32>, vector<11x16xf32> -> vector<16x16xf32>
    %279 = vector.broadcast %80 : vector<16x1xf32> to vector<16x16xf32>
    %280 = arith.mulf %278, %279 : vector<16x16xf32>
    %281 = vector.extract_strided_slice %275 {offsets = [12, 0], sizes = [4, 16], strides = [1, 1]} : vector<16x16xf32> to vector<4x16xf32>
    %282 = vector.extract_strided_slice %275 {offsets = [0, 0], sizes = [12, 16], strides = [1, 1]} : vector<16x16xf32> to vector<12x16xf32>
    %283 = tpu.concatenate %281, %282 in 0 : vector<4x16xf32>, vector<12x16xf32> -> vector<16x16xf32>
    %284 = vector.broadcast %82 : vector<16x1xf32> to vector<16x16xf32>
    %285 = arith.mulf %283, %284 : vector<16x16xf32>
    %286 = vector.extract_strided_slice %275 {offsets = [13, 0], sizes = [3, 16], strides = [1, 1]} : vector<16x16xf32> to vector<3x16xf32>
    %287 = vector.extract_strided_slice %275 {offsets = [0, 0], sizes = [13, 16], strides = [1, 1]} : vector<16x16xf32> to vector<13x16xf32>
    %288 = tpu.concatenate %286, %287 in 0 : vector<3x16xf32>, vector<13x16xf32> -> vector<16x16xf32>
    %289 = vector.broadcast %84 : vector<16x1xf32> to vector<16x16xf32>
    %290 = arith.mulf %288, %289 : vector<16x16xf32>
    %291 = vector.extract_strided_slice %275 {offsets = [15, 0], sizes = [1, 16], strides = [1, 1]} : vector<16x16xf32> to vector<1x16xf32>
    %292 = vector.extract_strided_slice %275 {offsets = [0, 0], sizes = [15, 16], strides = [1, 1]} : vector<16x16xf32> to vector<15x16xf32>
    %293 = tpu.concatenate %291, %292 in 0 : vector<1x16xf32>, vector<15x16xf32> -> vector<16x16xf32>
    %294 = vector.broadcast %86 : vector<16x1xf32> to vector<16x16xf32>
    %295 = arith.mulf %293, %294 : vector<16x16xf32>
    %296 = vector.broadcast %88 : vector<16x1xf32> to vector<16x16xf32>
    %297 = arith.mulf %275, %296 : vector<16x16xf32>
    %298 = vector.extract_strided_slice %275 {offsets = [1, 0], sizes = [15, 16], strides = [1, 1]} : vector<16x16xf32> to vector<15x16xf32>
    %299 = vector.extract_strided_slice %275 {offsets = [0, 0], sizes = [1, 16], strides = [1, 1]} : vector<16x16xf32> to vector<1x16xf32>
    %300 = tpu.concatenate %298, %299 in 0 : vector<15x16xf32>, vector<1x16xf32> -> vector<16x16xf32>
    %301 = vector.broadcast %90 : vector<16x1xf32> to vector<16x16xf32>
    %302 = arith.mulf %300, %301 : vector<16x16xf32>
    %303 = vector.extract_strided_slice %275 {offsets = [3, 0], sizes = [13, 16], strides = [1, 1]} : vector<16x16xf32> to vector<13x16xf32>
    %304 = vector.extract_strided_slice %275 {offsets = [0, 0], sizes = [3, 16], strides = [1, 1]} : vector<16x16xf32> to vector<3x16xf32>
    %305 = tpu.concatenate %303, %304 in 0 : vector<13x16xf32>, vector<3x16xf32> -> vector<16x16xf32>
    %306 = vector.broadcast %92 : vector<16x1xf32> to vector<16x16xf32>
    %307 = arith.mulf %305, %306 : vector<16x16xf32>
    %308 = vector.extract_strided_slice %275 {offsets = [4, 0], sizes = [12, 16], strides = [1, 1]} : vector<16x16xf32> to vector<12x16xf32>
    %309 = vector.extract_strided_slice %275 {offsets = [0, 0], sizes = [4, 16], strides = [1, 1]} : vector<16x16xf32> to vector<4x16xf32>
    %310 = tpu.concatenate %308, %309 in 0 : vector<12x16xf32>, vector<4x16xf32> -> vector<16x16xf32>
    %311 = vector.broadcast %94 : vector<16x1xf32> to vector<16x16xf32>
    %312 = arith.mulf %310, %311 : vector<16x16xf32>
    %313 = vector.extract_strided_slice %275 {offsets = [5, 0], sizes = [11, 16], strides = [1, 1]} : vector<16x16xf32> to vector<11x16xf32>
    %314 = vector.extract_strided_slice %275 {offsets = [0, 0], sizes = [5, 16], strides = [1, 1]} : vector<16x16xf32> to vector<5x16xf32>
    %315 = tpu.concatenate %313, %314 in 0 : vector<11x16xf32>, vector<5x16xf32> -> vector<16x16xf32>
    %316 = vector.broadcast %96 : vector<16x1xf32> to vector<16x16xf32>
    %317 = arith.mulf %315, %316 : vector<16x16xf32>
    %cst_89 = arith.constant 0.000000e+00 : f32
    %318 = vector.broadcast %cst_89 : f32 to vector<16x112xf32>
    %319 = tpu.concatenate %280, %285, %290, %295, %297, %302, %307, %312, %317, %318 in 1 : vector<16x16xf32>, vector<16x16xf32>, vector<16x16xf32>, vector<16x16xf32>, vector<16x16xf32>, vector<16x16xf32>, vector<16x16xf32>, vector<16x16xf32>, vector<16x16xf32>, vector<16x112xf32> -> vector<16x256xf32>
    %320 = arith.truncf %319 : vector<16x256xf32> to vector<16x256xbf16>
    %c0_90 = arith.constant 0 : index
    %c0_91 = arith.constant 0 : index
    %321 = vector.load %arg26[%c0_90, %c0_91] : memref<256x128xbf16, #tpu.memory_space<vmem>>, vector<256x128xbf16>
    %cst_92 = arith.constant dense<0.000000e+00> : vector<16x128xf32>
    %322 = tpu.matmul %320, %321, %cst_92 {dimension_numbers = #tpu.dot_dimension_numbers<[1], [0], [0], [1], [0, 0, 1, 1], [], []>} : vector<16x256xbf16>, vector<256x128xbf16>, vector<16x128xf32> -> vector<16x128xf32>
    %c0_93 = arith.constant 0 : index
    %c0_94 = arith.constant 0 : index
    %323 = vector.load %arg27[%c0_93, %c0_94] : memref<1x128xf32, #tpu.memory_space<vmem>>, vector<1x128xf32>
    %324 = vector.broadcast %323 : vector<1x128xf32> to vector<16x128xf32>
    %325 = arith.mulf %322, %324 : vector<16x128xf32>
    %c0_95 = arith.constant 0 : index
    %c0_96 = arith.constant 0 : index
    %326 = vector.load %arg28[%c0_95, %c0_96] : memref<1x128xf32, #tpu.memory_space<vmem>>, vector<1x128xf32>
    %327 = vector.broadcast %326 : vector<1x128xf32> to vector<16x128xf32>
    %328 = arith.addf %325, %327 : vector<16x128xf32>
    %329 = arith.addf %328, %218 : vector<16x128xf32>
    %cst_97 = arith.constant 0.000000e+00 : f32
    %330 = vector.broadcast %cst_97 : f32 to vector<16x128xf32>
    %331 = arith.maximumf %329, %330 : vector<16x128xf32>
    %332 = arith.truncf %331 : vector<16x128xf32> to vector<16x128xbf16>
    %cst_98 = arith.constant 0.000000e+00 : f32
    %333 = vector.broadcast %cst_98 : f32 to vector<64x128xf32>
    %c0_99 = arith.constant 0 : index
    %c0_100 = arith.constant 0 : index
    %c0_101 = arith.constant 0 : index
    %334 = vector.load %arg9[%c0_99, %c0_100, %c0_101] : memref<4x256x16xbf16, #tpu.memory_space<vmem>>, vector<1x64x16xbf16>
    %335 = vector.shape_cast %334 : vector<1x64x16xbf16> to vector<64x16xbf16>
    %cst_102 = arith.constant dense<0.000000e+00> : vector<64x128xf32>
    %336 = tpu.matmul %335, %332, %cst_102 {dimension_numbers = #tpu.dot_dimension_numbers<[1], [0], [0], [1], [0, 0, 1, 1], [], []>} : vector<64x16xbf16>, vector<16x128xbf16>, vector<64x128xf32> -> vector<64x128xf32>
    %c0_103 = arith.constant 0 : index
    %c0_104 = arith.constant 0 : index
    %c0_105 = arith.constant 0 : index
    %337 = vector.load %arg10[%c0_103, %c0_104, %c0_105] : memref<4x256x128xf32, #tpu.memory_space<vmem>>, vector<1x64x128xf32>
    %338 = vector.shape_cast %337 : vector<1x64x128xf32> to vector<64x128xf32>
    %339 = arith.mulf %336, %338 : vector<64x128xf32>
    %340 = arith.addf %333, %339 : vector<64x128xf32>
    %c1_106 = arith.constant 1 : index
    %c0_107 = arith.constant 0 : index
    %c0_108 = arith.constant 0 : index
    %341 = vector.load %arg9[%c1_106, %c0_107, %c0_108] : memref<4x256x16xbf16, #tpu.memory_space<vmem>>, vector<1x64x16xbf16>
    %342 = vector.shape_cast %341 : vector<1x64x16xbf16> to vector<64x16xbf16>
    %cst_109 = arith.constant dense<0.000000e+00> : vector<64x128xf32>
    %343 = tpu.matmul %342, %332, %cst_109 {dimension_numbers = #tpu.dot_dimension_numbers<[1], [0], [0], [1], [0, 0, 1, 1], [], []>} : vector<64x16xbf16>, vector<16x128xbf16>, vector<64x128xf32> -> vector<64x128xf32>
    %c1_110 = arith.constant 1 : index
    %c0_111 = arith.constant 0 : index
    %c0_112 = arith.constant 0 : index
    %344 = vector.load %arg10[%c1_110, %c0_111, %c0_112] : memref<4x256x128xf32, #tpu.memory_space<vmem>>, vector<1x64x128xf32>
    %345 = vector.shape_cast %344 : vector<1x64x128xf32> to vector<64x128xf32>
    %346 = arith.mulf %343, %345 : vector<64x128xf32>
    %347 = arith.addf %340, %346 : vector<64x128xf32>
    %c2_113 = arith.constant 2 : index
    %c0_114 = arith.constant 0 : index
    %c0_115 = arith.constant 0 : index
    %348 = vector.load %arg9[%c2_113, %c0_114, %c0_115] : memref<4x256x16xbf16, #tpu.memory_space<vmem>>, vector<1x64x16xbf16>
    %349 = vector.shape_cast %348 : vector<1x64x16xbf16> to vector<64x16xbf16>
    %cst_116 = arith.constant dense<0.000000e+00> : vector<64x128xf32>
    %350 = tpu.matmul %349, %332, %cst_116 {dimension_numbers = #tpu.dot_dimension_numbers<[1], [0], [0], [1], [0, 0, 1, 1], [], []>} : vector<64x16xbf16>, vector<16x128xbf16>, vector<64x128xf32> -> vector<64x128xf32>
    %c2_117 = arith.constant 2 : index
    %c0_118 = arith.constant 0 : index
    %c0_119 = arith.constant 0 : index
    %351 = vector.load %arg10[%c2_117, %c0_118, %c0_119] : memref<4x256x128xf32, #tpu.memory_space<vmem>>, vector<1x64x128xf32>
    %352 = vector.shape_cast %351 : vector<1x64x128xf32> to vector<64x128xf32>
    %353 = arith.mulf %350, %352 : vector<64x128xf32>
    %354 = arith.addf %347, %353 : vector<64x128xf32>
    %c3_120 = arith.constant 3 : index
    %c0_121 = arith.constant 0 : index
    %c0_122 = arith.constant 0 : index
    %355 = vector.load %arg9[%c3_120, %c0_121, %c0_122] : memref<4x256x16xbf16, #tpu.memory_space<vmem>>, vector<1x64x16xbf16>
    %356 = vector.shape_cast %355 : vector<1x64x16xbf16> to vector<64x16xbf16>
    %cst_123 = arith.constant dense<0.000000e+00> : vector<64x128xf32>
    %357 = tpu.matmul %356, %332, %cst_123 {dimension_numbers = #tpu.dot_dimension_numbers<[1], [0], [0], [1], [0, 0, 1, 1], [], []>} : vector<64x16xbf16>, vector<16x128xbf16>, vector<64x128xf32> -> vector<64x128xf32>
    %c3_124 = arith.constant 3 : index
    %c0_125 = arith.constant 0 : index
    %c0_126 = arith.constant 0 : index
    %358 = vector.load %arg10[%c3_124, %c0_125, %c0_126] : memref<4x256x128xf32, #tpu.memory_space<vmem>>, vector<1x64x128xf32>
    %359 = vector.shape_cast %358 : vector<1x64x128xf32> to vector<64x128xf32>
    %360 = arith.mulf %357, %359 : vector<64x128xf32>
    %361 = arith.addf %354, %360 : vector<64x128xf32>
    %c0_127 = arith.constant 0 : index
    %c0_128 = arith.constant 0 : index
    %362 = vector.load %arg11[%c0_127, %c0_128] : memref<1x128xf32, #tpu.memory_space<vmem>>, vector<1x128xf32>
    %363 = vector.broadcast %362 : vector<1x128xf32> to vector<64x128xf32>
    %364 = arith.addf %361, %363 : vector<64x128xf32>
    %365 = arith.truncf %364 : vector<64x128xf32> to vector<64x128xbf16>
    %c0_129 = arith.constant 0 : index
    %c0_130 = arith.constant 0 : index
    %366 = vector.load %arg12[%c0_129, %c0_130] : memref<128x128xbf16, #tpu.memory_space<vmem>>, vector<128x128xbf16>
    %cst_131 = arith.constant dense<0.000000e+00> : vector<64x128xf32>
    %367 = tpu.matmul %365, %366, %cst_131 {dimension_numbers = #tpu.dot_dimension_numbers<[1], [0], [0], [1], [0, 0, 1, 1], [], []>} : vector<64x128xbf16>, vector<128x128xbf16>, vector<64x128xf32> -> vector<64x128xf32>
    %c0_132 = arith.constant 0 : index
    %c0_133 = arith.constant 0 : index
    %368 = vector.load %arg13[%c0_132, %c0_133] : memref<1x128xf32, #tpu.memory_space<vmem>>, vector<1x128xf32>
    %369 = vector.broadcast %368 : vector<1x128xf32> to vector<64x128xf32>
    %370 = arith.addf %367, %369 : vector<64x128xf32>
    %371 = math.tanh %370 : vector<64x128xf32>
    %c0_134 = arith.constant 0 : index
    %c0_135 = arith.constant 0 : index
    %c0_136 = arith.constant 0 : index
    %372 = vector.load %arg2[%c0_134, %c0_135, %c0_136] : memref<1x256x128xf32, #tpu.memory_space<vmem>>, vector<1x64x128xf32>
    %373 = vector.shape_cast %372 : vector<1x64x128xf32> to vector<64x128xf32>
    %374 = arith.addf %373, %371 : vector<64x128xf32>
    %cst_137 = arith.constant 0.000000e+00 : f32
    %cst_138 = arith.constant 1.000000e+00 : f32
    %375 = vector.broadcast %cst_137 : f32 to vector<64x128xf32>
    %376 = arith.maximumf %375, %374 : vector<64x128xf32>
    %377 = vector.broadcast %cst_138 : f32 to vector<64x128xf32>
    %378 = arith.minimumf %377, %376 : vector<64x128xf32>
    %c0_139 = arith.constant 0 : index
    %c0_140 = arith.constant 0 : index
    %c0_141 = arith.constant 0 : index
    %379 = vector.load %arg29[%c0_139, %c0_140, %c0_141] : memref<1x256x128xf32, #tpu.memory_space<vmem>>, vector<1x64x128xf32>
    %380 = vector.shape_cast %379 : vector<1x64x128xf32> to vector<64x128xf32>
    %381 = vector.shape_cast %378 : vector<64x128xf32> to vector<1x64x128xf32>
    tpu.vector_store %arg29[%c0_139, %c0_140, %c0_141], %381 {strides = array<i32>} : memref<1x256x128xf32, #tpu.memory_space<vmem>>, vector<1x64x128xf32>,
    %cst_142 = arith.constant 0.000000e+00 : f32
    %382 = vector.broadcast %cst_142 : f32 to vector<64x128xf32>
    %c0_143 = arith.constant 0 : index
    %c64 = arith.constant 64 : index
    %c0_144 = arith.constant 0 : index
    %383 = vector.load %arg9[%c0_143, %c64, %c0_144] : memref<4x256x16xbf16, #tpu.memory_space<vmem>>, vector<1x64x16xbf16>
    %384 = vector.shape_cast %383 : vector<1x64x16xbf16> to vector<64x16xbf16>
    %cst_145 = arith.constant dense<0.000000e+00> : vector<64x128xf32>
    %385 = tpu.matmul %384, %332, %cst_145 {dimension_numbers = #tpu.dot_dimension_numbers<[1], [0], [0], [1], [0, 0, 1, 1], [], []>} : vector<64x16xbf16>, vector<16x128xbf16>, vector<64x128xf32> -> vector<64x128xf32>
    %c0_146 = arith.constant 0 : index
    %c64_147 = arith.constant 64 : index
    %c0_148 = arith.constant 0 : index
    %386 = vector.load %arg10[%c0_146, %c64_147, %c0_148] : memref<4x256x128xf32, #tpu.memory_space<vmem>>, vector<1x64x128xf32>
    %387 = vector.shape_cast %386 : vector<1x64x128xf32> to vector<64x128xf32>
    %388 = arith.mulf %385, %387 : vector<64x128xf32>
    %389 = arith.addf %382, %388 : vector<64x128xf32>
    %c1_149 = arith.constant 1 : index
    %c64_150 = arith.constant 64 : index
    %c0_151 = arith.constant 0 : index
    %390 = vector.load %arg9[%c1_149, %c64_150, %c0_151] : memref<4x256x16xbf16, #tpu.memory_space<vmem>>, vector<1x64x16xbf16>
    %391 = vector.shape_cast %390 : vector<1x64x16xbf16> to vector<64x16xbf16>
    %cst_152 = arith.constant dense<0.000000e+00> : vector<64x128xf32>
    %392 = tpu.matmul %391, %332, %cst_152 {dimension_numbers = #tpu.dot_dimension_numbers<[1], [0], [0], [1], [0, 0, 1, 1], [], []>} : vector<64x16xbf16>, vector<16x128xbf16>, vector<64x128xf32> -> vector<64x128xf32>
    %c1_153 = arith.constant 1 : index
    %c64_154 = arith.constant 64 : index
    %c0_155 = arith.constant 0 : index
    %393 = vector.load %arg10[%c1_153, %c64_154, %c0_155] : memref<4x256x128xf32, #tpu.memory_space<vmem>>, vector<1x64x128xf32>
    %394 = vector.shape_cast %393 : vector<1x64x128xf32> to vector<64x128xf32>
    %395 = arith.mulf %392, %394 : vector<64x128xf32>
    %396 = arith.addf %389, %395 : vector<64x128xf32>
    %c2_156 = arith.constant 2 : index
    %c64_157 = arith.constant 64 : index
    %c0_158 = arith.constant 0 : index
    %397 = vector.load %arg9[%c2_156, %c64_157, %c0_158] : memref<4x256x16xbf16, #tpu.memory_space<vmem>>, vector<1x64x16xbf16>
    %398 = vector.shape_cast %397 : vector<1x64x16xbf16> to vector<64x16xbf16>
    %cst_159 = arith.constant dense<0.000000e+00> : vector<64x128xf32>
    %399 = tpu.matmul %398, %332, %cst_159 {dimension_numbers = #tpu.dot_dimension_numbers<[1], [0], [0], [1], [0, 0, 1, 1], [], []>} : vector<64x16xbf16>, vector<16x128xbf16>, vector<64x128xf32> -> vector<64x128xf32>
    %c2_160 = arith.constant 2 : index
    %c64_161 = arith.constant 64 : index
    %c0_162 = arith.constant 0 : index
    %400 = vector.load %arg10[%c2_160, %c64_161, %c0_162] : memref<4x256x128xf32, #tpu.memory_space<vmem>>, vector<1x64x128xf32>
    %401 = vector.shape_cast %400 : vector<1x64x128xf32> to vector<64x128xf32>
    %402 = arith.mulf %399, %401 : vector<64x128xf32>
    %403 = arith.addf %396, %402 : vector<64x128xf32>
    %c3_163 = arith.constant 3 : index
    %c64_164 = arith.constant 64 : index
    %c0_165 = arith.constant 0 : index
    %404 = vector.load %arg9[%c3_163, %c64_164, %c0_165] : memref<4x256x16xbf16, #tpu.memory_space<vmem>>, vector<1x64x16xbf16>
    %405 = vector.shape_cast %404 : vector<1x64x16xbf16> to vector<64x16xbf16>
    %cst_166 = arith.constant dense<0.000000e+00> : vector<64x128xf32>
    %406 = tpu.matmul %405, %332, %cst_166 {dimension_numbers = #tpu.dot_dimension_numbers<[1], [0], [0], [1], [0, 0, 1, 1], [], []>} : vector<64x16xbf16>, vector<16x128xbf16>, vector<64x128xf32> -> vector<64x128xf32>
    %c3_167 = arith.constant 3 : index
    %c64_168 = arith.constant 64 : index
    %c0_169 = arith.constant 0 : index
    %407 = vector.load %arg10[%c3_167, %c64_168, %c0_169] : memref<4x256x128xf32, #tpu.memory_space<vmem>>, vector<1x64x128xf32>
    %408 = vector.shape_cast %407 : vector<1x64x128xf32> to vector<64x128xf32>
    %409 = arith.mulf %406, %408 : vector<64x128xf32>
    %410 = arith.addf %403, %409 : vector<64x128xf32>
    %c0_170 = arith.constant 0 : index
    %c0_171 = arith.constant 0 : index
    %411 = vector.load %arg11[%c0_170, %c0_171] : memref<1x128xf32, #tpu.memory_space<vmem>>, vector<1x128xf32>
    %412 = vector.broadcast %411 : vector<1x128xf32> to vector<64x128xf32>
    %413 = arith.addf %410, %412 : vector<64x128xf32>
    %414 = arith.truncf %413 : vector<64x128xf32> to vector<64x128xbf16>
    %c0_172 = arith.constant 0 : index
    %c0_173 = arith.constant 0 : index
    %415 = vector.load %arg12[%c0_172, %c0_173] : memref<128x128xbf16, #tpu.memory_space<vmem>>, vector<128x128xbf16>
    %cst_174 = arith.constant dense<0.000000e+00> : vector<64x128xf32>
    %416 = tpu.matmul %414, %415, %cst_174 {dimension_numbers = #tpu.dot_dimension_numbers<[1], [0], [0], [1], [0, 0, 1, 1], [], []>} : vector<64x128xbf16>, vector<128x128xbf16>, vector<64x128xf32> -> vector<64x128xf32>
    %c0_175 = arith.constant 0 : index
    %c0_176 = arith.constant 0 : index
    %417 = vector.load %arg13[%c0_175, %c0_176] : memref<1x128xf32, #tpu.memory_space<vmem>>, vector<1x128xf32>
    %418 = vector.broadcast %417 : vector<1x128xf32> to vector<64x128xf32>
    %419 = arith.addf %416, %418 : vector<64x128xf32>
    %420 = math.tanh %419 : vector<64x128xf32>
    %c0_177 = arith.constant 0 : index
    %c64_178 = arith.constant 64 : index
    %c0_179 = arith.constant 0 : index
    %421 = vector.load %arg2[%c0_177, %c64_178, %c0_179] : memref<1x256x128xf32, #tpu.memory_space<vmem>>, vector<1x64x128xf32>
    %422 = vector.shape_cast %421 : vector<1x64x128xf32> to vector<64x128xf32>
    %423 = arith.addf %422, %420 : vector<64x128xf32>
    %cst_180 = arith.constant 0.000000e+00 : f32
    %cst_181 = arith.constant 1.000000e+00 : f32
    %424 = vector.broadcast %cst_180 : f32 to vector<64x128xf32>
    %425 = arith.maximumf %424, %423 : vector<64x128xf32>
    %426 = vector.broadcast %cst_181 : f32 to vector<64x128xf32>
    %427 = arith.minimumf %426, %425 : vector<64x128xf32>
    %c0_182 = arith.constant 0 : index
    %c64_183 = arith.constant 64 : index
    %c0_184 = arith.constant 0 : index
    %428 = vector.load %arg29[%c0_182, %c64_183, %c0_184] : memref<1x256x128xf32, #tpu.memory_space<vmem>>, vector<1x64x128xf32>
    %429 = vector.shape_cast %428 : vector<1x64x128xf32> to vector<64x128xf32>
    %430 = vector.shape_cast %427 : vector<64x128xf32> to vector<1x64x128xf32>
    tpu.vector_store %arg29[%c0_182, %c64_183, %c0_184], %430 {strides = array<i32>} : memref<1x256x128xf32, #tpu.memory_space<vmem>>, vector<1x64x128xf32>,
    %cst_185 = arith.constant 0.000000e+00 : f32
    %431 = vector.broadcast %cst_185 : f32 to vector<64x128xf32>
    %c0_186 = arith.constant 0 : index
    %c128 = arith.constant 128 : index
    %c0_187 = arith.constant 0 : index
    %432 = vector.load %arg9[%c0_186, %c128, %c0_187] : memref<4x256x16xbf16, #tpu.memory_space<vmem>>, vector<1x64x16xbf16>
    %433 = vector.shape_cast %432 : vector<1x64x16xbf16> to vector<64x16xbf16>
    %cst_188 = arith.constant dense<0.000000e+00> : vector<64x128xf32>
    %434 = tpu.matmul %433, %332, %cst_188 {dimension_numbers = #tpu.dot_dimension_numbers<[1], [0], [0], [1], [0, 0, 1, 1], [], []>} : vector<64x16xbf16>, vector<16x128xbf16>, vector<64x128xf32> -> vector<64x128xf32>
    %c0_189 = arith.constant 0 : index
    %c128_190 = arith.constant 128 : index
    %c0_191 = arith.constant 0 : index
    %435 = vector.load %arg10[%c0_189, %c128_190, %c0_191] : memref<4x256x128xf32, #tpu.memory_space<vmem>>, vector<1x64x128xf32>
    %436 = vector.shape_cast %435 : vector<1x64x128xf32> to vector<64x128xf32>
    %437 = arith.mulf %434, %436 : vector<64x128xf32>
    %438 = arith.addf %431, %437 : vector<64x128xf32>
    %c1_192 = arith.constant 1 : index
    %c128_193 = arith.constant 128 : index
    %c0_194 = arith.constant 0 : index
    %439 = vector.load %arg9[%c1_192, %c128_193, %c0_194] : memref<4x256x16xbf16, #tpu.memory_space<vmem>>, vector<1x64x16xbf16>
    %440 = vector.shape_cast %439 : vector<1x64x16xbf16> to vector<64x16xbf16>
    %cst_195 = arith.constant dense<0.000000e+00> : vector<64x128xf32>
    %441 = tpu.matmul %440, %332, %cst_195 {dimension_numbers = #tpu.dot_dimension_numbers<[1], [0], [0], [1], [0, 0, 1, 1], [], []>} : vector<64x16xbf16>, vector<16x128xbf16>, vector<64x128xf32> -> vector<64x128xf32>
    %c1_196 = arith.constant 1 : index
    %c128_197 = arith.constant 128 : index
    %c0_198 = arith.constant 0 : index
    %442 = vector.load %arg10[%c1_196, %c128_197, %c0_198] : memref<4x256x128xf32, #tpu.memory_space<vmem>>, vector<1x64x128xf32>
    %443 = vector.shape_cast %442 : vector<1x64x128xf32> to vector<64x128xf32>
    %444 = arith.mulf %441, %443 : vector<64x128xf32>
    %445 = arith.addf %438, %444 : vector<64x128xf32>
    %c2_199 = arith.constant 2 : index
    %c128_200 = arith.constant 128 : index
    %c0_201 = arith.constant 0 : index
    %446 = vector.load %arg9[%c2_199, %c128_200, %c0_201] : memref<4x256x16xbf16, #tpu.memory_space<vmem>>, vector<1x64x16xbf16>
    %447 = vector.shape_cast %446 : vector<1x64x16xbf16> to vector<64x16xbf16>
    %cst_202 = arith.constant dense<0.000000e+00> : vector<64x128xf32>
    %448 = tpu.matmul %447, %332, %cst_202 {dimension_numbers = #tpu.dot_dimension_numbers<[1], [0], [0], [1], [0, 0, 1, 1], [], []>} : vector<64x16xbf16>, vector<16x128xbf16>, vector<64x128xf32> -> vector<64x128xf32>
    %c2_203 = arith.constant 2 : index
    %c128_204 = arith.constant 128 : index
    %c0_205 = arith.constant 0 : index
    %449 = vector.load %arg10[%c2_203, %c128_204, %c0_205] : memref<4x256x128xf32, #tpu.memory_space<vmem>>, vector<1x64x128xf32>
    %450 = vector.shape_cast %449 : vector<1x64x128xf32> to vector<64x128xf32>
    %451 = arith.mulf %448, %450 : vector<64x128xf32>
    %452 = arith.addf %445, %451 : vector<64x128xf32>
    %c3_206 = arith.constant 3 : index
    %c128_207 = arith.constant 128 : index
    %c0_208 = arith.constant 0 : index
    %453 = vector.load %arg9[%c3_206, %c128_207, %c0_208] : memref<4x256x16xbf16, #tpu.memory_space<vmem>>, vector<1x64x16xbf16>
    %454 = vector.shape_cast %453 : vector<1x64x16xbf16> to vector<64x16xbf16>
    %cst_209 = arith.constant dense<0.000000e+00> : vector<64x128xf32>
    %455 = tpu.matmul %454, %332, %cst_209 {dimension_numbers = #tpu.dot_dimension_numbers<[1], [0], [0], [1], [0, 0, 1, 1], [], []>} : vector<64x16xbf16>, vector<16x128xbf16>, vector<64x128xf32> -> vector<64x128xf32>
    %c3_210 = arith.constant 3 : index
    %c128_211 = arith.constant 128 : index
    %c0_212 = arith.constant 0 : index
    %456 = vector.load %arg10[%c3_210, %c128_211, %c0_212] : memref<4x256x128xf32, #tpu.memory_space<vmem>>, vector<1x64x128xf32>
    %457 = vector.shape_cast %456 : vector<1x64x128xf32> to vector<64x128xf32>
    %458 = arith.mulf %455, %457 : vector<64x128xf32>
    %459 = arith.addf %452, %458 : vector<64x128xf32>
    %c0_213 = arith.constant 0 : index
    %c0_214 = arith.constant 0 : index
    %460 = vector.load %arg11[%c0_213, %c0_214] : memref<1x128xf32, #tpu.memory_space<vmem>>, vector<1x128xf32>
    %461 = vector.broadcast %460 : vector<1x128xf32> to vector<64x128xf32>
    %462 = arith.addf %459, %461 : vector<64x128xf32>
    %463 = arith.truncf %462 : vector<64x128xf32> to vector<64x128xbf16>
    %c0_215 = arith.constant 0 : index
    %c0_216 = arith.constant 0 : index
    %464 = vector.load %arg12[%c0_215, %c0_216] : memref<128x128xbf16, #tpu.memory_space<vmem>>, vector<128x128xbf16>
    %cst_217 = arith.constant dense<0.000000e+00> : vector<64x128xf32>
    %465 = tpu.matmul %463, %464, %cst_217 {dimension_numbers = #tpu.dot_dimension_numbers<[1], [0], [0], [1], [0, 0, 1, 1], [], []>} : vector<64x128xbf16>, vector<128x128xbf16>, vector<64x128xf32> -> vector<64x128xf32>
    %c0_218 = arith.constant 0 : index
    %c0_219 = arith.constant 0 : index
    %466 = vector.load %arg13[%c0_218, %c0_219] : memref<1x128xf32, #tpu.memory_space<vmem>>, vector<1x128xf32>
    %467 = vector.broadcast %466 : vector<1x128xf32> to vector<64x128xf32>
    %468 = arith.addf %465, %467 : vector<64x128xf32>
    %469 = math.tanh %468 : vector<64x128xf32>
    %c0_220 = arith.constant 0 : index
    %c128_221 = arith.constant 128 : index
    %c0_222 = arith.constant 0 : index
    %470 = vector.load %arg2[%c0_220, %c128_221, %c0_222] : memref<1x256x128xf32, #tpu.memory_space<vmem>>, vector<1x64x128xf32>
    %471 = vector.shape_cast %470 : vector<1x64x128xf32> to vector<64x128xf32>
    %472 = arith.addf %471, %469 : vector<64x128xf32>
    %cst_223 = arith.constant 0.000000e+00 : f32
    %cst_224 = arith.constant 1.000000e+00 : f32
    %473 = vector.broadcast %cst_223 : f32 to vector<64x128xf32>
    %474 = arith.maximumf %473, %472 : vector<64x128xf32>
    %475 = vector.broadcast %cst_224 : f32 to vector<64x128xf32>
    %476 = arith.minimumf %475, %474 : vector<64x128xf32>
    %c0_225 = arith.constant 0 : index
    %c128_226 = arith.constant 128 : index
    %c0_227 = arith.constant 0 : index
    %477 = vector.load %arg29[%c0_225, %c128_226, %c0_227] : memref<1x256x128xf32, #tpu.memory_space<vmem>>, vector<1x64x128xf32>
    %478 = vector.shape_cast %477 : vector<1x64x128xf32> to vector<64x128xf32>
    %479 = vector.shape_cast %476 : vector<64x128xf32> to vector<1x64x128xf32>
    tpu.vector_store %arg29[%c0_225, %c128_226, %c0_227], %479 {strides = array<i32>} : memref<1x256x128xf32, #tpu.memory_space<vmem>>, vector<1x64x128xf32>,
    %cst_228 = arith.constant 0.000000e+00 : f32
    %480 = vector.broadcast %cst_228 : f32 to vector<64x128xf32>
    %c0_229 = arith.constant 0 : index
    %c192 = arith.constant 192 : index
    %c0_230 = arith.constant 0 : index
    %481 = vector.load %arg9[%c0_229, %c192, %c0_230] : memref<4x256x16xbf16, #tpu.memory_space<vmem>>, vector<1x64x16xbf16>
    %482 = vector.shape_cast %481 : vector<1x64x16xbf16> to vector<64x16xbf16>
    %cst_231 = arith.constant dense<0.000000e+00> : vector<64x128xf32>
    %483 = tpu.matmul %482, %332, %cst_231 {dimension_numbers = #tpu.dot_dimension_numbers<[1], [0], [0], [1], [0, 0, 1, 1], [], []>} : vector<64x16xbf16>, vector<16x128xbf16>, vector<64x128xf32> -> vector<64x128xf32>
    %c0_232 = arith.constant 0 : index
    %c192_233 = arith.constant 192 : index
    %c0_234 = arith.constant 0 : index
    %484 = vector.load %arg10[%c0_232, %c192_233, %c0_234] : memref<4x256x128xf32, #tpu.memory_space<vmem>>, vector<1x64x128xf32>
    %485 = vector.shape_cast %484 : vector<1x64x128xf32> to vector<64x128xf32>
    %486 = arith.mulf %483, %485 : vector<64x128xf32>
    %487 = arith.addf %480, %486 : vector<64x128xf32>
    %c1_235 = arith.constant 1 : index
    %c192_236 = arith.constant 192 : index
    %c0_237 = arith.constant 0 : index
    %488 = vector.load %arg9[%c1_235, %c192_236, %c0_237] : memref<4x256x16xbf16, #tpu.memory_space<vmem>>, vector<1x64x16xbf16>
    %489 = vector.shape_cast %488 : vector<1x64x16xbf16> to vector<64x16xbf16>
    %cst_238 = arith.constant dense<0.000000e+00> : vector<64x128xf32>
    %490 = tpu.matmul %489, %332, %cst_238 {dimension_numbers = #tpu.dot_dimension_numbers<[1], [0], [0], [1], [0, 0, 1, 1], [], []>} : vector<64x16xbf16>, vector<16x128xbf16>, vector<64x128xf32> -> vector<64x128xf32>
    %c1_239 = arith.constant 1 : index
    %c192_240 = arith.constant 192 : index
    %c0_241 = arith.constant 0 : index
    %491 = vector.load %arg10[%c1_239, %c192_240, %c0_241] : memref<4x256x128xf32, #tpu.memory_space<vmem>>, vector<1x64x128xf32>
    %492 = vector.shape_cast %491 : vector<1x64x128xf32> to vector<64x128xf32>
    %493 = arith.mulf %490, %492 : vector<64x128xf32>
    %494 = arith.addf %487, %493 : vector<64x128xf32>
    %c2_242 = arith.constant 2 : index
    %c192_243 = arith.constant 192 : index
    %c0_244 = arith.constant 0 : index
    %495 = vector.load %arg9[%c2_242, %c192_243, %c0_244] : memref<4x256x16xbf16, #tpu.memory_space<vmem>>, vector<1x64x16xbf16>
    %496 = vector.shape_cast %495 : vector<1x64x16xbf16> to vector<64x16xbf16>
    %cst_245 = arith.constant dense<0.000000e+00> : vector<64x128xf32>
    %497 = tpu.matmul %496, %332, %cst_245 {dimension_numbers = #tpu.dot_dimension_numbers<[1], [0], [0], [1], [0, 0, 1, 1], [], []>} : vector<64x16xbf16>, vector<16x128xbf16>, vector<64x128xf32> -> vector<64x128xf32>
    %c2_246 = arith.constant 2 : index
    %c192_247 = arith.constant 192 : index
    %c0_248 = arith.constant 0 : index
    %498 = vector.load %arg10[%c2_246, %c192_247, %c0_248] : memref<4x256x128xf32, #tpu.memory_space<vmem>>, vector<1x64x128xf32>
    %499 = vector.shape_cast %498 : vector<1x64x128xf32> to vector<64x128xf32>
    %500 = arith.mulf %497, %499 : vector<64x128xf32>
    %501 = arith.addf %494, %500 : vector<64x128xf32>
    %c3_249 = arith.constant 3 : index
    %c192_250 = arith.constant 192 : index
    %c0_251 = arith.constant 0 : index
    %502 = vector.load %arg9[%c3_249, %c192_250, %c0_251] : memref<4x256x16xbf16, #tpu.memory_space<vmem>>, vector<1x64x16xbf16>
    %503 = vector.shape_cast %502 : vector<1x64x16xbf16> to vector<64x16xbf16>
    %cst_252 = arith.constant dense<0.000000e+00> : vector<64x128xf32>
    %504 = tpu.matmul %503, %332, %cst_252 {dimension_numbers = #tpu.dot_dimension_numbers<[1], [0], [0], [1], [0, 0, 1, 1], [], []>} : vector<64x16xbf16>, vector<16x128xbf16>, vector<64x128xf32> -> vector<64x128xf32>
    %c3_253 = arith.constant 3 : index
    %c192_254 = arith.constant 192 : index
    %c0_255 = arith.constant 0 : index
    %505 = vector.load %arg10[%c3_253, %c192_254, %c0_255] : memref<4x256x128xf32, #tpu.memory_space<vmem>>, vector<1x64x128xf32>
    %506 = vector.shape_cast %505 : vector<1x64x128xf32> to vector<64x128xf32>
    %507 = arith.mulf %504, %506 : vector<64x128xf32>
    %508 = arith.addf %501, %507 : vector<64x128xf32>
    %c0_256 = arith.constant 0 : index
    %c0_257 = arith.constant 0 : index
    %509 = vector.load %arg11[%c0_256, %c0_257] : memref<1x128xf32, #tpu.memory_space<vmem>>, vector<1x128xf32>
    %510 = vector.broadcast %509 : vector<1x128xf32> to vector<64x128xf32>
    %511 = arith.addf %508, %510 : vector<64x128xf32>
    %512 = arith.truncf %511 : vector<64x128xf32> to vector<64x128xbf16>
    %c0_258 = arith.constant 0 : index
    %c0_259 = arith.constant 0 : index
    %513 = vector.load %arg12[%c0_258, %c0_259] : memref<128x128xbf16, #tpu.memory_space<vmem>>, vector<128x128xbf16>
    %cst_260 = arith.constant dense<0.000000e+00> : vector<64x128xf32>
    %514 = tpu.matmul %512, %513, %cst_260 {dimension_numbers = #tpu.dot_dimension_numbers<[1], [0], [0], [1], [0, 0, 1, 1], [], []>} : vector<64x128xbf16>, vector<128x128xbf16>, vector<64x128xf32> -> vector<64x128xf32>
    %c0_261 = arith.constant 0 : index
    %c0_262 = arith.constant 0 : index
    %515 = vector.load %arg13[%c0_261, %c0_262] : memref<1x128xf32, #tpu.memory_space<vmem>>, vector<1x128xf32>
    %516 = vector.broadcast %515 : vector<1x128xf32> to vector<64x128xf32>
    %517 = arith.addf %514, %516 : vector<64x128xf32>
    %518 = math.tanh %517 : vector<64x128xf32>
    %c0_263 = arith.constant 0 : index
    %c192_264 = arith.constant 192 : index
    %c0_265 = arith.constant 0 : index
    %519 = vector.load %arg2[%c0_263, %c192_264, %c0_265] : memref<1x256x128xf32, #tpu.memory_space<vmem>>, vector<1x64x128xf32>
    %520 = vector.shape_cast %519 : vector<1x64x128xf32> to vector<64x128xf32>
    %521 = arith.addf %520, %518 : vector<64x128xf32>
    %cst_266 = arith.constant 0.000000e+00 : f32
    %cst_267 = arith.constant 1.000000e+00 : f32
    %522 = vector.broadcast %cst_266 : f32 to vector<64x128xf32>
    %523 = arith.maximumf %522, %521 : vector<64x128xf32>
    %524 = vector.broadcast %cst_267 : f32 to vector<64x128xf32>
    %525 = arith.minimumf %524, %523 : vector<64x128xf32>
    %c0_268 = arith.constant 0 : index
    %c192_269 = arith.constant 192 : index
    %c0_270 = arith.constant 0 : index
    %526 = vector.load %arg29[%c0_268, %c192_269, %c0_270] : memref<1x256x128xf32, #tpu.memory_space<vmem>>, vector<1x64x128xf32>
    %527 = vector.shape_cast %526 : vector<1x64x128xf32> to vector<64x128xf32>
    %528 = vector.shape_cast %525 : vector<64x128xf32> to vector<1x64x128xf32>
    tpu.vector_store %arg29[%c0_268, %c192_269, %c0_270], %528 {strides = array<i32>} : memref<1x256x128xf32, #tpu.memory_space<vmem>>, vector<1x64x128xf32>,
    return
  }
  func.func @transform_0(%arg0: i32) -> (i32, i32, i32) {
    %c0_i32 = arith.constant 0 : i32
    %c0_i32_0 = arith.constant 0 : i32
    %c0_i32_1 = arith.constant 0 : i32
    return %arg0, %c0_i32, %c0_i32_0 : i32, i32, i32
  }
  func.func @transform_1(%arg0: i32) -> (i32, i32, i32) {
    %c0_i32 = arith.constant 0 : i32
    %c0_i32_0 = arith.constant 0 : i32
    %c0_i32_1 = arith.constant 0 : i32
    return %arg0, %c0_i32, %c0_i32_0 : i32, i32, i32
  }
  func.func @transform_2(%arg0: i32) -> (i32, i32) {
    %c0_i32 = arith.constant 0 : i32
    %c0_i32_0 = arith.constant 0 : i32
    %c0_i32_1 = arith.constant 0 : i32
    return %c0_i32, %c0_i32_0 : i32, i32
  }
  func.func @transform_3(%arg0: i32) -> (i32, i32) {
    %c0_i32 = arith.constant 0 : i32
    %c0_i32_0 = arith.constant 0 : i32
    %c0_i32_1 = arith.constant 0 : i32
    return %c0_i32, %c0_i32_0 : i32, i32
  }
  func.func @transform_4(%arg0: i32) -> (i32, i32) {
    %c0_i32 = arith.constant 0 : i32
    %c0_i32_0 = arith.constant 0 : i32
    %c0_i32_1 = arith.constant 0 : i32
    return %c0_i32, %c0_i32_0 : i32, i32
  }
  func.func @transform_5(%arg0: i32) -> (i32, i32, i32) {
    %c0_i32 = arith.constant 0 : i32
    %c0_i32_0 = arith.constant 0 : i32
    %c0_i32_1 = arith.constant 0 : i32
    %c0_i32_2 = arith.constant 0 : i32
    return %c0_i32, %c0_i32_0, %c0_i32_1 : i32, i32, i32
  }
  func.func @transform_6(%arg0: i32) -> (i32, i32) {
    %c0_i32 = arith.constant 0 : i32
    %c0_i32_0 = arith.constant 0 : i32
    %c0_i32_1 = arith.constant 0 : i32
    return %c0_i32, %c0_i32_0 : i32, i32
  }
  func.func @transform_7(%arg0: i32) -> (i32, i32, i32) {
    %c0_i32 = arith.constant 0 : i32
    %c0_i32_0 = arith.constant 0 : i32
    %c0_i32_1 = arith.constant 0 : i32
    %c0_i32_2 = arith.constant 0 : i32
    return %c0_i32, %c0_i32_0, %c0_i32_1 : i32, i32, i32
  }
  func.func @transform_8(%arg0: i32) -> (i32, i32, i32) {
    %c0_i32 = arith.constant 0 : i32
    %c0_i32_0 = arith.constant 0 : i32
    %c0_i32_1 = arith.constant 0 : i32
    %c0_i32_2 = arith.constant 0 : i32
    return %c0_i32, %c0_i32_0, %c0_i32_1 : i32, i32, i32
  }
  func.func @transform_9(%arg0: i32) -> (i32, i32, i32) {
    %c0_i32 = arith.constant 0 : i32
    %c0_i32_0 = arith.constant 0 : i32
    %c0_i32_1 = arith.constant 0 : i32
    %c0_i32_2 = arith.constant 0 : i32
    return %c0_i32, %c0_i32_0, %c0_i32_1 : i32, i32, i32
  }
  func.func @transform_10(%arg0: i32) -> (i32, i32) {
    %c0_i32 = arith.constant 0 : i32
    %c0_i32_0 = arith.constant 0 : i32
    %c0_i32_1 = arith.constant 0 : i32
    return %c0_i32, %c0_i32_0 : i32, i32
  }
  func.func @transform_11(%arg0: i32) -> (i32, i32) {
    %c0_i32 = arith.constant 0 : i32
    %c0_i32_0 = arith.constant 0 : i32
    %c0_i32_1 = arith.constant 0 : i32
    return %c0_i32, %c0_i32_0 : i32, i32
  }
  func.func @transform_12(%arg0: i32) -> (i32, i32) {
    %c0_i32 = arith.constant 0 : i32
    %c0_i32_0 = arith.constant 0 : i32
    %c0_i32_1 = arith.constant 0 : i32
    return %c0_i32, %c0_i32_0 : i32, i32
  }
  func.func @transform_13(%arg0: i32) -> (i32, i32) {
    %c0_i32 = arith.constant 0 : i32
    %c0_i32_0 = arith.constant 0 : i32
    %c0_i32_1 = arith.constant 0 : i32
    return %c0_i32, %c0_i32_0 : i32, i32
  }
  func.func @transform_14(%arg0: i32) -> (i32, i32) {
    %c0_i32 = arith.constant 0 : i32
    %c0_i32_0 = arith.constant 0 : i32
    %c0_i32_1 = arith.constant 0 : i32
    return %c0_i32, %c0_i32_0 : i32, i32
  }
  func.func @transform_15(%arg0: i32) -> (i32, i32) {
    %c0_i32 = arith.constant 0 : i32
    %c0_i32_0 = arith.constant 0 : i32
    %c0_i32_1 = arith.constant 0 : i32
    return %c0_i32, %c0_i32_0 : i32, i32
  }
  func.func @transform_16(%arg0: i32) -> (i32, i32) {
    %c0_i32 = arith.constant 0 : i32
    %c0_i32_0 = arith.constant 0 : i32
    %c0_i32_1 = arith.constant 0 : i32
    return %c0_i32, %c0_i32_0 : i32, i32
  }
  func.func @transform_17(%arg0: i32) -> (i32, i32) {
    %c0_i32 = arith.constant 0 : i32
    %c0_i32_0 = arith.constant 0 : i32
    %c0_i32_1 = arith.constant 0 : i32
    return %c0_i32, %c0_i32_0 : i32, i32
  }
  func.func @transform_18(%arg0: i32) -> (i32, i32) {
    %c0_i32 = arith.constant 0 : i32
    %c0_i32_0 = arith.constant 0 : i32
    %c0_i32_1 = arith.constant 0 : i32
    return %c0_i32, %c0_i32_0 : i32, i32
  }
  func.func @transform_19(%arg0: i32) -> (i32, i32) {
    %c0_i32 = arith.constant 0 : i32
    %c0_i32_0 = arith.constant 0 : i32
    %c0_i32_1 = arith.constant 0 : i32
    return %c0_i32, %c0_i32_0 : i32, i32
  }
  func.func @transform_20(%arg0: i32) -> (i32, i32) {
    %c0_i32 = arith.constant 0 : i32
    %c0_i32_0 = arith.constant 0 : i32
    %c0_i32_1 = arith.constant 0 : i32
    return %c0_i32, %c0_i32_0 : i32, i32
  }
  func.func @transform_21(%arg0: i32) -> (i32, i32) {
    %c0_i32 = arith.constant 0 : i32
    %c0_i32_0 = arith.constant 0 : i32
    %c0_i32_1 = arith.constant 0 : i32
    return %c0_i32, %c0_i32_0 : i32, i32
  }
  func.func @transform_22(%arg0: i32) -> (i32, i32) {
    %c0_i32 = arith.constant 0 : i32
    %c0_i32_0 = arith.constant 0 : i32
    %c0_i32_1 = arith.constant 0 : i32
    return %c0_i32, %c0_i32_0 : i32, i32
  }
  func.func @transform_23(%arg0: i32) -> (i32, i32) {
    %c0_i32 = arith.constant 0 : i32
    %c0_i32_0 = arith.constant 0 : i32
    %c0_i32_1 = arith.constant 0 : i32
    return %c0_i32, %c0_i32_0 : i32, i32
  }
  func.func @transform_24(%arg0: i32) -> (i32, i32) {
    %c0_i32 = arith.constant 0 : i32
    %c0_i32_0 = arith.constant 0 : i32
    %c0_i32_1 = arith.constant 0 : i32
    return %c0_i32, %c0_i32_0 : i32, i32
  }
  func.func @transform_25(%arg0: i32) -> (i32, i32) {
    %c0_i32 = arith.constant 0 : i32
    %c0_i32_0 = arith.constant 0 : i32
    %c0_i32_1 = arith.constant 0 : i32
    return %c0_i32, %c0_i32_0 : i32, i32
  }
  func.func @transform_26(%arg0: i32) -> (i32, i32) {
    %c0_i32 = arith.constant 0 : i32
    %c0_i32_0 = arith.constant 0 : i32
    %c0_i32_1 = arith.constant 0 : i32
    return %c0_i32, %c0_i32_0 : i32, i32
  }
  func.func @transform_27(%arg0: i32) -> (i32, i32) {
    %c0_i32 = arith.constant 0 : i32
    %c0_i32_0 = arith.constant 0 : i32
    %c0_i32_1 = arith.constant 0 : i32
    return %c0_i32, %c0_i32_0 : i32, i32
  }
  func.func @transform_28(%arg0: i32) -> (i32, i32, i32) {
    %c0_i32 = arith.constant 0 : i32
    %c0_i32_0 = arith.constant 0 : i32
    %c0_i32_1 = arith.constant 0 : i32
    return %arg0, %c0_i32, %c0_i32_0 : i32, i32, i32
  }
}

</mosaic_0001>

<llo_original>
// kernel: residule_conv_v2_forward.1
$region0: #{residule_conv_v2_forward.1}
  #allocation0 [shape = 'u32[]', space=smem, size = 0x4, offset = 0x4, fixed_abs, tag = 'smem constant byte address 0x4 - core index']
  #allocation1 [shape = 'u32[72,128]{1,0:T(1,128)}', space=vmem, size = 0x9000, scoped, tag = 'internal scratch']
  %s0 = inlined_call_operand.vmem [shape: bf16[2,64,512], index: 0, kind: input, shape index: {}]
  %s1 = inlined_call_operand.vmem [shape: f32[2,256,128], index: 1, kind: input, shape index: {}]
  %s2 = inlined_call_operand.vmem [shape: bf16[512,128], index: 2, kind: input, shape index: {}]
  %s3 = inlined_call_operand.vmem [shape: f32[1,128], index: 3, kind: input, shape index: {}]
  %s4 = inlined_call_operand.vmem [shape: f32[1,128], index: 4, kind: input, shape index: {}]
  %s5 = inlined_call_operand.vmem [shape: f32[9,64,1], index: 5, kind: input, shape index: {}]
  %s6 = inlined_call_operand.vmem [shape: bf16[16,64], index: 6, kind: input, shape index: {}]
  %s7 = inlined_call_operand.vmem [shape: f32[9,16,1], index: 7, kind: input, shape index: {}]
  %s8 = inlined_call_operand.vmem [shape: bf16[4,256,16], index: 8, kind: input, shape index: {}]
  %s9 = inlined_call_operand.vmem [shape: f32[4,256,128], index: 9, kind: input, shape index: {}]
  %s10 = inlined_call_operand.vmem [shape: f32[1,128], index: 10, kind: input, shape index: {}]
  %s11 = inlined_call_operand.vmem [shape: bf16[128,128], index: 11, kind: input, shape index: {}]
  %s12 = inlined_call_operand.vmem [shape: f32[1,128], index: 12, kind: input, shape index: {}]
  %s13 = inlined_call_operand.vmem [shape: bf16[128,128], index: 13, kind: input, shape index: {}]
  %s14 = inlined_call_operand.vmem [shape: f32[1,128], index: 14, kind: input, shape index: {}]
  %s15 = inlined_call_operand.vmem [shape: f32[1,128], index: 15, kind: input, shape index: {}]
  %s16 = inlined_call_operand.vmem [shape: bf16[256,128], index: 16, kind: input, shape index: {}]
  %s17 = inlined_call_operand.vmem [shape: f32[1,128], index: 17, kind: input, shape index: {}]
  %s18 = inlined_call_operand.vmem [shape: f32[1,128], index: 18, kind: input, shape index: {}]
  %s19 = inlined_call_operand.vmem [shape: bf16[128,128], index: 19, kind: input, shape index: {}]
  %s20 = inlined_call_operand.vmem [shape: f32[1,128], index: 20, kind: input, shape index: {}]
  %s21 = inlined_call_operand.vmem [shape: f32[1,128], index: 21, kind: input, shape index: {}]
  %s22 = inlined_call_operand.vmem [shape: bf16[256,128], index: 22, kind: input, shape index: {}]
  %s23 = inlined_call_operand.vmem [shape: f32[1,128], index: 23, kind: input, shape index: {}]
  %s24 = inlined_call_operand.vmem [shape: f32[1,128], index: 24, kind: input, shape index: {}]
  %s25 = inlined_call_operand.vmem [shape: bf16[256,128], index: 25, kind: input, shape index: {}]
  %s26 = inlined_call_operand.vmem [shape: f32[1,128], index: 26, kind: input, shape index: {}]
  %s27 = inlined_call_operand.vmem [shape: f32[1,128], index: 27, kind: input, shape index: {}]
  %s28 = inlined_call_operand.vmem [shape: f32[2,256,128], index: 28, kind: output, shape index: {}]
  %s29 = sld [smem:[#allocation0]]
  $region145: #{residule_conv_v2_forward.1} parent=0
    _
  %s31 = ssub.s32 1, %s29
  %s32 = scalar_select 0, %s31, %s29
  loop: start=0, step=1, limit=4
  $region2: #{residule_conv_v2_forward.1} parent=0 // loop_pre_header
    _
  $region3: #{residule_conv_v2_forward.1} parent=0 // loop_header
    %s34 = sphi 0, %s38
    %p35 = scmp.ge.s32.totalorder %s34, 4
    %s44 = sphi 0, %s46
    %s47 = sphi 0, %s44
    %s48 = sphi 0, %s47
    %s64 = sphi 0, %s48
    %s70 = sphi 0, %s72
    %s73 = sphi 0, %s70
    %s74 = sphi 0, %s73
    %s90 = sphi 0, %s74
    %s94 = sphi 0, %s94
    %s96 = sphi 0, %s94
    %s97 = sphi 0, %s96
    %s111 = sphi 0, %s97
    %s115 = sphi 0, %s115
    %s117 = sphi 0, %s115
    %s118 = sphi 0, %s117
    %s132 = sphi 0, %s118
    %s136 = sphi 0, %s136
    %s138 = sphi 0, %s136
    %s139 = sphi 0, %s138
    %s153 = sphi 0, %s139
    %s157 = sphi 0, %s157
    %s159 = sphi 0, %s157
    %s160 = sphi 0, %s159
    %s174 = sphi 0, %s160
    %s178 = sphi 0, %s178
    %s180 = sphi 0, %s178
    %s181 = sphi 0, %s180
    %s195 = sphi 0, %s181
    %s199 = sphi 0, %s199
    %s201 = sphi 0, %s199
    %s202 = sphi 0, %s201
    %s216 = sphi 0, %s202
    %s220 = sphi 0, %s220
    %s222 = sphi 0, %s220
    %s223 = sphi 0, %s222
    %s237 = sphi 0, %s223
    %s241 = sphi 0, %s241
    %s243 = sphi 0, %s241
    %s244 = sphi 0, %s243
    %s258 = sphi 0, %s244
    %s262 = sphi 0, %s262
    %s264 = sphi 0, %s262
    %s265 = sphi 0, %s264
    %s279 = sphi 0, %s265
    %s283 = sphi 0, %s283
    %s285 = sphi 0, %s283
    %s286 = sphi 0, %s285
    %s300 = sphi 0, %s286
    %s304 = sphi 0, %s304
    %s306 = sphi 0, %s304
    %s307 = sphi 0, %s306
    %s321 = sphi 0, %s307
    %s325 = sphi 0, %s325
    %s327 = sphi 0, %s325
    %s328 = sphi 0, %s327
    %s342 = sphi 0, %s328
    %s346 = sphi 0, %s346
    %s348 = sphi 0, %s346
    %s349 = sphi 0, %s348
    %s363 = sphi 0, %s349
    %s367 = sphi 0, %s367
    %s369 = sphi 0, %s367
    %s370 = sphi 0, %s369
    %s384 = sphi 0, %s370
    %s388 = sphi 0, %s388
    %s390 = sphi 0, %s388
    %s391 = sphi 0, %s390
    %s405 = sphi 0, %s391
    %s409 = sphi 0, %s409
    %s411 = sphi 0, %s409
    %s412 = sphi 0, %s411
    %s426 = sphi 0, %s412
    %s430 = sphi 0, %s430
    %s432 = sphi 0, %s430
    %s433 = sphi 0, %s432
    %s447 = sphi 0, %s433
    %s451 = sphi 0, %s451
    %s453 = sphi 0, %s451
    %s454 = sphi 0, %s453
    %s468 = sphi 0, %s454
    %s472 = sphi 0, %s472
    %s474 = sphi 0, %s472
    %s475 = sphi 0, %s474
    %s489 = sphi 0, %s475
    %s493 = sphi 0, %s493
    %s495 = sphi 0, %s493
    %s496 = sphi 0, %s495
    %s510 = sphi 0, %s496
    %s514 = sphi 0, %s514
    %s516 = sphi 0, %s514
    %s517 = sphi 0, %s516
    %s531 = sphi 0, %s517
    %s535 = sphi 0, %s535
    %s537 = sphi 0, %s535
    %s538 = sphi 0, %s537
    %s552 = sphi 0, %s538
    %s556 = sphi 0, %s556
    %s558 = sphi 0, %s556
    %s559 = sphi 0, %s558
    %s573 = sphi 0, %s559
    %s577 = sphi 0, %s577
    %s579 = sphi 0, %s577
    %s580 = sphi 0, %s579
    %s594 = sphi 0, %s580
    %s598 = sphi 0, %s598
    %s600 = sphi 0, %s598
    %s601 = sphi 0, %s600
    %s615 = sphi 0, %s601
    %s619 = sphi 0, %s619
    %s621 = sphi 0, %s619
    %s622 = sphi 0, %s621
    %s636 = sphi 0, %s622
    %s642 = sphi 0, %s644
    %s645 = sphi 0, %s642
    %s646 = sphi 0, %s645
    %s662 = sphi 0, %s646
  $region4: #{residule_conv_v2_forward.1} parent=0 // loop_header_branch
    %37 = sbr.rel (%p35) target = $region8
  $region5: #{residule_conv_v2_forward.1} parent=0 // loop_body
    %s39 = ssub.s32 %s34, 1
    %s40 = ssub.s32 %s34, 2
    %s41 = sadd.s32 %s34, 1
    %s42 = ssub.s32 %s34, %s41
    %p43 = scmp.eq.s32.totalorder %s42, 0
    %s45 = sadd.s32 %s44, 1
    %s46 = scalar_select %p43, %s44, %s45
    %p49 = pneg %p43
    %p50 = scmp.eq.s32.totalorder %s34, 1
    %p51 = por %p49, %p50
    %p52 = scmp.ne.s32.totalorder %s44, %s47
    %p53 = scmp.eq.s32.totalorder %s34, 0
    %p54 = por %p52, %p53
    %p55 = scmp.ne.s32.totalorder %s44, %s47
    %p56 = scmp.eq.s32.totalorder %s39, 1
    %p57 = por %p55, %p56
    %p58 = scmp.ne.s32.totalorder %s47, %s48
    %p59 = scmp.eq.s32.totalorder %s39, 0
    %p60 = por %p58, %p59
    %p61 = scmp.ne.s32.totalorder %s47, %s48
    %p62 = scmp.eq.s32.totalorder %s40, 1
    %p63 = por %p61, %p62
    %p65 = scmp.ne.s32.totalorder %s48, %s64
    %p66 = scmp.eq.s32.totalorder %s40, 0
    %p67 = por %p65, %p66
    %s68 = ssub.s32 %s34, %s41
    %p69 = scmp.eq.s32.totalorder %s68, 0
    %s71 = sadd.s32 %s70, 1
    %s72 = scalar_select %p69, %s70, %s71
    %p75 = pneg %p69
    %p76 = scmp.eq.s32.totalorder %s34, 1
    %p77 = por %p75, %p76
    %p78 = scmp.ne.s32.totalorder %s70, %s73
    %p79 = scmp.eq.s32.totalorder %s34, 0
    %p80 = por %p78, %p79
    %p81 = scmp.ne.s32.totalorder %s70, %s73
    %p82 = scmp.eq.s32.totalorder %s39, 1
    %p83 = por %p81, %p82
    %p84 = scmp.ne.s32.totalorder %s73, %s74
    %p85 = scmp.eq.s32.totalorder %s39, 0
    %p86 = por %p84, %p85
    %p87 = scmp.ne.s32.totalorder %s73, %s74
    %p88 = scmp.eq.s32.totalorder %s40, 1
    %p89 = por %p87, %p88
    %p91 = scmp.ne.s32.totalorder %s74, %s90
    %p92 = scmp.eq.s32.totalorder %s40, 0
    %p93 = por %p91, %p92
    %s95 = sadd.s32 %s94, 1
    %p98 = scmp.eq.s32.totalorder %s34, 1
    %p99 = scmp.ne.s32.totalorder %s94, %s96
    %p100 = scmp.eq.s32.totalorder %s34, 0
    %p101 = por %p99, %p100
    %p102 = scmp.ne.s32.totalorder %s94, %s96
    %p103 = scmp.eq.s32.totalorder %s39, 1
    %p104 = por %p102, %p103
    %p105 = scmp.ne.s32.totalorder %s96, %s97
    %p106 = scmp.eq.s32.totalorder %s39, 0
    %p107 = por %p105, %p106
    %p108 = scmp.ne.s32.totalorder %s96, %s97
    %p109 = scmp.eq.s32.totalorder %s40, 1
    %p110 = por %p108, %p109
    %p112 = scmp.ne.s32.totalorder %s97, %s111
    %p113 = scmp.eq.s32.totalorder %s40, 0
    %p114 = por %p112, %p113
    %s116 = sadd.s32 %s115, 1
    %p119 = scmp.eq.s32.totalorder %s34, 1
    %p120 = scmp.ne.s32.totalorder %s115, %s117
    %p121 = scmp.eq.s32.totalorder %s34, 0
    %p122 = por %p120, %p121
    %p123 = scmp.ne.s32.totalorder %s115, %s117
    %p124 = scmp.eq.s32.totalorder %s39, 1
    %p125 = por %p123, %p124
    %p126 = scmp.ne.s32.totalorder %s117, %s118
    %p127 = scmp.eq.s32.totalorder %s39, 0
    %p128 = por %p126, %p127
    %p129 = scmp.ne.s32.totalorder %s117, %s118
    %p130 = scmp.eq.s32.totalorder %s40, 1
    %p131 = por %p129, %p130
    %p133 = scmp.ne.s32.totalorder %s118, %s132
    %p134 = scmp.eq.s32.totalorder %s40, 0
    %p135 = por %p133, %p134
    %s137 = sadd.s32 %s136, 1
    %p140 = scmp.eq.s32.totalorder %s34, 1
    %p141 = scmp.ne.s32.totalorder %s136, %s138
    %p142 = scmp.eq.s32.totalorder %s34, 0
    %p143 = por %p141, %p142
    %p144 = scmp.ne.s32.totalorder %s136, %s138
    %p145 = scmp.eq.s32.totalorder %s39, 1
    %p146 = por %p144, %p145
    %p147 = scmp.ne.s32.totalorder %s138, %s139
    %p148 = scmp.eq.s32.totalorder %s39, 0
    %p149 = por %p147, %p148
    %p150 = scmp.ne.s32.totalorder %s138, %s139
    %p151 = scmp.eq.s32.totalorder %s40, 1
    %p152 = por %p150, %p151
    %p154 = scmp.ne.s32.totalorder %s139, %s153
    %p155 = scmp.eq.s32.totalorder %s40, 0
    %p156 = por %p154, %p155
    %s158 = sadd.s32 %s157, 1
    %p161 = scmp.eq.s32.totalorder %s34, 1
    %p162 = scmp.ne.s32.totalorder %s157, %s159
    %p163 = scmp.eq.s32.totalorder %s34, 0
    %p164 = por %p162, %p163
    %p165 = scmp.ne.s32.totalorder %s157, %s159
    %p166 = scmp.eq.s32.totalorder %s39, 1
    %p167 = por %p165, %p166
    %p168 = scmp.ne.s32.totalorder %s159, %s160
    %p169 = scmp.eq.s32.totalorder %s39, 0
    %p170 = por %p168, %p169
    %p171 = scmp.ne.s32.totalorder %s159, %s160
    %p172 = scmp.eq.s32.totalorder %s40, 1
    %p173 = por %p171, %p172
    %p175 = scmp.ne.s32.totalorder %s160, %s174
    %p176 = scmp.eq.s32.totalorder %s40, 0
    %p177 = por %p175, %p176
    %s179 = sadd.s32 %s178, 1
    %p182 = scmp.eq.s32.totalorder %s34, 1
    %p183 = scmp.ne.s32.totalorder %s178, %s180
    %p184 = scmp.eq.s32.totalorder %s34, 0
    %p185 = por %p183, %p184
    %p186 = scmp.ne.s32.totalorder %s178, %s180
    %p187 = scmp.eq.s32.totalorder %s39, 1
    %p188 = por %p186, %p187
    %p189 = scmp.ne.s32.totalorder %s180, %s181
    %p190 = scmp.eq.s32.totalorder %s39, 0
    %p191 = por %p189, %p190
    %p192 = scmp.ne.s32.totalorder %s180, %s181
    %p193 = scmp.eq.s32.totalorder %s40, 1
    %p194 = por %p192, %p193
    %p196 = scmp.ne.s32.totalorder %s181, %s195
    %p197 = scmp.eq.s32.totalorder %s40, 0
    %p198 = por %p196, %p197
    %s200 = sadd.s32 %s199, 1
    %p203 = scmp.eq.s32.totalorder %s34, 1
    %p204 = scmp.ne.s32.totalorder %s199, %s201
    %p205 = scmp.eq.s32.totalorder %s34, 0
    %p206 = por %p204, %p205
    %p207 = scmp.ne.s32.totalorder %s199, %s201
    %p208 = scmp.eq.s32.totalorder %s39, 1
    %p209 = por %p207, %p208
    %p210 = scmp.ne.s32.totalorder %s201, %s202
    %p211 = scmp.eq.s32.totalorder %s39, 0
    %p212 = por %p210, %p211
    %p213 = scmp.ne.s32.totalorder %s201, %s202
    %p214 = scmp.eq.s32.totalorder %s40, 1
    %p215 = por %p213, %p214
    %p217 = scmp.ne.s32.totalorder %s202, %s216
    %p218 = scmp.eq.s32.totalorder %s40, 0
    %p219 = por %p217, %p218
    %s221 = sadd.s32 %s220, 1
    %p224 = scmp.eq.s32.totalorder %s34, 1
    %p225 = scmp.ne.s32.totalorder %s220, %s222
    %p226 = scmp.eq.s32.totalorder %s34, 0
    %p227 = por %p225, %p226
    %p228 = scmp.ne.s32.totalorder %s220, %s222
    %p229 = scmp.eq.s32.totalorder %s39, 1
    %p230 = por %p228, %p229
    %p231 = scmp.ne.s32.totalorder %s222, %s223
    %p232 = scmp.eq.s32.totalorder %s39, 0
    %p233 = por %p231, %p232
    %p234 = scmp.ne.s32.totalorder %s222, %s223
    %p235 = scmp.eq.s32.totalorder %s40, 1
    %p236 = por %p234, %p235
    %p238 = scmp.ne.s32.totalorder %s223, %s237
    %p239 = scmp.eq.s32.totalorder %s40, 0
    %p240 = por %p238, %p239
    %s242 = sadd.s32 %s241, 1
    %p245 = scmp.eq.s32.totalorder %s34, 1
    %p246 = scmp.ne.s32.totalorder %s241, %s243
    %p247 = scmp.eq.s32.totalorder %s34, 0
    %p248 = por %p246, %p247
    %p249 = scmp.ne.s32.totalorder %s241, %s243
    %p250 = scmp.eq.s32.totalorder %s39, 1
    %p251 = por %p249, %p250
    %p252 = scmp.ne.s32.totalorder %s243, %s244
    %p253 = scmp.eq.s32.totalorder %s39, 0
    %p254 = por %p252, %p253
    %p255 = scmp.ne.s32.totalorder %s243, %s244
    %p256 = scmp.eq.s32.totalorder %s40, 1
    %p257 = por %p255, %p256
    %p259 = scmp.ne.s32.totalorder %s244, %s258
    %p260 = scmp.eq.s32.totalorder %s40, 0
    %p261 = por %p259, %p260
    %s263 = sadd.s32 %s262, 1
    %p266 = scmp.eq.s32.totalorder %s34, 1
    %p267 = scmp.ne.s32.totalorder %s262, %s264
    %p268 = scmp.eq.s32.totalorder %s34, 0
    %p269 = por %p267, %p268
    %p270 = scmp.ne.s32.totalorder %s262, %s264
    %p271 = scmp.eq.s32.totalorder %s39, 1
    %p272 = por %p270, %p271
    %p273 = scmp.ne.s32.totalorder %s264, %s265
    %p274 = scmp.eq.s32.totalorder %s39, 0
    %p275 = por %p273, %p274
    %p276 = scmp.ne.s32.totalorder %s264, %s265
    %p277 = scmp.eq.s32.totalorder %s40, 1
    %p278 = por %p276, %p277
    %p280 = scmp.ne.s32.totalorder %s265, %s279
    %p281 = scmp.eq.s32.totalorder %s40, 0
    %p282 = por %p280, %p281
    %s284 = sadd.s32 %s283, 1
    %p287 = scmp.eq.s32.totalorder %s34, 1
    %p288 = scmp.ne.s32.totalorder %s283, %s285
    %p289 = scmp.eq.s32.totalorder %s34, 0
    %p290 = por %p288, %p289
    %p291 = scmp.ne.s32.totalorder %s283, %s285
    %p292 = scmp.eq.s32.totalorder %s39, 1
    %p293 = por %p291, %p292
    %p294 = scmp.ne.s32.totalorder %s285, %s286
    %p295 = scmp.eq.s32.totalorder %s39, 0
    %p296 = por %p294, %p295
    %p297 = scmp.ne.s32.totalorder %s285, %s286
    %p298 = scmp.eq.s32.totalorder %s40, 1
    %p299 = por %p297, %p298
    %p301 = scmp.ne.s32.totalorder %s286, %s300
    %p302 = scmp.eq.s32.totalorder %s40, 0
    %p303 = por %p301, %p302
    %s305 = sadd.s32 %s304, 1
    %p308 = scmp.eq.s32.totalorder %s34, 1
    %p309 = scmp.ne.s32.totalorder %s304, %s306
    %p310 = scmp.eq.s32.totalorder %s34, 0
    %p311 = por %p309, %p310
    %p312 = scmp.ne.s32.totalorder %s304, %s306
    %p313 = scmp.eq.s32.totalorder %s39, 1
    %p314 = por %p312, %p313
    %p315 = scmp.ne.s32.totalorder %s306, %s307
    %p316 = scmp.eq.s32.totalorder %s39, 0
    %p317 = por %p315, %p316
    %p318 = scmp.ne.s32.totalorder %s306, %s307
    %p319 = scmp.eq.s32.totalorder %s40, 1
    %p320 = por %p318, %p319
    %p322 = scmp.ne.s32.totalorder %s307, %s321
    %p323 = scmp.eq.s32.totalorder %s40, 0
    %p324 = por %p322, %p323
    %s326 = sadd.s32 %s325, 1
    %p329 = scmp.eq.s32.totalorder %s34, 1
    %p330 = scmp.ne.s32.totalorder %s325, %s327
    %p331 = scmp.eq.s32.totalorder %s34, 0
    %p332 = por %p330, %p331
    %p333 = scmp.ne.s32.totalorder %s325, %s327
    %p334 = scmp.eq.s32.totalorder %s39, 1
    %p335 = por %p333, %p334
    %p336 = scmp.ne.s32.totalorder %s327, %s328
    %p337 = scmp.eq.s32.totalorder %s39, 0
    %p338 = por %p336, %p337
    %p339 = scmp.ne.s32.totalorder %s327, %s328
    %p340 = scmp.eq.s32.totalorder %s40, 1
    %p341 = por %p339, %p340
    %p343 = scmp.ne.s32.totalorder %s328, %s342
    %p344 = scmp.eq.s32.totalorder %s40, 0
    %p345 = por %p343, %p344
    %s347 = sadd.s32 %s346, 1
    %p350 = scmp.eq.s32.totalorder %s34, 1
    %p351 = scmp.ne.s32.totalorder %s346, %s348
    %p352 = scmp.eq.s32.totalorder %s34, 0
    %p353 = por %p351, %p352
    %p354 = scmp.ne.s32.totalorder %s346, %s348
    %p355 = scmp.eq.s32.totalorder %s39, 1
    %p356 = por %p354, %p355
    %p357 = scmp.ne.s32.totalorder %s348, %s349
    %p358 = scmp.eq.s32.totalorder %s39, 0
    %p359 = por %p357, %p358
    %p360 = scmp.ne.s32.totalorder %s348, %s349
    %p361 = scmp.eq.s32.totalorder %s40, 1
    %p362 = por %p360, %p361
    %p364 = scmp.ne.s32.totalorder %s349, %s363
    %p365 = scmp.eq.s32.totalorder %s40, 0
    %p366 = por %p364, %p365
    %s368 = sadd.s32 %s367, 1
    %p371 = scmp.eq.s32.totalorder %s34, 1
    %p372 = scmp.ne.s32.totalorder %s367, %s369
    %p373 = scmp.eq.s32.totalorder %s34, 0
    %p374 = por %p372, %p373
    %p375 = scmp.ne.s32.totalorder %s367, %s369
    %p376 = scmp.eq.s32.totalorder %s39, 1
    %p377 = por %p375, %p376
    %p378 = scmp.ne.s32.totalorder %s369, %s370
    %p379 = scmp.eq.s32.totalorder %s39, 0
    %p380 = por %p378, %p379
    %p381 = scmp.ne.s32.totalorder %s369, %s370
    %p382 = scmp.eq.s32.totalorder %s40, 1
    %p383 = por %p381, %p382
    %p385 = scmp.ne.s32.totalorder %s370, %s384
    %p386 = scmp.eq.s32.totalorder %s40, 0
    %p387 = por %p385, %p386
    %s389 = sadd.s32 %s388, 1
    %p392 = scmp.eq.s32.totalorder %s34, 1
    %p393 = scmp.ne.s32.totalorder %s388, %s390
    %p394 = scmp.eq.s32.totalorder %s34, 0
    %p395 = por %p393, %p394
    %p396 = scmp.ne.s32.totalorder %s388, %s390
    %p397 = scmp.eq.s32.totalorder %s39, 1
    %p398 = por %p396, %p397
    %p399 = scmp.ne.s32.totalorder %s390, %s391
    %p400 = scmp.eq.s32.totalorder %s39, 0
    %p401 = por %p399, %p400
    %p402 = scmp.ne.s32.totalorder %s390, %s391
    %p403 = scmp.eq.s32.totalorder %s40, 1
    %p404 = por %p402, %p403
    %p406 = scmp.ne.s32.totalorder %s391, %s405
    %p407 = scmp.eq.s32.totalorder %s40, 0
    %p408 = por %p406, %p407
    %s410 = sadd.s32 %s409, 1
    %p413 = scmp.eq.s32.totalorder %s34, 1
    %p414 = scmp.ne.s32.totalorder %s409, %s411
    %p415 = scmp.eq.s32.totalorder %s34, 0
    %p416 = por %p414, %p415
    %p417 = scmp.ne.s32.totalorder %s409, %s411
    %p418 = scmp.eq.s32.totalorder %s39, 1
    %p419 = por %p417, %p418
    %p420 = scmp.ne.s32.totalorder %s411, %s412
    %p421 = scmp.eq.s32.totalorder %s39, 0
    %p422 = por %p420, %p421
    %p423 = scmp.ne.s32.totalorder %s411, %s412
    %p424 = scmp.eq.s32.totalorder %s40, 1
    %p425 = por %p423, %p424
    %p427 = scmp.ne.s32.totalorder %s412, %s426
    %p428 = scmp.eq.s32.totalorder %s40, 0
    %p429 = por %p427, %p428
    %s431 = sadd.s32 %s430, 1
    %p434 = scmp.eq.s32.totalorder %s34, 1
    %p435 = scmp.ne.s32.totalorder %s430, %s432
    %p436 = scmp.eq.s32.totalorder %s34, 0
    %p437 = por %p435, %p436
    %p438 = scmp.ne.s32.totalorder %s430, %s432
    %p439 = scmp.eq.s32.totalorder %s39, 1
    %p440 = por %p438, %p439
    %p441 = scmp.ne.s32.totalorder %s432, %s433
    %p442 = scmp.eq.s32.totalorder %s39, 0
    %p443 = por %p441, %p442
    %p444 = scmp.ne.s32.totalorder %s432, %s433
    %p445 = scmp.eq.s32.totalorder %s40, 1
    %p446 = por %p444, %p445
    %p448 = scmp.ne.s32.totalorder %s433, %s447
    %p449 = scmp.eq.s32.totalorder %s40, 0
    %p450 = por %p448, %p449
    %s452 = sadd.s32 %s451, 1
    %p455 = scmp.eq.s32.totalorder %s34, 1
    %p456 = scmp.ne.s32.totalorder %s451, %s453
    %p457 = scmp.eq.s32.totalorder %s34, 0
    %p458 = por %p456, %p457
    %p459 = scmp.ne.s32.totalorder %s451, %s453
    %p460 = scmp.eq.s32.totalorder %s39, 1
    %p461 = por %p459, %p460
    %p462 = scmp.ne.s32.totalorder %s453, %s454
    %p463 = scmp.eq.s32.totalorder %s39, 0
    %p464 = por %p462, %p463
    %p465 = scmp.ne.s32.totalorder %s453, %s454
    %p466 = scmp.eq.s32.totalorder %s40, 1
    %p467 = por %p465, %p466
    %p469 = scmp.ne.s32.totalorder %s454, %s468
    %p470 = scmp.eq.s32.totalorder %s40, 0
    %p471 = por %p469, %p470
    %s473 = sadd.s32 %s472, 1
    %p476 = scmp.eq.s32.totalorder %s34, 1
    %p477 = scmp.ne.s32.totalorder %s472, %s474
    %p478 = scmp.eq.s32.totalorder %s34, 0
    %p479 = por %p477, %p478
    %p480 = scmp.ne.s32.totalorder %s472, %s474
    %p481 = scmp.eq.s32.totalorder %s39, 1
    %p482 = por %p480, %p481
    %p483 = scmp.ne.s32.totalorder %s474, %s475
    %p484 = scmp.eq.s32.totalorder %s39, 0
    %p485 = por %p483, %p484
    %p486 = scmp.ne.s32.totalorder %s474, %s475
    %p487 = scmp.eq.s32.totalorder %s40, 1
    %p488 = por %p486, %p487
    %p490 = scmp.ne.s32.totalorder %s475, %s489
    %p491 = scmp.eq.s32.totalorder %s40, 0
    %p492 = por %p490, %p491
    %s494 = sadd.s32 %s493, 1
    %p497 = scmp.eq.s32.totalorder %s34, 1
    %p498 = scmp.ne.s32.totalorder %s493, %s495
    %p499 = scmp.eq.s32.totalorder %s34, 0
    %p500 = por %p498, %p499
    %p501 = scmp.ne.s32.totalorder %s493, %s495
    %p502 = scmp.eq.s32.totalorder %s39, 1
    %p503 = por %p501, %p502
    %p504 = scmp.ne.s32.totalorder %s495, %s496
    %p505 = scmp.eq.s32.totalorder %s39, 0
    %p506 = por %p504, %p505
    %p507 = scmp.ne.s32.totalorder %s495, %s496
    %p508 = scmp.eq.s32.totalorder %s40, 1
    %p509 = por %p507, %p508
    %p511 = scmp.ne.s32.totalorder %s496, %s510
    %p512 = scmp.eq.s32.totalorder %s40, 0
    %p513 = por %p511, %p512
    %s515 = sadd.s32 %s514, 1
    %p518 = scmp.eq.s32.totalorder %s34, 1
    %p519 = scmp.ne.s32.totalorder %s514, %s516
    %p520 = scmp.eq.s32.totalorder %s34, 0
    %p521 = por %p519, %p520
    %p522 = scmp.ne.s32.totalorder %s514, %s516
    %p523 = scmp.eq.s32.totalorder %s39, 1
    %p524 = por %p522, %p523
    %p525 = scmp.ne.s32.totalorder %s516, %s517
    %p526 = scmp.eq.s32.totalorder %s39, 0
    %p527 = por %p525, %p526
    %p528 = scmp.ne.s32.totalorder %s516, %s517
    %p529 = scmp.eq.s32.totalorder %s40, 1
    %p530 = por %p528, %p529
    %p532 = scmp.ne.s32.totalorder %s517, %s531
    %p533 = scmp.eq.s32.totalorder %s40, 0
    %p534 = por %p532, %p533
    %s536 = sadd.s32 %s535, 1
    %p539 = scmp.eq.s32.totalorder %s34, 1
    %p540 = scmp.ne.s32.totalorder %s535, %s537
    %p541 = scmp.eq.s32.totalorder %s34, 0
    %p542 = por %p540, %p541
    %p543 = scmp.ne.s32.totalorder %s535, %s537
    %p544 = scmp.eq.s32.totalorder %s39, 1
    %p545 = por %p543, %p544
    %p546 = scmp.ne.s32.totalorder %s537, %s538
    %p547 = scmp.eq.s32.totalorder %s39, 0
    %p548 = por %p546, %p547
    %p549 = scmp.ne.s32.totalorder %s537, %s538
    %p550 = scmp.eq.s32.totalorder %s40, 1
    %p551 = por %p549, %p550
    %p553 = scmp.ne.s32.totalorder %s538, %s552
    %p554 = scmp.eq.s32.totalorder %s40, 0
    %p555 = por %p553, %p554
    %s557 = sadd.s32 %s556, 1
    %p560 = scmp.eq.s32.totalorder %s34, 1
    %p561 = scmp.ne.s32.totalorder %s556, %s558
    %p562 = scmp.eq.s32.totalorder %s34, 0
    %p563 = por %p561, %p562
    %p564 = scmp.ne.s32.totalorder %s556, %s558
    %p565 = scmp.eq.s32.totalorder %s39, 1
    %p566 = por %p564, %p565
    %p567 = scmp.ne.s32.totalorder %s558, %s559
    %p568 = scmp.eq.s32.totalorder %s39, 0
    %p569 = por %p567, %p568
    %p570 = scmp.ne.s32.totalorder %s558, %s559
    %p571 = scmp.eq.s32.totalorder %s40, 1
    %p572 = por %p570, %p571
    %p574 = scmp.ne.s32.totalorder %s559, %s573
    %p575 = scmp.eq.s32.totalorder %s40, 0
    %p576 = por %p574, %p575
    %s578 = sadd.s32 %s577, 1
    %p581 = scmp.eq.s32.totalorder %s34, 1
    %p582 = scmp.ne.s32.totalorder %s577, %s579
    %p583 = scmp.eq.s32.totalorder %s34, 0
    %p584 = por %p582, %p583
    %p585 = scmp.ne.s32.totalorder %s577, %s579
    %p586 = scmp.eq.s32.totalorder %s39, 1
    %p587 = por %p585, %p586
    %p588 = scmp.ne.s32.totalorder %s579, %s580
    %p589 = scmp.eq.s32.totalorder %s39, 0
    %p590 = por %p588, %p589
    %p591 = scmp.ne.s32.totalorder %s579, %s580
    %p592 = scmp.eq.s32.totalorder %s40, 1
    %p593 = por %p591, %p592
    %p595 = scmp.ne.s32.totalorder %s580, %s594
    %p596 = scmp.eq.s32.totalorder %s40, 0
    %p597 = por %p595, %p596
    %s599 = sadd.s32 %s598, 1
    %p602 = scmp.eq.s32.totalorder %s34, 1
    %p603 = scmp.ne.s32.totalorder %s598, %s600
    %p604 = scmp.eq.s32.totalorder %s34, 0
    %p605 = por %p603, %p604
    %p606 = scmp.ne.s32.totalorder %s598, %s600
    %p607 = scmp.eq.s32.totalorder %s39, 1
    %p608 = por %p606, %p607
    %p609 = scmp.ne.s32.totalorder %s600, %s601
    %p610 = scmp.eq.s32.totalorder %s39, 0
    %p611 = por %p609, %p610
    %p612 = scmp.ne.s32.totalorder %s600, %s601
    %p613 = scmp.eq.s32.totalorder %s40, 1
    %p614 = por %p612, %p613
    %p616 = scmp.ne.s32.totalorder %s601, %s615
    %p617 = scmp.eq.s32.totalorder %s40, 0
    %p618 = por %p616, %p617
    %s620 = sadd.s32 %s619, 1
    %p623 = scmp.eq.s32.totalorder %s34, 1
    %p624 = scmp.ne.s32.totalorder %s619, %s621
    %p625 = scmp.eq.s32.totalorder %s34, 0
    %p626 = por %p624, %p625
    %p627 = scmp.ne.s32.totalorder %s619, %s621
    %p628 = scmp.eq.s32.totalorder %s39, 1
    %p629 = por %p627, %p628
    %p630 = scmp.ne.s32.totalorder %s621, %s622
    %p631 = scmp.eq.s32.totalorder %s39, 0
    %p632 = por %p630, %p631
    %p633 = scmp.ne.s32.totalorder %s621, %s622
    %p634 = scmp.eq.s32.totalorder %s40, 1
    %p635 = por %p633, %p634
    %p637 = scmp.ne.s32.totalorder %s622, %s636
    %p638 = scmp.eq.s32.totalorder %s40, 0
    %p639 = por %p637, %p638
    %s640 = ssub.s32 %s34, %s41
    %p641 = scmp.eq.s32.totalorder %s640, 0
    %s643 = sadd.s32 %s642, 1
    %s644 = scalar_select %p641, %s642, %s643
    %p647 = pneg %p641
    %p648 = scmp.eq.s32.totalorder %s34, 1
    %p649 = por %p647, %p648
    %p650 = scmp.ne.s32.totalorder %s642, %s645
    %p651 = scmp.eq.s32.totalorder %s34, 0
    %p652 = por %p650, %p651
    %p653 = scmp.ne.s32.totalorder %s642, %s645
    %p654 = scmp.eq.s32.totalorder %s39, 1
    %p655 = por %p653, %p654
    %p656 = scmp.ne.s32.totalorder %s645, %s646
    %p657 = scmp.eq.s32.totalorder %s39, 0
    %p658 = por %p656, %p657
    %p659 = scmp.ne.s32.totalorder %s645, %s646
    %p660 = scmp.eq.s32.totalorder %s40, 1
    %p661 = por %p659, %p660
    %p663 = scmp.ne.s32.totalorder %s646, %s662
    %p664 = scmp.eq.s32.totalorder %s40, 0
    %p665 = por %p663, %p664
    %p666 = scmp.le.s32.totalorder 1, %s34
    %p667 = scmp.lt.s32.totalorder %s34, 3
    %p668 = pnand %p666, %p667
    %p669 = pneg %p668
    // Predicated region
    $region9: #{residule_conv_v2_forward.1} parent=5 // pred_check
      _
    $region10: #{residule_conv_v2_forward.1} parent=5 // pred_check_branch
      %671 = sbr.rel (%p668) target = $region12
    $region11: #{residule_conv_v2_forward.1} parent=5 // pred_region
      %s672 = ssub.s32 %s34, 1
      // Predicated region
      $region13: #{residule_conv_v2_forward.1} parent=11 // pred_check
        %p673 = pneg %p107
      $region14: #{residule_conv_v2_forward.1} parent=11 // pred_check_branch
        %675 = sbr.rel (%p673) target = $region16
      $region15: #{residule_conv_v2_forward.1} parent=11 // pred_region
        _
      $region16: #{residule_conv_v2_forward.1} parent=11 // pred_fallthru
        _
      // Predicated region
      $region17: #{residule_conv_v2_forward.1} parent=11 // pred_check
        %p676 = pneg %p128
      $region18: #{residule_conv_v2_forward.1} parent=11 // pred_check_branch
        %678 = sbr.rel (%p676) target = $region20
      $region19: #{residule_conv_v2_forward.1} parent=11 // pred_region
        _
      $region20: #{residule_conv_v2_forward.1} parent=11 // pred_fallthru
        _
      // Predicated region
      $region21: #{residule_conv_v2_forward.1} parent=11 // pred_check
        %p679 = pneg %p149
      $region22: #{residule_conv_v2_forward.1} parent=11 // pred_check_branch
        %681 = sbr.rel (%p679) target = $region24
      $region23: #{residule_conv_v2_forward.1} parent=11 // pred_region
        _
      $region24: #{residule_conv_v2_forward.1} parent=11 // pred_fallthru
        _
      // Predicated region
      $region25: #{residule_conv_v2_forward.1} parent=11 // pred_check
        %p682 = pneg %p170
      $region26: #{residule_conv_v2_forward.1} parent=11 // pred_check_branch
        %684 = sbr.rel (%p682) target = $region28
      $region27: #{residule_conv_v2_forward.1} parent=11 // pred_region
        _
      $region28: #{residule_conv_v2_forward.1} parent=11 // pred_fallthru
        _
      // Predicated region
      $region29: #{residule_conv_v2_forward.1} parent=11 // pred_check
        %p685 = pneg %p191
      $region30: #{residule_conv_v2_forward.1} parent=11 // pred_check_branch
        %687 = sbr.rel (%p685) target = $region32
      $region31: #{residule_conv_v2_forward.1} parent=11 // pred_region
        _
      $region32: #{residule_conv_v2_forward.1} parent=11 // pred_fallthru
        _
      // Predicated region
      $region33: #{residule_conv_v2_forward.1} parent=11 // pred_check
        %p688 = pneg %p212
      $region34: #{residule_conv_v2_forward.1} parent=11 // pred_check_branch
        %690 = sbr.rel (%p688) target = $region36
      $region35: #{residule_conv_v2_forward.1} parent=11 // pred_region
        _
      $region36: #{residule_conv_v2_forward.1} parent=11 // pred_fallthru
        _
      // Predicated region
      $region37: #{residule_conv_v2_forward.1} parent=11 // pred_check
        %p691 = pneg %p233
      $region38: #{residule_conv_v2_forward.1} parent=11 // pred_check_branch
        %693 = sbr.rel (%p691) target = $region40
      $region39: #{residule_conv_v2_forward.1} parent=11 // pred_region
        _
      $region40: #{residule_conv_v2_forward.1} parent=11 // pred_fallthru
        _
      // Predicated region
      $region41: #{residule_conv_v2_forward.1} parent=11 // pred_check
        %p694 = pneg %p254
      $region42: #{residule_conv_v2_forward.1} parent=11 // pred_check_branch
        %696 = sbr.rel (%p694) target = $region44
      $region43: #{residule_conv_v2_forward.1} parent=11 // pred_region
        _
      $region44: #{residule_conv_v2_forward.1} parent=11 // pred_fallthru
        _
      // Predicated region
      $region45: #{residule_conv_v2_forward.1} parent=11 // pred_check
        %p697 = pneg %p275
      $region46: #{residule_conv_v2_forward.1} parent=11 // pred_check_branch
        %699 = sbr.rel (%p697) target = $region48
      $region47: #{residule_conv_v2_forward.1} parent=11 // pred_region
        _
      $region48: #{residule_conv_v2_forward.1} parent=11 // pred_fallthru
        _
      // Predicated region
      $region49: #{residule_conv_v2_forward.1} parent=11 // pred_check
        %p700 = pneg %p296
      $region50: #{residule_conv_v2_forward.1} parent=11 // pred_check_branch
        %702 = sbr.rel (%p700) target = $region52
      $region51: #{residule_conv_v2_forward.1} parent=11 // pred_region
        _
      $region52: #{residule_conv_v2_forward.1} parent=11 // pred_fallthru
        _
      // Predicated region
      $region53: #{residule_conv_v2_forward.1} parent=11 // pred_check
        %p703 = pneg %p317
      $region54: #{residule_conv_v2_forward.1} parent=11 // pred_check_branch
        %705 = sbr.rel (%p703) target = $region56
      $region55: #{residule_conv_v2_forward.1} parent=11 // pred_region
        _
      $region56: #{residule_conv_v2_forward.1} parent=11 // pred_fallthru
        _
      // Predicated region
      $region57: #{residule_conv_v2_forward.1} parent=11 // pred_check
        %p706 = pneg %p338
      $region58: #{residule_conv_v2_forward.1} parent=11 // pred_check_branch
        %708 = sbr.rel (%p706) target = $region60
      $region59: #{residule_conv_v2_forward.1} parent=11 // pred_region
        _
      $region60: #{residule_conv_v2_forward.1} parent=11 // pred_fallthru
        _
      // Predicated region
      $region61: #{residule_conv_v2_forward.1} parent=11 // pred_check
        %p709 = pneg %p359
      $region62: #{residule_conv_v2_forward.1} parent=11 // pred_check_branch
        %711 = sbr.rel (%p709) target = $region64
      $region63: #{residule_conv_v2_forward.1} parent=11 // pred_region
        _
      $region64: #{residule_conv_v2_forward.1} parent=11 // pred_fallthru
        _
      // Predicated region
      $region65: #{residule_conv_v2_forward.1} parent=11 // pred_check
        %p712 = pneg %p380
      $region66: #{residule_conv_v2_forward.1} parent=11 // pred_check_branch
        %714 = sbr.rel (%p712) target = $region68
      $region67: #{residule_conv_v2_forward.1} parent=11 // pred_region
        _
      $region68: #{residule_conv_v2_forward.1} parent=11 // pred_fallthru
        _
      // Predicated region
      $region69: #{residule_conv_v2_forward.1} parent=11 // pred_check
        %p715 = pneg %p401
      $region70: #{residule_conv_v2_forward.1} parent=11 // pred_check_branch
        %717 = sbr.rel (%p715) target = $region72
      $region71: #{residule_conv_v2_forward.1} parent=11 // pred_region
        _
      $region72: #{residule_conv_v2_forward.1} parent=11 // pred_fallthru
        _
      // Predicated region
      $region73: #{residule_conv_v2_forward.1} parent=11 // pred_check
        %p718 = pneg %p422
      $region74: #{residule_conv_v2_forward.1} parent=11 // pred_check_branch
        %720 = sbr.rel (%p718) target = $region76
      $region75: #{residule_conv_v2_forward.1} parent=11 // pred_region
        _
      $region76: #{residule_conv_v2_forward.1} parent=11 // pred_fallthru
        _
      // Predicated region
      $region77: #{residule_conv_v2_forward.1} parent=11 // pred_check
        %p721 = pneg %p443
      $region78: #{residule_conv_v2_forward.1} parent=11 // pred_check_branch
        %723 = sbr.rel (%p721) target = $region80
      $region79: #{residule_conv_v2_forward.1} parent=11 // pred_region
        _
      $region80: #{residule_conv_v2_forward.1} parent=11 // pred_fallthru
        _
      // Predicated region
      $region81: #{residule_conv_v2_forward.1} parent=11 // pred_check
        %p724 = pneg %p464
      $region82: #{residule_conv_v2_forward.1} parent=11 // pred_check_branch
        %726 = sbr.rel (%p724) target = $region84
      $region83: #{residule_conv_v2_forward.1} parent=11 // pred_region
        _
      $region84: #{residule_conv_v2_forward.1} parent=11 // pred_fallthru
        _
      // Predicated region
      $region85: #{residule_conv_v2_forward.1} parent=11 // pred_check
        %p727 = pneg %p485
      $region86: #{residule_conv_v2_forward.1} parent=11 // pred_check_branch
        %729 = sbr.rel (%p727) target = $region88
      $region87: #{residule_conv_v2_forward.1} parent=11 // pred_region
        _
      $region88: #{residule_conv_v2_forward.1} parent=11 // pred_fallthru
        _
      // Predicated region
      $region89: #{residule_conv_v2_forward.1} parent=11 // pred_check
        %p730 = pneg %p506
      $region90: #{residule_conv_v2_forward.1} parent=11 // pred_check_branch
        %732 = sbr.rel (%p730) target = $region92
      $region91: #{residule_conv_v2_forward.1} parent=11 // pred_region
        _
      $region92: #{residule_conv_v2_forward.1} parent=11 // pred_fallthru
        _
      // Predicated region
      $region93: #{residule_conv_v2_forward.1} parent=11 // pred_check
        %p733 = pneg %p527
      $region94: #{residule_conv_v2_forward.1} parent=11 // pred_check_branch
        %735 = sbr.rel (%p733) target = $region96
      $region95: #{residule_conv_v2_forward.1} parent=11 // pred_region
        _
      $region96: #{residule_conv_v2_forward.1} parent=11 // pred_fallthru
        _
      // Predicated region
      $region97: #{residule_conv_v2_forward.1} parent=11 // pred_check
        %p736 = pneg %p548
      $region98: #{residule_conv_v2_forward.1} parent=11 // pred_check_branch
        %738 = sbr.rel (%p736) target = $region100
      $region99: #{residule_conv_v2_forward.1} parent=11 // pred_region
        _
      $region100: #{residule_conv_v2_forward.1} parent=11 // pred_fallthru
        _
      // Predicated region
      $region101: #{residule_conv_v2_forward.1} parent=11 // pred_check
        %p739 = pneg %p569
      $region102: #{residule_conv_v2_forward.1} parent=11 // pred_check_branch
        %741 = sbr.rel (%p739) target = $region104
      $region103: #{residule_conv_v2_forward.1} parent=11 // pred_region
        _
      $region104: #{residule_conv_v2_forward.1} parent=11 // pred_fallthru
        _
      // Predicated region
      $region105: #{residule_conv_v2_forward.1} parent=11 // pred_check
        %p742 = pneg %p590
      $region106: #{residule_conv_v2_forward.1} parent=11 // pred_check_branch
        %744 = sbr.rel (%p742) target = $region108
      $region107: #{residule_conv_v2_forward.1} parent=11 // pred_region
        _
      $region108: #{residule_conv_v2_forward.1} parent=11 // pred_fallthru
        _
      // Predicated region
      $region109: #{residule_conv_v2_forward.1} parent=11 // pred_check
        %p745 = pneg %p611
      $region110: #{residule_conv_v2_forward.1} parent=11 // pred_check_branch
        %747 = sbr.rel (%p745) target = $region112
      $region111: #{residule_conv_v2_forward.1} parent=11 // pred_region
        _
      $region112: #{residule_conv_v2_forward.1} parent=11 // pred_fallthru
        _
      // Predicated region
      $region113: #{residule_conv_v2_forward.1} parent=11 // pred_check
        %p748 = pneg %p632
      $region114: #{residule_conv_v2_forward.1} parent=11 // pred_check_branch
        %750 = sbr.rel (%p748) target = $region116
      $region115: #{residule_conv_v2_forward.1} parent=11 // pred_region
        _
      $region116: #{residule_conv_v2_forward.1} parent=11 // pred_fallthru
        _
    $region12: #{residule_conv_v2_forward.1} parent=5 // pred_fallthru
      _
    %p751 = scmp.lt.s32.totalorder %s34, 2
    // Predicated region
    $region117: #{residule_conv_v2_forward.1} parent=5 // pred_check
      %p752 = pneg %p751
    $region118: #{residule_conv_v2_forward.1} parent=5 // pred_check_branch
      %754 = sbr.rel (%p752) target = $region120
    $region119: #{residule_conv_v2_forward.1} parent=5 // pred_region
      // Predicated region
      $region121: #{residule_conv_v2_forward.1} parent=119 // pred_check
        %p755 = pneg %p54
      $region122: #{residule_conv_v2_forward.1} parent=119 // pred_check_branch
        %757 = sbr.rel (%p755) target = $region124
      $region123: #{residule_conv_v2_forward.1} parent=119 // pred_region
        %p758 = scmp.lt.s32.totalorder %s34, 1
        %s759 = scalar_select %p758, %s34, 1
        %s760 = smul.addr %s759, 32
        %s761 = smul.addr %s760, 4
        %s762 = scalar_lea.vmem %s0, %s761
      $region124: #{residule_conv_v2_forward.1} parent=119 // pred_fallthru
        _
      // Predicated region
      $region125: #{residule_conv_v2_forward.1} parent=119 // pred_check
        %p763 = pneg %p80
      $region126: #{residule_conv_v2_forward.1} parent=119 // pred_check_branch
        %765 = sbr.rel (%p763) target = $region128
      $region127: #{residule_conv_v2_forward.1} parent=119 // pred_region
        %p766 = scmp.lt.s32.totalorder %s34, 1
        %s767 = scalar_select %p766, %s34, 1
        %s768 = smul.addr %s767, 32
        %s769 = smul.addr %s768, 8
        %s770 = scalar_lea.vmem %s1, %s769
      $region128: #{residule_conv_v2_forward.1} parent=119 // pred_fallthru
        _
    $region120: #{residule_conv_v2_forward.1} parent=5 // pred_fallthru
      _
    %p771 = scmp.le.s32.totalorder 1, %s34
    %p772 = scmp.lt.s32.totalorder %s34, 3
    %p773 = pnand %p771, %p772
    %p774 = pneg %p773
    // Predicated region
    $region129: #{residule_conv_v2_forward.1} parent=5 // pred_check
      _
    $region130: #{residule_conv_v2_forward.1} parent=5 // pred_check_branch
      %776 = sbr.rel (%p773) target = $region132
    $region131: #{residule_conv_v2_forward.1} parent=5 // pred_region
      %s777 = ssub.s32 %s34, 1
      %p778 = scmp.lt.s32.totalorder %s39, 1
      %s779 = scalar_select %p778, %s39, 1
      %s780 = smul.addr %s779, 32
      %s781 = smul.addr %s780, 4
      %s782 = scalar_lea.vmem %s0, %s781
      %p783 = pneg %p60
      %p784 = pneg %p57
      %p785 = scmp.lt.s32.totalorder %s39, 1
      %s786 = scalar_select %p785, %s39, 1
      %s787 = smul.addr %s786, 32
      %s788 = smul.addr %s787, 8
      %s789 = scalar_lea.vmem %s1, %s788
      %p790 = pneg %p86
      %p791 = pneg %p83
      %p792 = pneg %p107
      %p793 = pneg %p104
      %p794 = pneg %p128
      %p795 = pneg %p125
      %p796 = pneg %p149
      %p797 = pneg %p146
      %p798 = pneg %p170
      %p799 = pneg %p167
      %p800 = pneg %p191
      %p801 = pneg %p188
      %p802 = pneg %p212
      %p803 = pneg %p209
      %p804 = pneg %p233
      %p805 = pneg %p230
      %p806 = pneg %p254
      %p807 = pneg %p251
      %p808 = pneg %p275
      %p809 = pneg %p272
      %p810 = pneg %p296
      %p811 = pneg %p293
      %p812 = pneg %p317
      %p813 = pneg %p314
      %p814 = pneg %p338
      %p815 = pneg %p335
      %p816 = pneg %p359
      %p817 = pneg %p356
      %p818 = pneg %p380
      %p819 = pneg %p377
      %p820 = pneg %p401
      %p821 = pneg %p398
      %p822 = pneg %p422
      %p823 = pneg %p419
      %p824 = pneg %p443
      %p825 = pneg %p440
      %p826 = pneg %p464
      %p827 = pneg %p461
      %p828 = pneg %p485
      %p829 = pneg %p482
      %p830 = pneg %p506
      %p831 = pneg %p503
      %p832 = pneg %p527
      %p833 = pneg %p524
      %p834 = pneg %p548
      %p835 = pneg %p545
      %p836 = pneg %p569
      %p837 = pneg %p566
      %p838 = pneg %p590
      %p839 = pneg %p587
      %p840 = pneg %p611
      %p841 = pneg %p608
      %p842 = pneg %p632
      %p843 = pneg %p629
      %p844 = pneg %p658
      %p845 = pneg %p655
      %p846 = scmp.lt.s32.totalorder %s39, 1
      %s847 = scalar_select %p846, %s39, 1
      %s848 = smul.addr %s847, 32
      %s849 = smul.addr %s848, 8
      %s850 = scalar_lea.vmem %s28, %s849
      %p851 = scmp.lt.s32.totalorder %s39, 1
      %s852 = scalar_select %p851, %s39, 1
      %s853 = smul.addr %s852, 32
      %s854 = smul.addr %s853, 4
      %s855 = scalar_lea.vmem %s0, %s854
      %p856 = scmp.lt.s32.totalorder %s39, 1
      %s857 = scalar_select %p856, %s39, 1
      %s858 = smul.addr %s857, 32
      %s859 = smul.addr %s858, 8
      %s860 = scalar_lea.vmem %s1, %s859
      %p861 = scmp.lt.s32.totalorder %s39, 1
      %s862 = scalar_select %p861, %s39, 1
      %s863 = smul.addr %s862, 32
      %s864 = smul.addr %s863, 8
      %s865 = scalar_lea.vmem %s28, %s864
      %v867 = vld [vmem:[%s855] sm:$0xff]
      %v868 = vld [vmem:[%s855 + $0x8] sm:$0xff]
      %v869 = vld [vmem:[%s855 + $0x10] sm:$0xff]
      %v870 = vld [vmem:[%s855 + $0x18] sm:$0xff]
      %v871 = vld [vmem:[%s855 + $0x20] sm:$0xff]
      %v872 = vld [vmem:[%s855 + $0x28] sm:$0xff]
      %v873 = vld [vmem:[%s855 + $0x30] sm:$0xff]
      %v874 = vld [vmem:[%s855 + $0x38] sm:$0xff]
      %v875 = vld [vmem:[%s855 + $0x40] sm:$0xff]
      %v876 = vld [vmem:[%s855 + $0x48] sm:$0xff]
      %v877 = vld [vmem:[%s855 + $0x50] sm:$0xff]
      %v878 = vld [vmem:[%s855 + $0x58] sm:$0xff]
      %v879 = vld [vmem:[%s855 + $0x60] sm:$0xff]
      %v880 = vld [vmem:[%s855 + $0x68] sm:$0xff]
      %v881 = vld [vmem:[%s855 + $0x70] sm:$0xff]
      %v882 = vld [vmem:[%s855 + $0x78] sm:$0xff]
      %v883 = vld [vmem:[%s2] sm:$0xf]
      %v884 = vld [vmem:[%s2 + $0x4] sm:$0xf]
      %v885 = vld [vmem:[%s2 + $0x8] sm:$0xf]
      %v886 = vld [vmem:[%s2 + $0xc] sm:$0xf]
      %v887 = vld [vmem:[%s2 + $0x10] sm:$0xf]
      %v888 = vld [vmem:[%s2 + $0x14] sm:$0xf]
      %v889 = vld [vmem:[%s2 + $0x18] sm:$0xf]
      %v890 = vld [vmem:[%s2 + $0x1c] sm:$0xf]
      %v891 = vld [vmem:[%s2 + $0x20] sm:$0xf]
      %v892 = vld [vmem:[%s2 + $0x24] sm:$0xf]
      %v893 = vld [vmem:[%s2 + $0x28] sm:$0xf]
      %v894 = vld [vmem:[%s2 + $0x2c] sm:$0xf]
      %v895 = vld [vmem:[%s2 + $0x30] sm:$0xf]
      %v896 = vld [vmem:[%s2 + $0x34] sm:$0xf]
      %v897 = vld [vmem:[%s2 + $0x38] sm:$0xf]
      %v898 = vld [vmem:[%s2 + $0x3c] sm:$0xf]
      %v899 = vld [vmem:[%s2 + $0x40] sm:$0xf]
      %v900 = vld [vmem:[%s2 + $0x44] sm:$0xf]
      %v901 = vld [vmem:[%s2 + $0x48] sm:$0xf]
      %v902 = vld [vmem:[%s2 + $0x4c] sm:$0xf]
      %v903 = vld [vmem:[%s2 + $0x50] sm:$0xf]
      %v904 = vld [vmem:[%s2 + $0x54] sm:$0xf]
      %v905 = vld [vmem:[%s2 + $0x58] sm:$0xf]
      %v906 = vld [vmem:[%s2 + $0x5c] sm:$0xf]
      %v907 = vld [vmem:[%s2 + $0x60] sm:$0xf]
      %v908 = vld [vmem:[%s2 + $0x64] sm:$0xf]
      %v909 = vld [vmem:[%s2 + $0x68] sm:$0xf]
      %v910 = vld [vmem:[%s2 + $0x6c] sm:$0xf]
      %v911 = vld [vmem:[%s2 + $0x70] sm:$0xf]
      %v912 = vld [vmem:[%s2 + $0x74] sm:$0xf]
      %v913 = vld [vmem:[%s2 + $0x78] sm:$0xf]
      %v914 = vld [vmem:[%s2 + $0x7c] sm:$0xf]
      %v915 = vld [vmem:[%s2 + $0x80] sm:$0xf]
      %v916 = vld [vmem:[%s2 + $0x84] sm:$0xf]
      %v917 = vld [vmem:[%s2 + $0x88] sm:$0xf]
      %v918 = vld [vmem:[%s2 + $0x8c] sm:$0xf]
      %v919 = vld [vmem:[%s2 + $0x90] sm:$0xf]
      %v920 = vld [vmem:[%s2 + $0x94] sm:$0xf]
      %v921 = vld [vmem:[%s2 + $0x98] sm:$0xf]
      %v922 = vld [vmem:[%s2 + $0x9c] sm:$0xf]
      %v923 = vld [vmem:[%s2 + $0xa0] sm:$0xf]
      %v924 = vld [vmem:[%s2 + $0xa4] sm:$0xf]
      %v925 = vld [vmem:[%s2 + $0xa8] sm:$0xf]
      %v926 = vld [vmem:[%s2 + $0xac] sm:$0xf]
      %v927 = vld [vmem:[%s2 + $0xb0] sm:$0xf]
      %v928 = vld [vmem:[%s2 + $0xb4] sm:$0xf]
      %v929 = vld [vmem:[%s2 + $0xb8] sm:$0xf]
      %v930 = vld [vmem:[%s2 + $0xbc] sm:$0xf]
      %v931 = vld [vmem:[%s2 + $0xc0] sm:$0xf]
      %v932 = vld [vmem:[%s2 + $0xc4] sm:$0xf]
      %v933 = vld [vmem:[%s2 + $0xc8] sm:$0xf]
      %v934 = vld [vmem:[%s2 + $0xcc] sm:$0xf]
      %v935 = vld [vmem:[%s2 + $0xd0] sm:$0xf]
      %v936 = vld [vmem:[%s2 + $0xd4] sm:$0xf]
      %v937 = vld [vmem:[%s2 + $0xd8] sm:$0xf]
      %v938 = vld [vmem:[%s2 + $0xdc] sm:$0xf]
      %v939 = vld [vmem:[%s2 + $0xe0] sm:$0xf]
      %v940 = vld [vmem:[%s2 + $0xe4] sm:$0xf]
      %v941 = vld [vmem:[%s2 + $0xe8] sm:$0xf]
      %v942 = vld [vmem:[%s2 + $0xec] sm:$0xf]
      %v943 = vld [vmem:[%s2 + $0xf0] sm:$0xf]
      %v944 = vld [vmem:[%s2 + $0xf4] sm:$0xf]
      %v945 = vld [vmem:[%s2 + $0xf8] sm:$0xf]
      %v946 = vld [vmem:[%s2 + $0xfc] sm:$0xf]
      %v963 = vunpack.c.l.b16 %v867
      %v964 = vunpack.c.h.b16 %v867
      %v965 = vunpack.c.l.b16 %v868
      %v966 = vunpack.c.h.b16 %v868
      %v967 = vunpack.c.l.b16 %v869
      %v968 = vunpack.c.h.b16 %v869
      %v969 = vunpack.c.l.b16 %v870
      %v970 = vunpack.c.h.b16 %v870
      %v971 = vunpack.c.l.b16 %v871
      %v972 = vunpack.c.h.b16 %v871
      %v973 = vunpack.c.l.b16 %v872
      %v974 = vunpack.c.h.b16 %v872
      %v975 = vunpack.c.l.b16 %v873
      %v976 = vunpack.c.h.b16 %v873
      %v977 = vunpack.c.l.b16 %v874
      %v978 = vunpack.c.h.b16 %v874
      %v979 = vunpack.c.l.b16 %v875
      %v980 = vunpack.c.h.b16 %v875
      %v981 = vunpack.c.l.b16 %v876
      %v982 = vunpack.c.h.b16 %v876
      %v983 = vunpack.c.l.b16 %v877
      %v984 = vunpack.c.h.b16 %v877
      %v985 = vunpack.c.l.b16 %v878
      %v986 = vunpack.c.h.b16 %v878
      %v987 = vunpack.c.l.b16 %v879
      %v988 = vunpack.c.h.b16 %v879
      %v989 = vunpack.c.l.b16 %v880
      %v990 = vunpack.c.h.b16 %v880
      %v991 = vunpack.c.l.b16 %v881
      %v992 = vunpack.c.h.b16 %v881
      %v993 = vunpack.c.l.b16 %v882
      %v994 = vunpack.c.h.b16 %v882
      %v995 = vpack.c.b16 %v967, %v963
      %v996 = vpack.c.b16 %v968, %v964
      %v997 = vpack.c.b16 %v969, %v965
      %v998 = vpack.c.b16 %v970, %v966
      %v999 = vpack.c.b16 %v975, %v971
      %v1000 = vpack.c.b16 %v976, %v972
      %v1001 = vpack.c.b16 %v977, %v973
      %v1002 = vpack.c.b16 %v978, %v974
      %v1003 = vpack.c.b16 %v983, %v979
      %v1004 = vpack.c.b16 %v984, %v980
      %v1005 = vpack.c.b16 %v985, %v981
      %v1006 = vpack.c.b16 %v986, %v982
      %v1007 = vpack.c.b16 %v991, %v987
      %v1008 = vpack.c.b16 %v992, %v988
      %v1009 = vpack.c.b16 %v993, %v989
      %v1010 = vpack.c.b16 %v994, %v990
      %v1091 = vunpack.c.l.b16 %v883
      %v1092 = vunpack.c.l.b16 %v884
      %v1093 = vunpack.c.l.b16 %v885
      %v1094 = vunpack.c.l.b16 %v886
      %v1095 = vunpack.c.l.b16 %v887
      %v1096 = vunpack.c.l.b16 %v888
      %v1097 = vunpack.c.l.b16 %v889
      %v1098 = vunpack.c.l.b16 %v890
      %v1099 = vunpack.c.l.b16 %v891
      %v1100 = vunpack.c.l.b16 %v892
      %v1101 = vunpack.c.l.b16 %v893
      %v1102 = vunpack.c.l.b16 %v894
      %v1103 = vunpack.c.l.b16 %v895
      %v1104 = vunpack.c.l.b16 %v896
      %v1105 = vunpack.c.l.b16 %v897
      %v1106 = vunpack.c.l.b16 %v898
      %v1107 = vunpack.c.l.b16 %v899
      %v1108 = vunpack.c.l.b16 %v900
      %v1109 = vunpack.c.l.b16 %v901
      %v1110 = vunpack.c.l.b16 %v902
      %v1111 = vunpack.c.l.b16 %v903
      %v1112 = vunpack.c.l.b16 %v904
      %v1113 = vunpack.c.l.b16 %v905
      %v1114 = vunpack.c.l.b16 %v906
      %v1115 = vunpack.c.l.b16 %v907
      %v1116 = vunpack.c.l.b16 %v908
      %v1117 = vunpack.c.l.b16 %v909
      %v1118 = vunpack.c.l.b16 %v910
      %v1119 = vunpack.c.l.b16 %v911
      %v1120 = vunpack.c.l.b16 %v912
      %v1121 = vunpack.c.l.b16 %v913
      %v1122 = vunpack.c.l.b16 %v914
      %v1123 = vunpack.c.l.b16 %v915
      %v1124 = vunpack.c.l.b16 %v916
      %v1125 = vunpack.c.l.b16 %v917
      %v1126 = vunpack.c.l.b16 %v918
      %v1127 = vunpack.c.l.b16 %v919
      %v1128 = vunpack.c.l.b16 %v920
      %v1129 = vunpack.c.l.b16 %v921
      %v1130 = vunpack.c.l.b16 %v922
      %v1131 = vunpack.c.l.b16 %v923
      %v1132 = vunpack.c.l.b16 %v924
      %v1133 = vunpack.c.l.b16 %v925
      %v1134 = vunpack.c.l.b16 %v926
      %v1135 = vunpack.c.l.b16 %v927
      %v1136 = vunpack.c.l.b16 %v928
      %v1137 = vunpack.c.l.b16 %v929
      %v1138 = vunpack.c.l.b16 %v930
      %v1139 = vunpack.c.l.b16 %v931
      %v1140 = vunpack.c.l.b16 %v932
      %v1141 = vunpack.c.l.b16 %v933
      %v1142 = vunpack.c.l.b16 %v934
      %v1143 = vunpack.c.l.b16 %v935
      %v1144 = vunpack.c.l.b16 %v936
      %v1145 = vunpack.c.l.b16 %v937
      %v1146 = vunpack.c.l.b16 %v938
      %v1147 = vunpack.c.l.b16 %v939
      %v1148 = vunpack.c.l.b16 %v940
      %v1149 = vunpack.c.l.b16 %v941
      %v1150 = vunpack.c.l.b16 %v942
      %v1151 = vunpack.c.l.b16 %v943
      %v1152 = vunpack.c.l.b16 %v944
      %v1153 = vunpack.c.l.b16 %v945
      %v1154 = vunpack.c.l.b16 %v946
      %v1155 = vpack.c.b16 %v1092, %v1091
      %v1156 = vpack.c.b16 %v1094, %v1093
      %v1157 = vpack.c.b16 %v1096, %v1095
      %v1158 = vpack.c.b16 %v1098, %v1097
      %v1159 = vpack.c.b16 %v1100, %v1099
      %v1160 = vpack.c.b16 %v1102, %v1101
      %v1161 = vpack.c.b16 %v1104, %v1103
      %v1162 = vpack.c.b16 %v1106, %v1105
      %v1163 = vpack.c.b16 %v1108, %v1107
      %v1164 = vpack.c.b16 %v1110, %v1109
      %v1165 = vpack.c.b16 %v1112, %v1111
      %v1166 = vpack.c.b16 %v1114, %v1113
      %v1167 = vpack.c.b16 %v1116, %v1115
      %v1168 = vpack.c.b16 %v1118, %v1117
      %v1169 = vpack.c.b16 %v1120, %v1119
      %v1170 = vpack.c.b16 %v1122, %v1121
      %v1171 = vpack.c.b16 %v1124, %v1123
      %v1172 = vpack.c.b16 %v1126, %v1125
      %v1173 = vpack.c.b16 %v1128, %v1127
      %v1174 = vpack.c.b16 %v1130, %v1129
      %v1175 = vpack.c.b16 %v1132, %v1131
      %v1176 = vpack.c.b16 %v1134, %v1133
      %v1177 = vpack.c.b16 %v1136, %v1135
      %v1178 = vpack.c.b16 %v1138, %v1137
      %v1179 = vpack.c.b16 %v1140, %v1139
      %v1180 = vpack.c.b16 %v1142, %v1141
      %v1181 = vpack.c.b16 %v1144, %v1143
      %v1182 = vpack.c.b16 %v1146, %v1145
      %v1183 = vpack.c.b16 %v1148, %v1147
      %v1184 = vpack.c.b16 %v1150, %v1149
      %v1185 = vpack.c.b16 %v1152, %v1151
      %v1186 = vpack.c.b16 %v1154, %v1153
      %1219 = vmatpush.bf16.msra.mxu0 %v1162
      %1220 = vmatpush.bf16.msra.mxu0 %v1161
      %1221 = vmatpush.bf16.msra.mxu0 %v1160
      %1222 = vmatpush.bf16.msra.mxu0 %v1159
      %1223 = vmatpush.bf16.msra.mxu0 %v1158
      %1224 = vmatpush.bf16.msra.mxu0 %v1157
      %1225 = vmatpush.bf16.msra.mxu0 %v1156
      %1226 = vmatpush.bf16.msra.mxu0 %v1155
      %1227 = vmatmul.bf16.gmra.mxu0 %v995
      %v1228 = vpop.f32.mrf.mxu0
      %v1229 = vadd.f32 0.0, %v1228
      %v1230 = vpop.f32.mrf.mxu0
      %v1231 = vadd.f32 0.0, %v1230
      %1232 = vmatmul.bf16.gmra.mxu0 %v999
      %v1233 = vpop.f32.mrf.mxu0
      %v1234 = vadd.f32 0.0, %v1233
      %v1235 = vpop.f32.mrf.mxu0
      %v1236 = vadd.f32 0.0, %v1235
      %1237 = vmatmul.bf16.gmra.mxu0 %v1003
      %v1238 = vpop.f32.mrf.mxu0
      %v1239 = vadd.f32 0.0, %v1238
      %v1240 = vpop.f32.mrf.mxu0
      %v1241 = vadd.f32 0.0, %v1240
      %1242 = vmatmul.bf16.gmra.mxu0 %v1007
      %v1243 = vpop.f32.mrf.mxu0
      %v1244 = vadd.f32 0.0, %v1243
      %v1245 = vpop.f32.mrf.mxu0
      %v1246 = vadd.f32 0.0, %v1245
      %1247 = vdwg.mxu0
      %1248 = vmatpush.bf16.msra.mxu0 %v1170
      %1249 = vmatpush.bf16.msra.mxu0 %v1169
      %1250 = vmatpush.bf16.msra.mxu0 %v1168
      %1251 = vmatpush.bf16.msra.mxu0 %v1167
      %1252 = vmatpush.bf16.msra.mxu0 %v1166
      %1253 = vmatpush.bf16.msra.mxu0 %v1165
      %1254 = vmatpush.bf16.msra.mxu0 %v1164
      %1255 = vmatpush.bf16.msra.mxu0 %v1163
      %1256 = vmatmul.bf16.gmra.mxu0 %v996
      %v1257 = vpop.f32.mrf.mxu0
      %v1258 = vadd.f32 %v1229, %v1257
      %v1259 = vpop.f32.mrf.mxu0
      %v1260 = vadd.f32 %v1231, %v1259
      %1261 = vmatmul.bf16.gmra.mxu0 %v1000
      %v1262 = vpop.f32.mrf.mxu0
      %v1263 = vadd.f32 %v1234, %v1262
      %v1264 = vpop.f32.mrf.mxu0
      %v1265 = vadd.f32 %v1236, %v1264
      %1266 = vmatmul.bf16.gmra.mxu0 %v1004
      %v1267 = vpop.f32.mrf.mxu0
      %v1268 = vadd.f32 %v1239, %v1267
      %v1269 = vpop.f32.mrf.mxu0
      %v1270 = vadd.f32 %v1241, %v1269
      %1271 = vmatmul.bf16.gmra.mxu0 %v1008
      %v1272 = vpop.f32.mrf.mxu0
      %v1273 = vadd.f32 %v1244, %v1272
      %v1274 = vpop.f32.mrf.mxu0
      %v1275 = vadd.f32 %v1246, %v1274
      %1276 = vdwg.mxu0
      %1277 = vmatpush.bf16.msra.mxu0 %v1178
      %1278 = vmatpush.bf16.msra.mxu0 %v1177
      %1279 = vmatpush.bf16.msra.mxu0 %v1176
      %1280 = vmatpush.bf16.msra.mxu0 %v1175
      %1281 = vmatpush.bf16.msra.mxu0 %v1174
      %1282 = vmatpush.bf16.msra.mxu0 %v1173
      %1283 = vmatpush.bf16.msra.mxu0 %v1172
      %1284 = vmatpush.bf16.msra.mxu0 %v1171
      %1285 = vmatmul.bf16.gmra.mxu0 %v997
      %v1286 = vpop.f32.mrf.mxu0
      %v1287 = vadd.f32 %v1258, %v1286
      %v1288 = vpop.f32.mrf.mxu0
      %v1289 = vadd.f32 %v1260, %v1288
      %1290 = vmatmul.bf16.gmra.mxu0 %v1001
      %v1291 = vpop.f32.mrf.mxu0
      %v1292 = vadd.f32 %v1263, %v1291
      %v1293 = vpop.f32.mrf.mxu0
      %v1294 = vadd.f32 %v1265, %v1293
      %1295 = vmatmul.bf16.gmra.mxu0 %v1005
      %v1296 = vpop.f32.mrf.mxu0
      %v1297 = vadd.f32 %v1268, %v1296
      %v1298 = vpop.f32.mrf.mxu0
      %v1299 = vadd.f32 %v1270, %v1298
      %1300 = vmatmul.bf16.gmra.mxu0 %v1009
      %v1301 = vpop.f32.mrf.mxu0
      %v1302 = vadd.f32 %v1273, %v1301
      %v1303 = vpop.f32.mrf.mxu0
      %v1304 = vadd.f32 %v1275, %v1303
      %1305 = vdwg.mxu0
      %1306 = vmatpush.bf16.msra.mxu0 %v1186
      %1307 = vmatpush.bf16.msra.mxu0 %v1185
      %1308 = vmatpush.bf16.msra.mxu0 %v1184
      %1309 = vmatpush.bf16.msra.mxu0 %v1183
      %1310 = vmatpush.bf16.msra.mxu0 %v1182
      %1311 = vmatpush.bf16.msra.mxu0 %v1181
      %1312 = vmatpush.bf16.msra.mxu0 %v1180
      %1313 = vmatpush.bf16.msra.mxu0 %v1179
      %1314 = vmatmul.bf16.gmra.mxu0 %v998
      %v1315 = vpop.f32.mrf.mxu0
      %v1316 = vadd.f32 %v1287, %v1315
      %v1317 = vpop.f32.mrf.mxu0
      %v1318 = vadd.f32 %v1289, %v1317
      %1319 = vmatmul.bf16.gmra.mxu0 %v1002
      %v1320 = vpop.f32.mrf.mxu0
      %v1321 = vadd.f32 %v1292, %v1320
      %v1322 = vpop.f32.mrf.mxu0
      %v1323 = vadd.f32 %v1294, %v1322
      %1324 = vmatmul.bf16.gmra.mxu0 %v1006
      %v1325 = vpop.f32.mrf.mxu0
      %v1326 = vadd.f32 %v1297, %v1325
      %v1327 = vpop.f32.mrf.mxu0
      %v1328 = vadd.f32 %v1299, %v1327
      %1329 = vmatmul.bf16.gmra.mxu0 %v1010
      %v1330 = vpop.f32.mrf.mxu0
      %v1331 = vadd.f32 %v1302, %v1330
      %v1332 = vpop.f32.mrf.mxu0
      %v1333 = vadd.f32 %v1304, %v1332
      %1334 = vdwg.mxu0
      %v1335 = vld [vmem:[%s3] sm:$0x1]
      %v1337 = vperm.slane %v1335, 0
      %v1339 = vmul.f32 %v1316, %v1337
      %v1340 = vmul.f32 %v1318, %v1337
      %v1341 = vmul.f32 %v1321, %v1337
      %v1342 = vmul.f32 %v1323, %v1337
      %v1343 = vmul.f32 %v1326, %v1337
      %v1344 = vmul.f32 %v1328, %v1337
      %v1345 = vmul.f32 %v1331, %v1337
      %v1346 = vmul.f32 %v1333, %v1337
      %v1347 = vld [vmem:[%s4] sm:$0x1]
      %v1349 = vperm.slane %v1347, 0
      %v1351 = vadd.f32 %v1339, %v1349
      %v1352 = vadd.f32 %v1340, %v1349
      %v1353 = vadd.f32 %v1341, %v1349
      %v1354 = vadd.f32 %v1342, %v1349
      %v1355 = vadd.f32 %v1343, %v1349
      %v1356 = vadd.f32 %v1344, %v1349
      %v1357 = vadd.f32 %v1345, %v1349
      %v1358 = vadd.f32 %v1346, %v1349
      %v1359 = vmax.f32 %v1351, 0.0
      %v1360 = vmax.f32 %v1352, 0.0
      %v1361 = vmax.f32 %v1353, 0.0
      %v1362 = vmax.f32 %v1354, 0.0
      %v1363 = vmax.f32 %v1355, 0.0
      %v1364 = vmax.f32 %v1356, 0.0
      %v1365 = vmax.f32 %v1357, 0.0
      %v1366 = vmax.f32 %v1358, 0.0
      %vm1369 = vcmask 1040384
      %v1370 = vrot.slane %v1365, 7
      %v1371 = vrot.slane %v1366, 7
      %v1372 = vsel %vm1369, %v1370, %v1371
      %v1381 = vrot.slane %v1359, 7
      %v1382 = vrot.slane %v1360, 7
      %v1383 = vsel %vm1369, %v1381, %v1382
      %v1384 = vrot.slane %v1361, 7
      %v1385 = vsel %vm1369, %v1382, %v1384
      %v1386 = vrot.slane %v1362, 7
      %v1387 = vsel %vm1369, %v1384, %v1386
      %v1388 = vrot.slane %v1363, 7
      %v1389 = vsel %vm1369, %v1386, %v1388
      %v1390 = vrot.slane %v1364, 7
      %v1391 = vsel %vm1369, %v1388, %v1390
      %v1392 = vsel %vm1369, %v1390, %v1370
      %v1400 = vsel %vm1369, %v1371, %v1381
      %v1401 = vld [vmem:[%s5] sm:$0xff]
      %v1402 = vld [vmem:[%s5 + $0x8] sm:$0xff]
      %v1403 = vld [vmem:[%s5 + $0x10] sm:$0xff]
      %v1404 = vld [vmem:[%s5 + $0x18] sm:$0xff]
      %v1405 = vld [vmem:[%s5 + $0x20] sm:$0xff]
      %v1406 = vld [vmem:[%s5 + $0x28] sm:$0xff]
      %v1407 = vld [vmem:[%s5 + $0x30] sm:$0xff]
      %v1408 = vld [vmem:[%s5 + $0x38] sm:$0xff]
      %1410 = vset.pattern.permute.xlu0 0
      %1411 = vperm.xlu0 %1410, %v1401
      %v1412 = vpop.permute.xlu0 %1411
      %1415 = vset.pattern.permute.xlu0 0
      %1416 = vperm.xlu0 %1415, %v1402
      %v1417 = vpop.permute.xlu0 %1416
      %1420 = vset.pattern.permute.xlu0 0
      %1421 = vperm.xlu0 %1420, %v1403
      %v1422 = vpop.permute.xlu0 %1421
      %1425 = vset.pattern.permute.xlu0 0
      %1426 = vperm.xlu0 %1425, %v1404
      %v1427 = vpop.permute.xlu0 %1426
      %1430 = vset.pattern.permute.xlu0 0
      %1431 = vperm.xlu0 %1430, %v1405
      %v1432 = vpop.permute.xlu0 %1431
      %1435 = vset.pattern.permute.xlu0 0
      %1436 = vperm.xlu0 %1435, %v1406
      %v1437 = vpop.permute.xlu0 %1436
      %1440 = vset.pattern.permute.xlu0 0
      %1441 = vperm.xlu0 %1440, %v1407
      %v1442 = vpop.permute.xlu0 %1441
      %1445 = vset.pattern.permute.xlu0 0
      %1446 = vperm.xlu0 %1445, %v1408
      %v1447 = vpop.permute.xlu0 %1446
      %v1449 = vadd.f32 %v1372, %v1412
      %v1450 = vadd.f32 %v1400, %v1417
      %v1451 = vadd.f32 %v1383, %v1422
      %v1452 = vadd.f32 %v1385, %v1427
      %v1453 = vadd.f32 %v1387, %v1432
      %v1454 = vadd.f32 %v1389, %v1437
      %v1455 = vadd.f32 %v1391, %v1442
      %v1456 = vadd.f32 %v1392, %v1447
      %v1457 = vmax.f32 %v1359, %v1449
      %v1458 = vmax.f32 %v1360, %v1450
      %v1459 = vmax.f32 %v1361, %v1451
      %v1460 = vmax.f32 %v1362, %v1452
      %v1461 = vmax.f32 %v1363, %v1453
      %v1462 = vmax.f32 %v1364, %v1454
      %v1463 = vmax.f32 %v1365, %v1455
      %v1464 = vmax.f32 %v1366, %v1456
      %s1465 = scalar_lea.vmem %s5, 64
      %v1466 = vld [vmem:[%s1465] sm:$0xff]
      %v1467 = vld [vmem:[%s1465 + $0x8] sm:$0xff]
      %v1468 = vld [vmem:[%s1465 + $0x10] sm:$0xff]
      %v1469 = vld [vmem:[%s1465 + $0x18] sm:$0xff]
      %v1470 = vld [vmem:[%s1465 + $0x20] sm:$0xff]
      %v1471 = vld [vmem:[%s1465 + $0x28] sm:$0xff]
      %v1472 = vld [vmem:[%s1465 + $0x30] sm:$0xff]
      %v1473 = vld [vmem:[%s1465 + $0x38] sm:$0xff]
      %1475 = vset.pattern.permute.xlu0 0
      %1476 = vperm.xlu0 %1475, %v1466
      %v1477 = vpop.permute.xlu0 %1476
      %1480 = vset.pattern.permute.xlu0 0
      %1481 = vperm.xlu0 %1480, %v1467
      %v1482 = vpop.permute.xlu0 %1481
      %1485 = vset.pattern.permute.xlu0 0
      %1486 = vperm.xlu0 %1485, %v1468
      %v1487 = vpop.permute.xlu0 %1486
      %1490 = vset.pattern.permute.xlu0 0
      %1491 = vperm.xlu0 %1490, %v1469
      %v1492 = vpop.permute.xlu0 %1491
      %1495 = vset.pattern.permute.xlu0 0
      %1496 = vperm.xlu0 %1495, %v1470
      %v1497 = vpop.permute.xlu0 %1496
      %1500 = vset.pattern.permute.xlu0 0
      %1501 = vperm.xlu0 %1500, %v1471
      %v1502 = vpop.permute.xlu0 %1501
      %1505 = vset.pattern.permute.xlu0 0
      %1506 = vperm.xlu0 %1505, %v1472
      %v1507 = vpop.permute.xlu0 %1506
      %1510 = vset.pattern.permute.xlu0 0
      %1511 = vperm.xlu0 %1510, %v1473
      %v1512 = vpop.permute.xlu0 %1511
      %v1514 = vadd.f32 %v1366, %v1477
      %v1515 = vadd.f32 %v1359, %v1482
      %v1516 = vadd.f32 %v1360, %v1487
      %v1517 = vadd.f32 %v1361, %v1492
      %v1518 = vadd.f32 %v1362, %v1497
      %v1519 = vadd.f32 %v1363, %v1502
      %v1520 = vadd.f32 %v1364, %v1507
      %v1521 = vadd.f32 %v1365, %v1512
      %v1522 = vmax.f32 %v1457, %v1514
      %v1523 = vmax.f32 %v1458, %v1515
      %v1524 = vmax.f32 %v1459, %v1516
      %v1525 = vmax.f32 %v1460, %v1517
      %v1526 = vmax.f32 %v1461, %v1518
      %v1527 = vmax.f32 %v1462, %v1519
      %v1528 = vmax.f32 %v1463, %v1520
      %v1529 = vmax.f32 %v1464, %v1521
      %v1530 = vrot.slane %v1366, 1
      %vm1532 = vcmask 1046528
      %v1533 = vrot.slane %v1359, 1
      %v1534 = vrot.slane %v1360, 1
      %v1535 = vsel %vm1532, %v1533, %v1534
      %v1536 = vrot.slane %v1361, 1
      %v1537 = vsel %vm1532, %v1534, %v1536
      %v1538 = vrot.slane %v1362, 1
      %v1539 = vsel %vm1532, %v1536, %v1538
      %v1540 = vrot.slane %v1363, 1
      %v1541 = vsel %vm1532, %v1538, %v1540
      %v1542 = vrot.slane %v1364, 1
      %v1543 = vsel %vm1532, %v1540, %v1542
      %v1544 = vrot.slane %v1365, 1
      %v1545 = vsel %vm1532, %v1542, %v1544
      %v1546 = vsel %vm1532, %v1544, %v1530
      %v1555 = vsel %vm1532, %v1530, %v1533
      %s1556 = scalar_lea.vmem %s5, 128
      %v1557 = vld [vmem:[%s1556] sm:$0xff]
      %v1558 = vld [vmem:[%s1556 + $0x8] sm:$0xff]
      %v1559 = vld [vmem:[%s1556 + $0x10] sm:$0xff]
      %v1560 = vld [vmem:[%s1556 + $0x18] sm:$0xff]
      %v1561 = vld [vmem:[%s1556 + $0x20] sm:$0xff]
      %v1562 = vld [vmem:[%s1556 + $0x28] sm:$0xff]
      %v1563 = vld [vmem:[%s1556 + $0x30] sm:$0xff]
      %v1564 = vld [vmem:[%s1556 + $0x38] sm:$0xff]
      %1566 = vset.pattern.permute.xlu0 0
      %1567 = vperm.xlu0 %1566, %v1557
      %v1568 = vpop.permute.xlu0 %1567
      %1571 = vset.pattern.permute.xlu0 0
      %1572 = vperm.xlu0 %1571, %v1558
      %v1573 = vpop.permute.xlu0 %1572
      %1576 = vset.pattern.permute.xlu0 0
      %1577 = vperm.xlu0 %1576, %v1559
      %v1578 = vpop.permute.xlu0 %1577
      %1581 = vset.pattern.permute.xlu0 0
      %1582 = vperm.xlu0 %1581, %v1560
      %v1583 = vpop.permute.xlu0 %1582
      %1586 = vset.pattern.permute.xlu0 0
      %1587 = vperm.xlu0 %1586, %v1561
      %v1588 = vpop.permute.xlu0 %1587
      %1591 = vset.pattern.permute.xlu0 0
      %1592 = vperm.xlu0 %1591, %v1562
      %v1593 = vpop.permute.xlu0 %1592
      %1596 = vset.pattern.permute.xlu0 0
      %1597 = vperm.xlu0 %1596, %v1563
      %v1598 = vpop.permute.xlu0 %1597
      %1601 = vset.pattern.permute.xlu0 0
      %1602 = vperm.xlu0 %1601, %v1564
      %v1603 = vpop.permute.xlu0 %1602
      %v1605 = vadd.f32 %v1555, %v1568
      %v1606 = vadd.f32 %v1535, %v1573
      %v1607 = vadd.f32 %v1537, %v1578
      %v1608 = vadd.f32 %v1539, %v1583
      %v1609 = vadd.f32 %v1541, %v1588
      %v1610 = vadd.f32 %v1543, %v1593
      %v1611 = vadd.f32 %v1545, %v1598
      %v1612 = vadd.f32 %v1546, %v1603
      %v1613 = vmax.f32 %v1522, %v1605
      %v1614 = vmax.f32 %v1523, %v1606
      %v1615 = vmax.f32 %v1524, %v1607
      %v1616 = vmax.f32 %v1525, %v1608
      %v1617 = vmax.f32 %v1526, %v1609
      %v1618 = vmax.f32 %v1527, %v1610
      %v1619 = vmax.f32 %v1528, %v1611
      %v1620 = vmax.f32 %v1529, %v1612
      %s1621 = scalar_lea.vmem %s5, 192
      %v1622 = vld [vmem:[%s1621] sm:$0xff]
      %v1623 = vld [vmem:[%s1621 + $0x8] sm:$0xff]
      %v1624 = vld [vmem:[%s1621 + $0x10] sm:$0xff]
      %v1625 = vld [vmem:[%s1621 + $0x18] sm:$0xff]
      %v1626 = vld [vmem:[%s1621 + $0x20] sm:$0xff]
      %v1627 = vld [vmem:[%s1621 + $0x28] sm:$0xff]
      %v1628 = vld [vmem:[%s1621 + $0x30] sm:$0xff]
      %v1629 = vld [vmem:[%s1621 + $0x38] sm:$0xff]
      %1631 = vset.pattern.permute.xlu0 0
      %1632 = vperm.xlu0 %1631, %v1622
      %v1633 = vpop.permute.xlu0 %1632
      %1636 = vset.pattern.permute.xlu0 0
      %1637 = vperm.xlu0 %1636, %v1623
      %v1638 = vpop.permute.xlu0 %1637
      %1641 = vset.pattern.permute.xlu0 0
      %1642 = vperm.xlu0 %1641, %v1624
      %v1643 = vpop.permute.xlu0 %1642
      %1646 = vset.pattern.permute.xlu0 0
      %1647 = vperm.xlu0 %1646, %v1625
      %v1648 = vpop.permute.xlu0 %1647
      %1651 = vset.pattern.permute.xlu0 0
      %1652 = vperm.xlu0 %1651, %v1626
      %v1653 = vpop.permute.xlu0 %1652
      %1656 = vset.pattern.permute.xlu0 0
      %1657 = vperm.xlu0 %1656, %v1627
      %v1658 = vpop.permute.xlu0 %1657
      %1661 = vset.pattern.permute.xlu0 0
      %1662 = vperm.xlu0 %1661, %v1628
      %v1663 = vpop.permute.xlu0 %1662
      %1666 = vset.pattern.permute.xlu0 0
      %1667 = vperm.xlu0 %1666, %v1629
      %v1668 = vpop.permute.xlu0 %1667
      %v1670 = vadd.f32 %v1400, %v1633
      %v1671 = vadd.f32 %v1383, %v1638
      %v1672 = vadd.f32 %v1385, %v1643
      %v1673 = vadd.f32 %v1387, %v1648
      %v1674 = vadd.f32 %v1389, %v1653
      %v1675 = vadd.f32 %v1391, %v1658
      %v1676 = vadd.f32 %v1392, %v1663
      %v1677 = vadd.f32 %v1372, %v1668
      %v1678 = vmax.f32 %v1613, %v1670
      %v1679 = vmax.f32 %v1614, %v1671
      %v1680 = vmax.f32 %v1615, %v1672
      %v1681 = vmax.f32 %v1616, %v1673
      %v1682 = vmax.f32 %v1617, %v1674
      %v1683 = vmax.f32 %v1618, %v1675
      %v1684 = vmax.f32 %v1619, %v1676
      %v1685 = vmax.f32 %v1620, %v1677
      %s1686 = scalar_lea.vmem %s5, 320
      %v1687 = vld [vmem:[%s1686] sm:$0xff]
      %v1688 = vld [vmem:[%s1686 + $0x8] sm:$0xff]
      %v1689 = vld [vmem:[%s1686 + $0x10] sm:$0xff]
      %v1690 = vld [vmem:[%s1686 + $0x18] sm:$0xff]
      %v1691 = vld [vmem:[%s1686 + $0x20] sm:$0xff]
      %v1692 = vld [vmem:[%s1686 + $0x28] sm:$0xff]
      %v1693 = vld [vmem:[%s1686 + $0x30] sm:$0xff]
      %v1694 = vld [vmem:[%s1686 + $0x38] sm:$0xff]
      %1696 = vset.pattern.permute.xlu0 0
      %1697 = vperm.xlu0 %1696, %v1687
      %v1698 = vpop.permute.xlu0 %1697
      %1701 = vset.pattern.permute.xlu0 0
      %1702 = vperm.xlu0 %1701, %v1688
      %v1703 = vpop.permute.xlu0 %1702
      %1706 = vset.pattern.permute.xlu0 0
      %1707 = vperm.xlu0 %1706, %v1689
      %v1708 = vpop.permute.xlu0 %1707
      %1711 = vset.pattern.permute.xlu0 0
      %1712 = vperm.xlu0 %1711, %v1690
      %v1713 = vpop.permute.xlu0 %1712
      %1716 = vset.pattern.permute.xlu0 0
      %1717 = vperm.xlu0 %1716, %v1691
      %v1718 = vpop.permute.xlu0 %1717
      %1721 = vset.pattern.permute.xlu0 0
      %1722 = vperm.xlu0 %1721, %v1692
      %v1723 = vpop.permute.xlu0 %1722
      %1726 = vset.pattern.permute.xlu0 0
      %1727 = vperm.xlu0 %1726, %v1693
      %v1728 = vpop.permute.xlu0 %1727
      %1731 = vset.pattern.permute.xlu0 0
      %1732 = vperm.xlu0 %1731, %v1694
      %v1733 = vpop.permute.xlu0 %1732
      %v1735 = vadd.f32 %v1535, %v1698
      %v1736 = vadd.f32 %v1537, %v1703
      %v1737 = vadd.f32 %v1539, %v1708
      %v1738 = vadd.f32 %v1541, %v1713
      %v1739 = vadd.f32 %v1543, %v1718
      %v1740 = vadd.f32 %v1545, %v1723
      %v1741 = vadd.f32 %v1546, %v1728
      %v1742 = vadd.f32 %v1555, %v1733
      %v1743 = vmax.f32 %v1678, %v1735
      %v1744 = vmax.f32 %v1679, %v1736
      %v1745 = vmax.f32 %v1680, %v1737
      %v1746 = vmax.f32 %v1681, %v1738
      %v1747 = vmax.f32 %v1682, %v1739
      %v1748 = vmax.f32 %v1683, %v1740
      %v1749 = vmax.f32 %v1684, %v1741
      %v1750 = vmax.f32 %v1685, %v1742
      %s1751 = scalar_lea.vmem %s5, 384
      %v1752 = vld [vmem:[%s1751] sm:$0xff]
      %v1753 = vld [vmem:[%s1751 + $0x8] sm:$0xff]
      %v1754 = vld [vmem:[%s1751 + $0x10] sm:$0xff]
      %v1755 = vld [vmem:[%s1751 + $0x18] sm:$0xff]
      %v1756 = vld [vmem:[%s1751 + $0x20] sm:$0xff]
      %v1757 = vld [vmem:[%s1751 + $0x28] sm:$0xff]
      %v1758 = vld [vmem:[%s1751 + $0x30] sm:$0xff]
      %v1759 = vld [vmem:[%s1751 + $0x38] sm:$0xff]
      %1761 = vset.pattern.permute.xlu0 0
      %1762 = vperm.xlu0 %1761, %v1752
      %v1763 = vpop.permute.xlu0 %1762
      %1766 = vset.pattern.permute.xlu0 0
      %1767 = vperm.xlu0 %1766, %v1753
      %v1768 = vpop.permute.xlu0 %1767
      %1771 = vset.pattern.permute.xlu0 0
      %1772 = vperm.xlu0 %1771, %v1754
      %v1773 = vpop.permute.xlu0 %1772
      %1776 = vset.pattern.permute.xlu0 0
      %1777 = vperm.xlu0 %1776, %v1755
      %v1778 = vpop.permute.xlu0 %1777
      %1781 = vset.pattern.permute.xlu0 0
      %1782 = vperm.xlu0 %1781, %v1756
      %v1783 = vpop.permute.xlu0 %1782
      %1786 = vset.pattern.permute.xlu0 0
      %1787 = vperm.xlu0 %1786, %v1757
      %v1788 = vpop.permute.xlu0 %1787
      %1791 = vset.pattern.permute.xlu0 0
      %1792 = vperm.xlu0 %1791, %v1758
      %v1793 = vpop.permute.xlu0 %1792
      %1796 = vset.pattern.permute.xlu0 0
      %1797 = vperm.xlu0 %1796, %v1759
      %v1798 = vpop.permute.xlu0 %1797
      %v1800 = vadd.f32 %v1383, %v1763
      %v1801 = vadd.f32 %v1385, %v1768
      %v1802 = vadd.f32 %v1387, %v1773
      %v1803 = vadd.f32 %v1389, %v1778
      %v1804 = vadd.f32 %v1391, %v1783
      %v1805 = vadd.f32 %v1392, %v1788
      %v1806 = vadd.f32 %v1372, %v1793
      %v1807 = vadd.f32 %v1400, %v1798
      %v1808 = vmax.f32 %v1743, %v1800
      %v1809 = vmax.f32 %v1744, %v1801
      %v1810 = vmax.f32 %v1745, %v1802
      %v1811 = vmax.f32 %v1746, %v1803
      %v1812 = vmax.f32 %v1747, %v1804
      %v1813 = vmax.f32 %v1748, %v1805
      %v1814 = vmax.f32 %v1749, %v1806
      %v1815 = vmax.f32 %v1750, %v1807
      %s1816 = scalar_lea.vmem %s5, 448
      %v1817 = vld [vmem:[%s1816] sm:$0xff]
      %v1818 = vld [vmem:[%s1816 + $0x8] sm:$0xff]
      %v1819 = vld [vmem:[%s1816 + $0x10] sm:$0xff]
      %v1820 = vld [vmem:[%s1816 + $0x18] sm:$0xff]
      %v1821 = vld [vmem:[%s1816 + $0x20] sm:$0xff]
      %v1822 = vld [vmem:[%s1816 + $0x28] sm:$0xff]
      %v1823 = vld [vmem:[%s1816 + $0x30] sm:$0xff]
      %v1824 = vld [vmem:[%s1816 + $0x38] sm:$0xff]
      %1826 = vset.pattern.permute.xlu0 0
      %1827 = vperm.xlu0 %1826, %v1817
      %v1828 = vpop.permute.xlu0 %1827
      %1831 = vset.pattern.permute.xlu0 0
      %1832 = vperm.xlu0 %1831, %v1818
      %v1833 = vpop.permute.xlu0 %1832
      %1836 = vset.pattern.permute.xlu0 0
      %1837 = vperm.xlu0 %1836, %v1819
      %v1838 = vpop.permute.xlu0 %1837
      %1841 = vset.pattern.permute.xlu0 0
      %1842 = vperm.xlu0 %1841, %v1820
      %v1843 = vpop.permute.xlu0 %1842
      %1846 = vset.pattern.permute.xlu0 0
      %1847 = vperm.xlu0 %1846, %v1821
      %v1848 = vpop.permute.xlu0 %1847
      %1851 = vset.pattern.permute.xlu0 0
      %1852 = vperm.xlu0 %1851, %v1822
      %v1853 = vpop.permute.xlu0 %1852
      %1856 = vset.pattern.permute.xlu0 0
      %1857 = vperm.xlu0 %1856, %v1823
      %v1858 = vpop.permute.xlu0 %1857
      %1861 = vset.pattern.permute.xlu0 0
      %1862 = vperm.xlu0 %1861, %v1824
      %v1863 = vpop.permute.xlu0 %1862
      %v1865 = vadd.f32 %v1360, %v1828
      %v1866 = vadd.f32 %v1361, %v1833
      %v1867 = vadd.f32 %v1362, %v1838
      %v1868 = vadd.f32 %v1363, %v1843
      %v1869 = vadd.f32 %v1364, %v1848
      %v1870 = vadd.f32 %v1365, %v1853
      %v1871 = vadd.f32 %v1366, %v1858
      %v1872 = vadd.f32 %v1359, %v1863
      %v1873 = vmax.f32 %v1808, %v1865
      %v1874 = vmax.f32 %v1809, %v1866
      %v1875 = vmax.f32 %v1810, %v1867
      %v1876 = vmax.f32 %v1811, %v1868
      %v1877 = vmax.f32 %v1812, %v1869
      %v1878 = vmax.f32 %v1813, %v1870
      %v1879 = vmax.f32 %v1814, %v1871
      %v1880 = vmax.f32 %v1815, %v1872
      %s1881 = scalar_lea.vmem %s5, 512
      %v1882 = vld [vmem:[%s1881] sm:$0xff]
      %v1883 = vld [vmem:[%s1881 + $0x8] sm:$0xff]
      %v1884 = vld [vmem:[%s1881 + $0x10] sm:$0xff]
      %v1885 = vld [vmem:[%s1881 + $0x18] sm:$0xff]
      %v1886 = vld [vmem:[%s1881 + $0x20] sm:$0xff]
      %v1887 = vld [vmem:[%s1881 + $0x28] sm:$0xff]
      %v1888 = vld [vmem:[%s1881 + $0x30] sm:$0xff]
      %v1889 = vld [vmem:[%s1881 + $0x38] sm:$0xff]
      %1891 = vset.pattern.permute.xlu0 0
      %1892 = vperm.xlu0 %1891, %v1882
      %v1893 = vpop.permute.xlu0 %1892
      %1896 = vset.pattern.permute.xlu0 0
      %1897 = vperm.xlu0 %1896, %v1883
      %v1898 = vpop.permute.xlu0 %1897
      %1901 = vset.pattern.permute.xlu0 0
      %1902 = vperm.xlu0 %1901, %v1884
      %v1903 = vpop.permute.xlu0 %1902
      %1906 = vset.pattern.permute.xlu0 0
      %1907 = vperm.xlu0 %1906, %v1885
      %v1908 = vpop.permute.xlu0 %1907
      %1911 = vset.pattern.permute.xlu0 0
      %1912 = vperm.xlu0 %1911, %v1886
      %v1913 = vpop.permute.xlu0 %1912
      %1916 = vset.pattern.permute.xlu0 0
      %1917 = vperm.xlu0 %1916, %v1887
      %v1918 = vpop.permute.xlu0 %1917
      %1921 = vset.pattern.permute.xlu0 0
      %1922 = vperm.xlu0 %1921, %v1888
      %v1923 = vpop.permute.xlu0 %1922
      %1926 = vset.pattern.permute.xlu0 0
      %1927 = vperm.xlu0 %1926, %v1889
      %v1928 = vpop.permute.xlu0 %1927
      %v1930 = vadd.f32 %v1537, %v1893
      %v1931 = vadd.f32 %v1539, %v1898
      %v1932 = vadd.f32 %v1541, %v1903
      %v1933 = vadd.f32 %v1543, %v1908
      %v1934 = vadd.f32 %v1545, %v1913
      %v1935 = vadd.f32 %v1546, %v1918
      %v1936 = vadd.f32 %v1555, %v1923
      %v1937 = vadd.f32 %v1535, %v1928
      %v1938 = vmax.f32 %v1873, %v1930
      %v1939 = vmax.f32 %v1874, %v1931
      %v1940 = vmax.f32 %v1875, %v1932
      %v1941 = vmax.f32 %v1876, %v1933
      %v1942 = vmax.f32 %v1877, %v1934
      %v1943 = vmax.f32 %v1878, %v1935
      %v1944 = vmax.f32 %v1879, %v1936
      %v1945 = vmax.f32 %v1880, %v1937
      %v1946 = vld [vmem:[%s6] sm:$0xf]
      %v1947 = vld [vmem:[%s6 + $0x4] sm:$0xf]
      %v1948 = vpack.c.bf16 %v1939, %v1938
      %v1949 = vpack.c.bf16 %v1941, %v1940
      %v1950 = vpack.c.bf16 %v1943, %v1942
      %v1951 = vpack.c.bf16 %v1945, %v1944
      %v1954 = vunpack.c.l.b16 %v1946
      %v1955 = vunpack.c.l.b16 %v1947
      %v1956 = vpack.c.b16 %v1955, %v1954
      %vm1957 = vcmask 523264
      %v1959 = vsel %vm1957, %v1956, 0
      %1961 = vmatpush.bf16.msra.mxu0 0
      %1962 = vmatpush.bf16.msra.mxu0 0
      %1963 = vmatpush.bf16.msra.mxu0 0
      %1964 = vmatpush.bf16.msra.mxu0 0
      %1965 = vmatpush.bf16.msra.mxu0 %v1951
      %1966 = vmatpush.bf16.msra.mxu0 %v1950
      %1967 = vmatpush.bf16.msra.mxu0 %v1949
      %1968 = vmatpush.bf16.msra.mxu0 %v1948
      %1969 = vmatmul.bf16.gmra.mxu0 %v1959
      %v1970 = vpop.f32.mrf.mxu0
      %v1971 = vadd.f32 0.0, %v1970
      %v1972 = vpop.f32.mrf.mxu0
      %v1973 = vadd.f32 0.0, %v1972
      %1974 = vdwg.mxu0
      %v1975 = vld [vmem:[%s7] sm:$0xff]
      %v1976 = vld [vmem:[%s7 + $0x8] sm:$0xff]
      %s1977 = scalar_lea.vmem %s7, 16
      %v1978 = vld [vmem:[%s1977] sm:$0xff]
      %v1979 = vld [vmem:[%s1977 + $0x8] sm:$0xff]
      %s1980 = scalar_lea.vmem %s7, 32
      %v1981 = vld [vmem:[%s1980] sm:$0xff]
      %v1982 = vld [vmem:[%s1980 + $0x8] sm:$0xff]
      %s1983 = scalar_lea.vmem %s7, 48
      %v1984 = vld [vmem:[%s1983] sm:$0xff]
      %v1985 = vld [vmem:[%s1983 + $0x8] sm:$0xff]
      %s1986 = scalar_lea.vmem %s7, 64
      %v1987 = vld [vmem:[%s1986] sm:$0xff]
      %v1988 = vld [vmem:[%s1986 + $0x8] sm:$0xff]
      %s1989 = scalar_lea.vmem %s7, 80
      %v1990 = vld [vmem:[%s1989] sm:$0xff]
      %v1991 = vld [vmem:[%s1989 + $0x8] sm:$0xff]
      %s1992 = scalar_lea.vmem %s7, 96
      %v1993 = vld [vmem:[%s1992] sm:$0xff]
      %v1994 = vld [vmem:[%s1992 + $0x8] sm:$0xff]
      %s1995 = scalar_lea.vmem %s7, 112
      %v1996 = vld [vmem:[%s1995] sm:$0xff]
      %v1997 = vld [vmem:[%s1995 + $0x8] sm:$0xff]
      %s1998 = scalar_lea.vmem %s7, 128
      %v1999 = vld [vmem:[%s1998] sm:$0xff]
      %v2000 = vld [vmem:[%s1998 + $0x8] sm:$0xff]
      %v2002 = vrot.slane %v1973, 3
      %vm2005 = vcmask 1044480
      %v2006 = vrot.slane %v1971, 3
      %v2007 = vsel %vm2005, %v2006, %v2002
      %v2010 = vsel %vm2005, %v2002, %v2006
      %2012 = vset.pattern.permute.xlu0 0
      %2013 = vperm.xlu0 %2012, %v1975
      %v2014 = vpop.permute.xlu0 %2013
      %2017 = vset.pattern.permute.xlu0 0
      %2018 = vperm.xlu0 %2017, %v1976
      %v2019 = vpop.permute.xlu0 %2018
      %v2021 = vmul.f32 %v2010, %v2014
      %v2022 = vmul.f32 %v2007, %v2019
      %v2023 = vrot.slane %v1973, 4
      %vm2025 = vcmask 1043456
      %v2026 = vrot.slane %v1971, 4
      %v2027 = vsel %vm2025, %v2026, %v2023
      %v2030 = vsel %vm2025, %v2023, %v2026
      %2032 = vset.pattern.permute.xlu0 0
      %2033 = vperm.xlu0 %2032, %v1978
      %v2034 = vpop.permute.xlu0 %2033
      %2037 = vset.pattern.permute.xlu0 0
      %2038 = vperm.xlu0 %2037, %v1979
      %v2039 = vpop.permute.xlu0 %2038
      %v2041 = vmul.f32 %v2030, %v2034
      %v2042 = vmul.f32 %v2027, %v2039
      %v2043 = vrot.slane %v1973, 5
      %vm2045 = vcmask 1042432
      %v2046 = vrot.slane %v1971, 5
      %v2047 = vsel %vm2045, %v2046, %v2043
      %v2050 = vsel %vm2045, %v2043, %v2046
      %2052 = vset.pattern.permute.xlu0 0
      %2053 = vperm.xlu0 %2052, %v1981
      %v2054 = vpop.permute.xlu0 %2053
      %2057 = vset.pattern.permute.xlu0 0
      %2058 = vperm.xlu0 %2057, %v1982
      %v2059 = vpop.permute.xlu0 %2058
      %v2061 = vmul.f32 %v2050, %v2054
      %v2062 = vmul.f32 %v2047, %v2059
      %v2063 = vrot.slane %v1973, 7
      %v2065 = vrot.slane %v1971, 7
      %v2066 = vsel %vm1369, %v2065, %v2063
      %v2069 = vsel %vm1369, %v2063, %v2065
      %2071 = vset.pattern.permute.xlu0 0
      %2072 = vperm.xlu0 %2071, %v1984
      %v2073 = vpop.permute.xlu0 %2072
      %2076 = vset.pattern.permute.xlu0 0
      %2077 = vperm.xlu0 %2076, %v1985
      %v2078 = vpop.permute.xlu0 %2077
      %v2080 = vmul.f32 %v2069, %v2073
      %v2081 = vmul.f32 %v2066, %v2078
      %2083 = vset.pattern.permute.xlu0 0
      %2084 = vperm.xlu0 %2083, %v1987
      %v2085 = vpop.permute.xlu0 %2084
      %2088 = vset.pattern.permute.xlu0 0
      %2089 = vperm.xlu0 %2088, %v1988
      %v2090 = vpop.permute.xlu0 %2089
      %v2092 = vmul.f32 %v1971, %v2085
      %v2093 = vmul.f32 %v1973, %v2090
      %v2094 = vrot.slane %v1971, 1
      %v2095 = vrot.slane %v1973, 1
      %v2096 = vsel %vm1532, %v2094, %v2095
      %v2100 = vsel %vm1532, %v2095, %v2094
      %2102 = vset.pattern.permute.xlu0 0
      %2103 = vperm.xlu0 %2102, %v1990
      %v2104 = vpop.permute.xlu0 %2103
      %2107 = vset.pattern.permute.xlu0 0
      %2108 = vperm.xlu0 %2107, %v1991
      %v2109 = vpop.permute.xlu0 %2108
      %v2111 = vmul.f32 %v2096, %v2104
      %v2112 = vmul.f32 %v2100, %v2109
      %2114 = vset.pattern.permute.xlu0 0
      %2115 = vperm.xlu0 %2114, %v1993
      %v2116 = vpop.permute.xlu0 %2115
      %2119 = vset.pattern.permute.xlu0 0
      %2120 = vperm.xlu0 %2119, %v1994
      %v2121 = vpop.permute.xlu0 %2120
      %v2123 = vmul.f32 %v2007, %v2116
      %v2124 = vmul.f32 %v2010, %v2121
      %2126 = vset.pattern.permute.xlu0 0
      %2127 = vperm.xlu0 %2126, %v1996
      %v2128 = vpop.permute.xlu0 %2127
      %2131 = vset.pattern.permute.xlu0 0
      %2132 = vperm.xlu0 %2131, %v1997
      %v2133 = vpop.permute.xlu0 %2132
      %v2135 = vmul.f32 %v2027, %v2128
      %v2136 = vmul.f32 %v2030, %v2133
      %2138 = vset.pattern.permute.xlu0 0
      %2139 = vperm.xlu0 %2138, %v1999
      %v2140 = vpop.permute.xlu0 %2139
      %2143 = vset.pattern.permute.xlu0 0
      %2144 = vperm.xlu0 %2143, %v2000
      %v2145 = vpop.permute.xlu0 %2144
      %v2147 = vmul.f32 %v2047, %v2140
      %v2148 = vmul.f32 %v2050, %v2145
      %2151 = vrot.lane.b32.xlu0 %v2041, 8
      %v2152 = vpop.permute.xlu0 %2151
      %2153 = vrot.lane.b32.xlu0 %v2042, 8
      %v2154 = vpop.permute.xlu0 %2153
      %2159 = vrot.lane.b32.xlu0 %v2061, 16
      %v2160 = vpop.permute.xlu0 %2159
      %2161 = vrot.lane.b32.xlu0 %v2062, 16
      %v2162 = vpop.permute.xlu0 %2161
      %2167 = vrot.lane.b32.xlu0 %v2080, 24
      %v2168 = vpop.permute.xlu0 %2167
      %2169 = vrot.lane.b32.xlu0 %v2081, 24
      %v2170 = vpop.permute.xlu0 %2169
      %2175 = vrot.lane.b32.xlu0 %v2092, 32
      %v2176 = vpop.permute.xlu0 %2175
      %2177 = vrot.lane.b32.xlu0 %v2093, 32
      %v2178 = vpop.permute.xlu0 %2177
      %2183 = vrot.lane.b32.xlu0 %v2111, 40
      %v2184 = vpop.permute.xlu0 %2183
      %2185 = vrot.lane.b32.xlu0 %v2112, 40
      %v2186 = vpop.permute.xlu0 %2185
      %2191 = vrot.lane.b32.xlu0 %v2123, 48
      %v2192 = vpop.permute.xlu0 %2191
      %2193 = vrot.lane.b32.xlu0 %v2124, 48
      %v2194 = vpop.permute.xlu0 %2193
      %2199 = vrot.lane.b32.xlu0 %v2135, 56
      %v2200 = vpop.permute.xlu0 %2199
      %2201 = vrot.lane.b32.xlu0 %v2136, 56
      %v2202 = vpop.permute.xlu0 %2201
      %2207 = vrot.lane.b32.xlu0 %v2147, 64
      %v2208 = vpop.permute.xlu0 %2207
      %2209 = vrot.lane.b32.xlu0 %v2148, 64
      %v2210 = vpop.permute.xlu0 %2209
      %vm2213 = vcmask 64512
      %v2214 = vsel %vm2213, %v2021, %v2152
      %v2215 = vsel %vm2213, %v2022, %v2154
      %vm2216 = vcmask 130048
      %v2217 = vsel %vm2216, %v2214, %v2160
      %v2218 = vsel %vm2216, %v2215, %v2162
      %vm2219 = vcmask 195584
      %v2220 = vsel %vm2219, %v2217, %v2168
      %v2221 = vsel %vm2219, %v2218, %v2170
      %vm2222 = vcmask 261120
      %v2223 = vsel %vm2222, %v2220, %v2176
      %v2224 = vsel %vm2222, %v2221, %v2178
      %vm2225 = vcmask 326656
      %v2226 = vsel %vm2225, %v2223, %v2184
      %v2227 = vsel %vm2225, %v2224, %v2186
      %vm2228 = vcmask 392192
      %v2229 = vsel %vm2228, %v2226, %v2192
      %v2230 = vsel %vm2228, %v2227, %v2194
      %vm2231 = vcmask 457728
      %v2232 = vsel %vm2231, %v2229, %v2200
      %v2233 = vsel %vm2231, %v2230, %v2202
      %v2234 = vsel %vm1957, %v2232, %v2208
      %v2235 = vsel %vm1957, %v2233, %v2210
      %vm2236 = vcmask 588800
      %v2237 = vsel %vm2236, %v2234, 0.0
      %v2238 = vsel %vm2236, %v2235, 0.0
      %v2239 = vpack.c.bf16 %v2238, %v2237
      %v2240 = vld [vmem:[%s13] sm:$0xf]
      %v2241 = vld [vmem:[%s13 + $0x4] sm:$0xf]
      %v2242 = vld [vmem:[%s13 + $0x8] sm:$0xf]
      %v2243 = vld [vmem:[%s13 + $0xc] sm:$0xf]
      %v2244 = vld [vmem:[%s13 + $0x10] sm:$0xf]
      %v2245 = vld [vmem:[%s13 + $0x14] sm:$0xf]
      %v2246 = vld [vmem:[%s13 + $0x18] sm:$0xf]
      %v2247 = vld [vmem:[%s13 + $0x1c] sm:$0xf]
      %v2248 = vld [vmem:[%s13 + $0x20] sm:$0xf]
      %v2249 = vld [vmem:[%s13 + $0x24] sm:$0xf]
      %v2250 = vld [vmem:[%s13 + $0x28] sm:$0xf]
      %v2251 = vld [vmem:[%s13 + $0x2c] sm:$0xf]
      %v2252 = vld [vmem:[%s13 + $0x30] sm:$0xf]
      %v2253 = vld [vmem:[%s13 + $0x34] sm:$0xf]
      %v2254 = vld [vmem:[%s13 + $0x38] sm:$0xf]
      %v2255 = vld [vmem:[%s13 + $0x3c] sm:$0xf]
      %v2272 = vunpack.c.l.b16 %v2240
      %v2273 = vunpack.c.l.b16 %v2241
      %v2274 = vunpack.c.l.b16 %v2242
      %v2275 = vunpack.c.l.b16 %v2243
      %v2276 = vunpack.c.l.b16 %v2244
      %v2277 = vunpack.c.l.b16 %v2245
      %v2278 = vunpack.c.l.b16 %v2246
      %v2279 = vunpack.c.l.b16 %v2247
      %v2280 = vunpack.c.l.b16 %v2248
      %v2281 = vunpack.c.l.b16 %v2249
      %v2282 = vunpack.c.l.b16 %v2250
      %v2283 = vunpack.c.l.b16 %v2251
      %v2284 = vunpack.c.l.b16 %v2252
      %v2285 = vunpack.c.l.b16 %v2253
      %v2286 = vunpack.c.l.b16 %v2254
      %v2287 = vunpack.c.l.b16 %v2255
      %v2288 = vpack.c.b16 %v2273, %v2272
      %v2289 = vpack.c.b16 %v2275, %v2274
      %v2290 = vpack.c.b16 %v2277, %v2276
      %v2291 = vpack.c.b16 %v2279, %v2278
      %v2292 = vpack.c.b16 %v2281, %v2280
      %v2293 = vpack.c.b16 %v2283, %v2282
      %v2294 = vpack.c.b16 %v2285, %v2284
      %v2295 = vpack.c.b16 %v2287, %v2286
      %2304 = vmatpush.bf16.msra.mxu0 %v2295
      %2305 = vmatpush.bf16.msra.mxu0 %v2294
      %2306 = vmatpush.bf16.msra.mxu0 %v2293
      %2307 = vmatpush.bf16.msra.mxu0 %v2292
      %2308 = vmatpush.bf16.msra.mxu0 %v2291
      %2309 = vmatpush.bf16.msra.mxu0 %v2290
      %2310 = vmatpush.bf16.msra.mxu0 %v2289
      %2311 = vmatpush.bf16.msra.mxu0 %v2288
      %2312 = vmatmul.bf16.gmra.mxu0 %v2239
      %v2313 = vpop.f32.mrf.mxu0
      %v2314 = vadd.f32 0.0, %v2313
      %v2315 = vpop.f32.mrf.mxu0
      %v2316 = vadd.f32 0.0, %v2315
      %2317 = vdwg.mxu0
      %v2318 = vld [vmem:[%s14] sm:$0x1]
      %v2320 = vperm.slane %v2318, 0
      %v2322 = vmul.f32 %v2314, %v2320
      %v2323 = vmul.f32 %v2316, %v2320
      %v2324 = vld [vmem:[%s15] sm:$0x1]
      %v2326 = vperm.slane %v2324, 0
      %v2328 = vadd.f32 %v2322, %v2326
      %v2329 = vadd.f32 %v2323, %v2326
      %v2330 = vmax.f32 %v2328, 0.0
      %v2331 = vmax.f32 %v2329, 0.0
      %v2333 = vrot.slane %v2331, 3
      %v2336 = vrot.slane %v2330, 3
      %v2337 = vsel %vm2005, %v2336, %v2333
      %v2340 = vsel %vm2005, %v2333, %v2336
      %v2341 = vmul.f32 %v2340, %v2014
      %v2342 = vmul.f32 %v2337, %v2019
      %v2343 = vrot.slane %v2331, 4
      %v2345 = vrot.slane %v2330, 4
      %v2346 = vsel %vm2025, %v2345, %v2343
      %v2349 = vsel %vm2025, %v2343, %v2345
      %v2350 = vmul.f32 %v2349, %v2034
      %v2351 = vmul.f32 %v2346, %v2039
      %v2352 = vrot.slane %v2331, 5
      %v2354 = vrot.slane %v2330, 5
      %v2355 = vsel %vm2045, %v2354, %v2352
      %v2358 = vsel %vm2045, %v2352, %v2354
      %v2359 = vmul.f32 %v2358, %v2054
      %v2360 = vmul.f32 %v2355, %v2059
      %v2361 = vrot.slane %v2331, 7
      %v2363 = vrot.slane %v2330, 7
      %v2364 = vsel %vm1369, %v2363, %v2361
      %v2367 = vsel %vm1369, %v2361, %v2363
      %v2368 = vmul.f32 %v2367, %v2073
      %v2369 = vmul.f32 %v2364, %v2078
      %v2370 = vmul.f32 %v2330, %v2085
      %v2371 = vmul.f32 %v2331, %v2090
      %v2372 = vrot.slane %v2330, 1
      %v2373 = vrot.slane %v2331, 1
      %v2374 = vsel %vm1532, %v2372, %v2373
      %v2378 = vsel %vm1532, %v2373, %v2372
      %v2379 = vmul.f32 %v2374, %v2104
      %v2380 = vmul.f32 %v2378, %v2109
      %v2381 = vmul.f32 %v2337, %v2116
      %v2382 = vmul.f32 %v2340, %v2121
      %v2383 = vmul.f32 %v2346, %v2128
      %v2384 = vmul.f32 %v2349, %v2133
      %v2385 = vmul.f32 %v2355, %v2140
      %v2386 = vmul.f32 %v2358, %v2145
      %2389 = vrot.lane.b32.xlu0 %v2350, 16
      %v2390 = vpop.permute.xlu0 %2389
      %2391 = vrot.lane.b32.xlu0 %v2351, 16
      %v2392 = vpop.permute.xlu0 %2391
      %2397 = vrot.lane.b32.xlu0 %v2359, 32
      %v2398 = vpop.permute.xlu0 %2397
      %2399 = vrot.lane.b32.xlu0 %v2360, 32
      %v2400 = vpop.permute.xlu0 %2399
      %2405 = vrot.lane.b32.xlu0 %v2368, 48
      %v2406 = vpop.permute.xlu0 %2405
      %2407 = vrot.lane.b32.xlu0 %v2369, 48
      %v2408 = vpop.permute.xlu0 %2407
      %2413 = vrot.lane.b32.xlu0 %v2370, 64
      %v2414 = vpop.permute.xlu0 %2413
      %2415 = vrot.lane.b32.xlu0 %v2371, 64
      %v2416 = vpop.permute.xlu0 %2415
      %2421 = vrot.lane.b32.xlu0 %v2379, 80
      %v2422 = vpop.permute.xlu0 %2421
      %2423 = vrot.lane.b32.xlu0 %v2380, 80
      %v2424 = vpop.permute.xlu0 %2423
      %2429 = vrot.lane.b32.xlu0 %v2381, 96
      %v2430 = vpop.permute.xlu0 %2429
      %2431 = vrot.lane.b32.xlu0 %v2382, 96
      %v2432 = vpop.permute.xlu0 %2431
      %2437 = vrot.lane.b32.xlu0 %v2383, 112
      %v2438 = vpop.permute.xlu0 %2437
      %2439 = vrot.lane.b32.xlu0 %v2384, 112
      %v2440 = vpop.permute.xlu0 %2439
      %v2443 = vsel %vm2216, %v2341, %v2390
      %v2444 = vsel %vm2216, %v2342, %v2392
      %v2445 = vsel %vm2222, %v2443, %v2398
      %v2446 = vsel %vm2222, %v2444, %v2400
      %v2447 = vsel %vm2228, %v2445, %v2406
      %v2448 = vsel %vm2228, %v2446, %v2408
      %v2449 = vsel %vm1957, %v2447, %v2414
      %v2450 = vsel %vm1957, %v2448, %v2416
      %vm2451 = vcmask 654336
      %v2452 = vsel %vm2451, %v2449, %v2422
      %v2453 = vsel %vm2451, %v2450, %v2424
      %vm2454 = vcmask 785408
      %v2455 = vsel %vm2454, %v2452, %v2430
      %v2456 = vsel %vm2454, %v2453, %v2432
      %vm2457 = vcmask 916480
      %v2458 = vsel %vm2457, %v2455, %v2438
      %v2459 = vsel %vm2457, %v2456, %v2440
      %v2460 = vsel %vm2216, %v2385, 0.0
      %v2461 = vsel %vm2216, %v2386, 0.0
      %v2462 = vpack.c.bf16 %v2459, %v2458
      %v2463 = vpack.c.bf16 %v2461, %v2460
      %v2464 = vld [vmem:[%s16] sm:$0xf]
      %v2465 = vld [vmem:[%s16 + $0x4] sm:$0xf]
      %v2466 = vld [vmem:[%s16 + $0x8] sm:$0xf]
      %v2467 = vld [vmem:[%s16 + $0xc] sm:$0xf]
      %v2468 = vld [vmem:[%s16 + $0x10] sm:$0xf]
      %v2469 = vld [vmem:[%s16 + $0x14] sm:$0xf]
      %v2470 = vld [vmem:[%s16 + $0x18] sm:$0xf]
      %v2471 = vld [vmem:[%s16 + $0x1c] sm:$0xf]
      %v2472 = vld [vmem:[%s16 + $0x20] sm:$0xf]
      %v2473 = vld [vmem:[%s16 + $0x24] sm:$0xf]
      %v2474 = vld [vmem:[%s16 + $0x28] sm:$0xf]
      %v2475 = vld [vmem:[%s16 + $0x2c] sm:$0xf]
      %v2476 = vld [vmem:[%s16 + $0x30] sm:$0xf]
      %v2477 = vld [vmem:[%s16 + $0x34] sm:$0xf]
      %v2478 = vld [vmem:[%s16 + $0x38] sm:$0xf]
      %v2479 = vld [vmem:[%s16 + $0x3c] sm:$0xf]
      %v2480 = vld [vmem:[%s16 + $0x40] sm:$0xf]
      %v2481 = vld [vmem:[%s16 + $0x44] sm:$0xf]
      %v2482 = vld [vmem:[%s16 + $0x48] sm:$0xf]
      %v2483 = vld [vmem:[%s16 + $0x4c] sm:$0xf]
      %v2484 = vld [vmem:[%s16 + $0x50] sm:$0xf]
      %v2485 = vld [vmem:[%s16 + $0x54] sm:$0xf]
      %v2486 = vld [vmem:[%s16 + $0x58] sm:$0xf]
      %v2487 = vld [vmem:[%s16 + $0x5c] sm:$0xf]
      %v2488 = vld [vmem:[%s16 + $0x60] sm:$0xf]
      %v2489 = vld [vmem:[%s16 + $0x64] sm:$0xf]
      %v2490 = vld [vmem:[%s16 + $0x68] sm:$0xf]
      %v2491 = vld [vmem:[%s16 + $0x6c] sm:$0xf]
      %v2492 = vld [vmem:[%s16 + $0x70] sm:$0xf]
      %v2493 = vld [vmem:[%s16 + $0x74] sm:$0xf]
      %v2494 = vld [vmem:[%s16 + $0x78] sm:$0xf]
      %v2495 = vld [vmem:[%s16 + $0x7c] sm:$0xf]
      %v2528 = vunpack.c.l.b16 %v2464
      %v2529 = vunpack.c.l.b16 %v2465
      %v2530 = vunpack.c.l.b16 %v2466
      %v2531 = vunpack.c.l.b16 %v2467
      %v2532 = vunpack.c.l.b16 %v2468
      %v2533 = vunpack.c.l.b16 %v2469
      %v2534 = vunpack.c.l.b16 %v2470
      %v2535 = vunpack.c.l.b16 %v2471
      %v2536 = vunpack.c.l.b16 %v2472
      %v2537 = vunpack.c.l.b16 %v2473
      %v2538 = vunpack.c.l.b16 %v2474
      %v2539 = vunpack.c.l.b16 %v2475
      %v2540 = vunpack.c.l.b16 %v2476
      %v2541 = vunpack.c.l.b16 %v2477
      %v2542 = vunpack.c.l.b16 %v2478
      %v2543 = vunpack.c.l.b16 %v2479
      %v2544 = vunpack.c.l.b16 %v2480
      %v2545 = vunpack.c.l.b16 %v2481
      %v2546 = vunpack.c.l.b16 %v2482
      %v2547 = vunpack.c.l.b16 %v2483
      %v2548 = vunpack.c.l.b16 %v2484
      %v2549 = vunpack.c.l.b16 %v2485
      %v2550 = vunpack.c.l.b16 %v2486
      %v2551 = vunpack.c.l.b16 %v2487
      %v2552 = vunpack.c.l.b16 %v2488
      %v2553 = vunpack.c.l.b16 %v2489
      %v2554 = vunpack.c.l.b16 %v2490
      %v2555 = vunpack.c.l.b16 %v2491
      %v2556 = vunpack.c.l.b16 %v2492
      %v2557 = vunpack.c.l.b16 %v2493
      %v2558 = vunpack.c.l.b16 %v2494
      %v2559 = vunpack.c.l.b16 %v2495
      %v2560 = vpack.c.b16 %v2529, %v2528
      %v2561 = vpack.c.b16 %v2531, %v2530
      %v2562 = vpack.c.b16 %v2533, %v2532
      %v2563 = vpack.c.b16 %v2535, %v2534
      %v2564 = vpack.c.b16 %v2537, %v2536
      %v2565 = vpack.c.b16 %v2539, %v2538
      %v2566 = vpack.c.b16 %v2541, %v2540
      %v2567 = vpack.c.b16 %v2543, %v2542
      %v2568 = vpack.c.b16 %v2545, %v2544
      %v2569 = vpack.c.b16 %v2547, %v2546
      %v2570 = vpack.c.b16 %v2549, %v2548
      %v2571 = vpack.c.b16 %v2551, %v2550
      %v2572 = vpack.c.b16 %v2553, %v2552
      %v2573 = vpack.c.b16 %v2555, %v2554
      %v2574 = vpack.c.b16 %v2557, %v2556
      %v2575 = vpack.c.b16 %v2559, %v2558
      %2592 = vmatpush.bf16.msra.mxu0 %v2567
      %2593 = vmatpush.bf16.msra.mxu0 %v2566
      %2594 = vmatpush.bf16.msra.mxu0 %v2565
      %2595 = vmatpush.bf16.msra.mxu0 %v2564
      %2596 = vmatpush.bf16.msra.mxu0 %v2563
      %2597 = vmatpush.bf16.msra.mxu0 %v2562
      %2598 = vmatpush.bf16.msra.mxu0 %v2561
      %2599 = vmatpush.bf16.msra.mxu0 %v2560
      %2600 = vmatmul.bf16.gmra.mxu0 %v2462
      %v2601 = vpop.f32.mrf.mxu0
      %v2602 = vadd.f32 0.0, %v2601
      %v2603 = vpop.f32.mrf.mxu0
      %v2604 = vadd.f32 0.0, %v2603
      %2605 = vdwg.mxu0
      %2606 = vmatpush.bf16.msra.mxu0 %v2575
      %2607 = vmatpush.bf16.msra.mxu0 %v2574
      %2608 = vmatpush.bf16.msra.mxu0 %v2573
      %2609 = vmatpush.bf16.msra.mxu0 %v2572
      %2610 = vmatpush.bf16.msra.mxu0 %v2571
      %2611 = vmatpush.bf16.msra.mxu0 %v2570
      %2612 = vmatpush.bf16.msra.mxu0 %v2569
      %2613 = vmatpush.bf16.msra.mxu0 %v2568
      %2614 = vmatmul.bf16.gmra.mxu0 %v2463
      %v2615 = vpop.f32.mrf.mxu0
      %v2616 = vadd.f32 %v2602, %v2615
      %v2617 = vpop.f32.mrf.mxu0
      %v2618 = vadd.f32 %v2604, %v2617
      %2619 = vdwg.mxu0
      %v2620 = vld [vmem:[%s17] sm:$0x1]
      %v2622 = vperm.slane %v2620, 0
      %v2624 = vmul.f32 %v2616, %v2622
      %v2625 = vmul.f32 %v2618, %v2622
      %v2626 = vld [vmem:[%s18] sm:$0x1]
      %v2628 = vperm.slane %v2626, 0
      %v2630 = vadd.f32 %v2624, %v2628
      %v2631 = vadd.f32 %v2625, %v2628
      %v2632 = vpack.c.bf16 %v1973, %v1971
      %v2633 = vld [vmem:[%s19] sm:$0xf]
      %v2634 = vld [vmem:[%s19 + $0x4] sm:$0xf]
      %v2635 = vld [vmem:[%s19 + $0x8] sm:$0xf]
      %v2636 = vld [vmem:[%s19 + $0xc] sm:$0xf]
      %v2637 = vld [vmem:[%s19 + $0x10] sm:$0xf]
      %v2638 = vld [vmem:[%s19 + $0x14] sm:$0xf]
      %v2639 = vld [vmem:[%s19 + $0x18] sm:$0xf]
      %v2640 = vld [vmem:[%s19 + $0x1c] sm:$0xf]
      %v2641 = vld [vmem:[%s19 + $0x20] sm:$0xf]
      %v2642 = vld [vmem:[%s19 + $0x24] sm:$0xf]
      %v2643 = vld [vmem:[%s19 + $0x28] sm:$0xf]
      %v2644 = vld [vmem:[%s19 + $0x2c] sm:$0xf]
      %v2645 = vld [vmem:[%s19 + $0x30] sm:$0xf]
      %v2646 = vld [vmem:[%s19 + $0x34] sm:$0xf]
      %v2647 = vld [vmem:[%s19 + $0x38] sm:$0xf]
      %v2648 = vld [vmem:[%s19 + $0x3c] sm:$0xf]
      %v2665 = vunpack.c.l.b16 %v2633
      %v2666 = vunpack.c.l.b16 %v2634
      %v2667 = vunpack.c.l.b16 %v2635
      %v2668 = vunpack.c.l.b16 %v2636
      %v2669 = vunpack.c.l.b16 %v2637
      %v2670 = vunpack.c.l.b16 %v2638
      %v2671 = vunpack.c.l.b16 %v2639
      %v2672 = vunpack.c.l.b16 %v2640
      %v2673 = vunpack.c.l.b16 %v2641
      %v2674 = vunpack.c.l.b16 %v2642
      %v2675 = vunpack.c.l.b16 %v2643
      %v2676 = vunpack.c.l.b16 %v2644
      %v2677 = vunpack.c.l.b16 %v2645
      %v2678 = vunpack.c.l.b16 %v2646
      %v2679 = vunpack.c.l.b16 %v2647
      %v2680 = vunpack.c.l.b16 %v2648
      %v2681 = vpack.c.b16 %v2666, %v2665
      %v2682 = vpack.c.b16 %v2668, %v2667
      %v2683 = vpack.c.b16 %v2670, %v2669
      %v2684 = vpack.c.b16 %v2672, %v2671
      %v2685 = vpack.c.b16 %v2674, %v2673
      %v2686 = vpack.c.b16 %v2676, %v2675
      %v2687 = vpack.c.b16 %v2678, %v2677
      %v2688 = vpack.c.b16 %v2680, %v2679
      %2697 = vmatpush.bf16.msra.mxu0 %v2688
      %2698 = vmatpush.bf16.msra.mxu0 %v2687
      %2699 = vmatpush.bf16.msra.mxu0 %v2686
      %2700 = vmatpush.bf16.msra.mxu0 %v2685
      %2701 = vmatpush.bf16.msra.mxu0 %v2684
      %2702 = vmatpush.bf16.msra.mxu0 %v2683
      %2703 = vmatpush.bf16.msra.mxu0 %v2682
      %2704 = vmatpush.bf16.msra.mxu0 %v2681
      %2705 = vmatmul.bf16.gmra.mxu0 %v2632
      %v2706 = vpop.f32.mrf.mxu0
      %v2707 = vadd.f32 0.0, %v2706
      %v2708 = vpop.f32.mrf.mxu0
      %v2709 = vadd.f32 0.0, %v2708
      %2710 = vdwg.mxu0
      %v2711 = vld [vmem:[%s20] sm:$0x1]
      %v2713 = vperm.slane %v2711, 0
      %v2715 = vmul.f32 %v2707, %v2713
      %v2716 = vmul.f32 %v2709, %v2713
      %v2717 = vld [vmem:[%s21] sm:$0x1]
      %v2719 = vperm.slane %v2717, 0
      %v2721 = vadd.f32 %v2715, %v2719
      %v2722 = vadd.f32 %v2716, %v2719
      %v2723 = vadd.f32 %v2630, %v2721
      %v2724 = vadd.f32 %v2631, %v2722
      %v2725 = vmax.f32 %v2723, 0.0
      %v2726 = vmax.f32 %v2724, 0.0
      %v2728 = vrot.slane %v2726, 3
      %v2731 = vrot.slane %v2725, 3
      %v2732 = vsel %vm2005, %v2731, %v2728
      %v2735 = vsel %vm2005, %v2728, %v2731
      %v2736 = vmul.f32 %v2735, %v2014
      %v2737 = vmul.f32 %v2732, %v2019
      %v2738 = vrot.slane %v2726, 4
      %v2740 = vrot.slane %v2725, 4
      %v2741 = vsel %vm2025, %v2740, %v2738
      %v2744 = vsel %vm2025, %v2738, %v2740
      %v2745 = vmul.f32 %v2744, %v2034
      %v2746 = vmul.f32 %v2741, %v2039
      %v2747 = vrot.slane %v2726, 5
      %v2749 = vrot.slane %v2725, 5
      %v2750 = vsel %vm2045, %v2749, %v2747
      %v2753 = vsel %vm2045, %v2747, %v2749
      %v2754 = vmul.f32 %v2753, %v2054
      %v2755 = vmul.f32 %v2750, %v2059
      %v2756 = vrot.slane %v2726, 7
      %v2758 = vrot.slane %v2725, 7
      %v2759 = vsel %vm1369, %v2758, %v2756
      %v2762 = vsel %vm1369, %v2756, %v2758
      %v2763 = vmul.f32 %v2762, %v2073
      %v2764 = vmul.f32 %v2759, %v2078
      %v2765 = vmul.f32 %v2725, %v2085
      %v2766 = vmul.f32 %v2726, %v2090
      %v2767 = vrot.slane %v2725, 1
      %v2768 = vrot.slane %v2726, 1
      %v2769 = vsel %vm1532, %v2767, %v2768
      %v2773 = vsel %vm1532, %v2768, %v2767
      %v2774 = vmul.f32 %v2769, %v2104
      %v2775 = vmul.f32 %v2773, %v2109
      %v2776 = vmul.f32 %v2732, %v2116
      %v2777 = vmul.f32 %v2735, %v2121
      %v2778 = vmul.f32 %v2741, %v2128
      %v2779 = vmul.f32 %v2744, %v2133
      %v2780 = vmul.f32 %v2750, %v2140
      %v2781 = vmul.f32 %v2753, %v2145
      %2784 = vrot.lane.b32.xlu0 %v2745, 16
      %v2785 = vpop.permute.xlu0 %2784
      %2786 = vrot.lane.b32.xlu0 %v2746, 16
      %v2787 = vpop.permute.xlu0 %2786
      %2792 = vrot.lane.b32.xlu0 %v2754, 32
      %v2793 = vpop.permute.xlu0 %2792
      %2794 = vrot.lane.b32.xlu0 %v2755, 32
      %v2795 = vpop.permute.xlu0 %2794
      %2800 = vrot.lane.b32.xlu0 %v2763, 48
      %v2801 = vpop.permute.xlu0 %2800
      %2802 = vrot.lane.b32.xlu0 %v2764, 48
      %v2803 = vpop.permute.xlu0 %2802
      %2808 = vrot.lane.b32.xlu0 %v2765, 64
      %v2809 = vpop.permute.xlu0 %2808
      %2810 = vrot.lane.b32.xlu0 %v2766, 64
      %v2811 = vpop.permute.xlu0 %2810
      %2816 = vrot.lane.b32.xlu0 %v2774, 80
      %v2817 = vpop.permute.xlu0 %2816
      %2818 = vrot.lane.b32.xlu0 %v2775, 80
      %v2819 = vpop.permute.xlu0 %2818
      %2824 = vrot.lane.b32.xlu0 %v2776, 96
      %v2825 = vpop.permute.xlu0 %2824
      %2826 = vrot.lane.b32.xlu0 %v2777, 96
      %v2827 = vpop.permute.xlu0 %2826
      %2832 = vrot.lane.b32.xlu0 %v2778, 112
      %v2833 = vpop.permute.xlu0 %2832
      %2834 = vrot.lane.b32.xlu0 %v2779, 112
      %v2835 = vpop.permute.xlu0 %2834
      %v2838 = vsel %vm2216, %v2736, %v2785
      %v2839 = vsel %vm2216, %v2737, %v2787
      %v2840 = vsel %vm2222, %v2838, %v2793
      %v2841 = vsel %vm2222, %v2839, %v2795
      %v2842 = vsel %vm2228, %v2840, %v2801
      %v2843 = vsel %vm2228, %v2841, %v2803
      %v2844 = vsel %vm1957, %v2842, %v2809
      %v2845 = vsel %vm1957, %v2843, %v2811
      %v2846 = vsel %vm2451, %v2844, %v2817
      %v2847 = vsel %vm2451, %v2845, %v2819
      %v2848 = vsel %vm2454, %v2846, %v2825
      %v2849 = vsel %vm2454, %v2847, %v2827
      %v2850 = vsel %vm2457, %v2848, %v2833
      %v2851 = vsel %vm2457, %v2849, %v2835
      %v2852 = vsel %vm2216, %v2780, 0.0
      %v2853 = vsel %vm2216, %v2781, 0.0
      %v2854 = vpack.c.bf16 %v2851, %v2850
      %v2855 = vpack.c.bf16 %v2853, %v2852
      %v2856 = vld [vmem:[%s22] sm:$0xf]
      %v2857 = vld [vmem:[%s22 + $0x4] sm:$0xf]
      %v2858 = vld [vmem:[%s22 + $0x8] sm:$0xf]
      %v2859 = vld [vmem:[%s22 + $0xc] sm:$0xf]
      %v2860 = vld [vmem:[%s22 + $0x10] sm:$0xf]
      %v2861 = vld [vmem:[%s22 + $0x14] sm:$0xf]
      %v2862 = vld [vmem:[%s22 + $0x18] sm:$0xf]
      %v2863 = vld [vmem:[%s22 + $0x1c] sm:$0xf]
      %v2864 = vld [vmem:[%s22 + $0x20] sm:$0xf]
      %v2865 = vld [vmem:[%s22 + $0x24] sm:$0xf]
      %v2866 = vld [vmem:[%s22 + $0x28] sm:$0xf]
      %v2867 = vld [vmem:[%s22 + $0x2c] sm:$0xf]
      %v2868 = vld [vmem:[%s22 + $0x30] sm:$0xf]
      %v2869 = vld [vmem:[%s22 + $0x34] sm:$0xf]
      %v2870 = vld [vmem:[%s22 + $0x38] sm:$0xf]
      %v2871 = vld [vmem:[%s22 + $0x3c] sm:$0xf]
      %v2872 = vld [vmem:[%s22 + $0x40] sm:$0xf]
      %v2873 = vld [vmem:[%s22 + $0x44] sm:$0xf]
      %v2874 = vld [vmem:[%s22 + $0x48] sm:$0xf]
      %v2875 = vld [vmem:[%s22 + $0x4c] sm:$0xf]
      %v2876 = vld [vmem:[%s22 + $0x50] sm:$0xf]
      %v2877 = vld [vmem:[%s22 + $0x54] sm:$0xf]
      %v2878 = vld [vmem:[%s22 + $0x58] sm:$0xf]
      %v2879 = vld [vmem:[%s22 + $0x5c] sm:$0xf]
      %v2880 = vld [vmem:[%s22 + $0x60] sm:$0xf]
      %v2881 = vld [vmem:[%s22 + $0x64] sm:$0xf]
      %v2882 = vld [vmem:[%s22 + $0x68] sm:$0xf]
      %v2883 = vld [vmem:[%s22 + $0x6c] sm:$0xf]
      %v2884 = vld [vmem:[%s22 + $0x70] sm:$0xf]
      %v2885 = vld [vmem:[%s22 + $0x74] sm:$0xf]
      %v2886 = vld [vmem:[%s22 + $0x78] sm:$0xf]
      %v2887 = vld [vmem:[%s22 + $0x7c] sm:$0xf]
      %v2920 = vunpack.c.l.b16 %v2856
      %v2921 = vunpack.c.l.b16 %v2857
      %v2922 = vunpack.c.l.b16 %v2858
      %v2923 = vunpack.c.l.b16 %v2859
      %v2924 = vunpack.c.l.b16 %v2860
      %v2925 = vunpack.c.l.b16 %v2861
      %v2926 = vunpack.c.l.b16 %v2862
      %v2927 = vunpack.c.l.b16 %v2863
      %v2928 = vunpack.c.l.b16 %v2864
      %v2929 = vunpack.c.l.b16 %v2865
      %v2930 = vunpack.c.l.b16 %v2866
      %v2931 = vunpack.c.l.b16 %v2867
      %v2932 = vunpack.c.l.b16 %v2868
      %v2933 = vunpack.c.l.b16 %v2869
      %v2934 = vunpack.c.l.b16 %v2870
      %v2935 = vunpack.c.l.b16 %v2871
      %v2936 = vunpack.c.l.b16 %v2872
      %v2937 = vunpack.c.l.b16 %v2873
      %v2938 = vunpack.c.l.b16 %v2874
      %v2939 = vunpack.c.l.b16 %v2875
      %v2940 = vunpack.c.l.b16 %v2876
      %v2941 = vunpack.c.l.b16 %v2877
      %v2942 = vunpack.c.l.b16 %v2878
      %v2943 = vunpack.c.l.b16 %v2879
      %v2944 = vunpack.c.l.b16 %v2880
      %v2945 = vunpack.c.l.b16 %v2881
      %v2946 = vunpack.c.l.b16 %v2882
      %v2947 = vunpack.c.l.b16 %v2883
      %v2948 = vunpack.c.l.b16 %v2884
      %v2949 = vunpack.c.l.b16 %v2885
      %v2950 = vunpack.c.l.b16 %v2886
      %v2951 = vunpack.c.l.b16 %v2887
      %v2952 = vpack.c.b16 %v2921, %v2920
      %v2953 = vpack.c.b16 %v2923, %v2922
      %v2954 = vpack.c.b16 %v2925, %v2924
      %v2955 = vpack.c.b16 %v2927, %v2926
      %v2956 = vpack.c.b16 %v2929, %v2928
      %v2957 = vpack.c.b16 %v2931, %v2930
      %v2958 = vpack.c.b16 %v2933, %v2932
      %v2959 = vpack.c.b16 %v2935, %v2934
      %v2960 = vpack.c.b16 %v2937, %v2936
      %v2961 = vpack.c.b16 %v2939, %v2938
      %v2962 = vpack.c.b16 %v2941, %v2940
      %v2963 = vpack.c.b16 %v2943, %v2942
      %v2964 = vpack.c.b16 %v2945, %v2944
      %v2965 = vpack.c.b16 %v2947, %v2946
      %v2966 = vpack.c.b16 %v2949, %v2948
      %v2967 = vpack.c.b16 %v2951, %v2950
      %2984 = vmatpush.bf16.msra.mxu0 %v2959
      %2985 = vmatpush.bf16.msra.mxu0 %v2958
      %2986 = vmatpush.bf16.msra.mxu0 %v2957
      %2987 = vmatpush.bf16.msra.mxu0 %v2956
      %2988 = vmatpush.bf16.msra.mxu0 %v2955
      %2989 = vmatpush.bf16.msra.mxu0 %v2954
      %2990 = vmatpush.bf16.msra.mxu0 %v2953
      %2991 = vmatpush.bf16.msra.mxu0 %v2952
      %2992 = vmatmul.bf16.gmra.mxu0 %v2854
      %v2993 = vpop.f32.mrf.mxu0
      %v2994 = vadd.f32 0.0, %v2993
      %v2995 = vpop.f32.mrf.mxu0
      %v2996 = vadd.f32 0.0, %v2995
      %2997 = vdwg.mxu0
      %2998 = vmatpush.bf16.msra.mxu0 %v2967
      %2999 = vmatpush.bf16.msra.mxu0 %v2966
      %3000 = vmatpush.bf16.msra.mxu0 %v2965
      %3001 = vmatpush.bf16.msra.mxu0 %v2964
      %3002 = vmatpush.bf16.msra.mxu0 %v2963
      %3003 = vmatpush.bf16.msra.mxu0 %v2962
      %3004 = vmatpush.bf16.msra.mxu0 %v2961
      %3005 = vmatpush.bf16.msra.mxu0 %v2960
      %3006 = vmatmul.bf16.gmra.mxu0 %v2855
      %v3007 = vpop.f32.mrf.mxu0
      %v3008 = vadd.f32 %v2994, %v3007
      %v3009 = vpop.f32.mrf.mxu0
      %v3010 = vadd.f32 %v2996, %v3009
      %3011 = vdwg.mxu0
      %v3012 = vld [vmem:[%s23] sm:$0x1]
      %v3014 = vperm.slane %v3012, 0
      %v3016 = vmul.f32 %v3008, %v3014
      %v3017 = vmul.f32 %v3010, %v3014
      %v3018 = vld [vmem:[%s24] sm:$0x1]
      %v3020 = vperm.slane %v3018, 0
      %v3022 = vadd.f32 %v3016, %v3020
      %v3023 = vadd.f32 %v3017, %v3020
      %v3024 = vmax.f32 %v3022, 0.0
      %v3025 = vmax.f32 %v3023, 0.0
      %v3027 = vrot.slane %v3025, 3
      %v3030 = vrot.slane %v3024, 3
      %v3031 = vsel %vm2005, %v3030, %v3027
      %v3034 = vsel %vm2005, %v3027, %v3030
      %v3035 = vmul.f32 %v3034, %v2014
      %v3036 = vmul.f32 %v3031, %v2019
      %v3037 = vrot.slane %v3025, 4
      %v3039 = vrot.slane %v3024, 4
      %v3040 = vsel %vm2025, %v3039, %v3037
      %v3043 = vsel %vm2025, %v3037, %v3039
      %v3044 = vmul.f32 %v3043, %v2034
      %v3045 = vmul.f32 %v3040, %v2039
      %v3046 = vrot.slane %v3025, 5
      %v3048 = vrot.slane %v3024, 5
      %v3049 = vsel %vm2045, %v3048, %v3046
      %v3052 = vsel %vm2045, %v3046, %v3048
      %v3053 = vmul.f32 %v3052, %v2054
      %v3054 = vmul.f32 %v3049, %v2059
      %v3055 = vrot.slane %v3025, 7
      %v3057 = vrot.slane %v3024, 7
      %v3058 = vsel %vm1369, %v3057, %v3055
      %v3061 = vsel %vm1369, %v3055, %v3057
      %v3062 = vmul.f32 %v3061, %v2073
      %v3063 = vmul.f32 %v3058, %v2078
      %v3064 = vmul.f32 %v3024, %v2085
      %v3065 = vmul.f32 %v3025, %v2090
      %v3066 = vrot.slane %v3024, 1
      %v3067 = vrot.slane %v3025, 1
      %v3068 = vsel %vm1532, %v3066, %v3067
      %v3072 = vsel %vm1532, %v3067, %v3066
      %v3073 = vmul.f32 %v3068, %v2104
      %v3074 = vmul.f32 %v3072, %v2109
      %v3075 = vmul.f32 %v3031, %v2116
      %v3076 = vmul.f32 %v3034, %v2121
      %v3077 = vmul.f32 %v3040, %v2128
      %v3078 = vmul.f32 %v3043, %v2133
      %v3079 = vmul.f32 %v3049, %v2140
      %v3080 = vmul.f32 %v3052, %v2145
      %3083 = vrot.lane.b32.xlu0 %v3044, 16
      %v3084 = vpop.permute.xlu0 %3083
      %3085 = vrot.lane.b32.xlu0 %v3045, 16
      %v3086 = vpop.permute.xlu0 %3085
      %3091 = vrot.lane.b32.xlu0 %v3053, 32
      %v3092 = vpop.permute.xlu0 %3091
      %3093 = vrot.lane.b32.xlu0 %v3054, 32
      %v3094 = vpop.permute.xlu0 %3093
      %3099 = vrot.lane.b32.xlu0 %v3062, 48
      %v3100 = vpop.permute.xlu0 %3099
      %3101 = vrot.lane.b32.xlu0 %v3063, 48
      %v3102 = vpop.permute.xlu0 %3101
      %3107 = vrot.lane.b32.xlu0 %v3064, 64
      %v3108 = vpop.permute.xlu0 %3107
      %3109 = vrot.lane.b32.xlu0 %v3065, 64
      %v3110 = vpop.permute.xlu0 %3109
      %3115 = vrot.lane.b32.xlu0 %v3073, 80
      %v3116 = vpop.permute.xlu0 %3115
      %3117 = vrot.lane.b32.xlu0 %v3074, 80
      %v3118 = vpop.permute.xlu0 %3117
      %3123 = vrot.lane.b32.xlu0 %v3075, 96
      %v3124 = vpop.permute.xlu0 %3123
      %3125 = vrot.lane.b32.xlu0 %v3076, 96
      %v3126 = vpop.permute.xlu0 %3125
      %3131 = vrot.lane.b32.xlu0 %v3077, 112
      %v3132 = vpop.permute.xlu0 %3131
      %3133 = vrot.lane.b32.xlu0 %v3078, 112
      %v3134 = vpop.permute.xlu0 %3133
      %v3137 = vsel %vm2216, %v3035, %v3084
      %v3138 = vsel %vm2216, %v3036, %v3086
      %v3139 = vsel %vm2222, %v3137, %v3092
      %v3140 = vsel %vm2222, %v3138, %v3094
      %v3141 = vsel %vm2228, %v3139, %v3100
      %v3142 = vsel %vm2228, %v3140, %v3102
      %v3143 = vsel %vm1957, %v3141, %v3108
      %v3144 = vsel %vm1957, %v3142, %v3110
      %v3145 = vsel %vm2451, %v3143, %v3116
      %v3146 = vsel %vm2451, %v3144, %v3118
      %v3147 = vsel %vm2454, %v3145, %v3124
      %v3148 = vsel %vm2454, %v3146, %v3126
      %v3149 = vsel %vm2457, %v3147, %v3132
      %v3150 = vsel %vm2457, %v3148, %v3134
      %v3151 = vsel %vm2216, %v3079, 0.0
      %v3152 = vsel %vm2216, %v3080, 0.0
      %v3153 = vpack.c.bf16 %v3150, %v3149
      %v3154 = vpack.c.bf16 %v3152, %v3151
      %v3155 = vld [vmem:[%s25] sm:$0xf]
      %v3156 = vld [vmem:[%s25 + $0x4] sm:$0xf]
      %v3157 = vld [vmem:[%s25 + $0x8] sm:$0xf]
      %v3158 = vld [vmem:[%s25 + $0xc] sm:$0xf]
      %v3159 = vld [vmem:[%s25 + $0x10] sm:$0xf]
      %v3160 = vld [vmem:[%s25 + $0x14] sm:$0xf]
      %v3161 = vld [vmem:[%s25 + $0x18] sm:$0xf]
      %v3162 = vld [vmem:[%s25 + $0x1c] sm:$0xf]
      %v3163 = vld [vmem:[%s25 + $0x20] sm:$0xf]
      %v3164 = vld [vmem:[%s25 + $0x24] sm:$0xf]
      %v3165 = vld [vmem:[%s25 + $0x28] sm:$0xf]
      %v3166 = vld [vmem:[%s25 + $0x2c] sm:$0xf]
      %v3167 = vld [vmem:[%s25 + $0x30] sm:$0xf]
      %v3168 = vld [vmem:[%s25 + $0x34] sm:$0xf]
      %v3169 = vld [vmem:[%s25 + $0x38] sm:$0xf]
      %v3170 = vld [vmem:[%s25 + $0x3c] sm:$0xf]
      %v3171 = vld [vmem:[%s25 + $0x40] sm:$0xf]
      %v3172 = vld [vmem:[%s25 + $0x44] sm:$0xf]
      %v3173 = vld [vmem:[%s25 + $0x48] sm:$0xf]
      %v3174 = vld [vmem:[%s25 + $0x4c] sm:$0xf]
      %v3175 = vld [vmem:[%s25 + $0x50] sm:$0xf]
      %v3176 = vld [vmem:[%s25 + $0x54] sm:$0xf]
      %v3177 = vld [vmem:[%s25 + $0x58] sm:$0xf]
      %v3178 = vld [vmem:[%s25 + $0x5c] sm:$0xf]
      %v3179 = vld [vmem:[%s25 + $0x60] sm:$0xf]
      %v3180 = vld [vmem:[%s25 + $0x64] sm:$0xf]
      %v3181 = vld [vmem:[%s25 + $0x68] sm:$0xf]
      %v3182 = vld [vmem:[%s25 + $0x6c] sm:$0xf]
      %v3183 = vld [vmem:[%s25 + $0x70] sm:$0xf]
      %v3184 = vld [vmem:[%s25 + $0x74] sm:$0xf]
      %v3185 = vld [vmem:[%s25 + $0x78] sm:$0xf]
      %v3186 = vld [vmem:[%s25 + $0x7c] sm:$0xf]
      %v3219 = vunpack.c.l.b16 %v3155
      %v3220 = vunpack.c.l.b16 %v3156
      %v3221 = vunpack.c.l.b16 %v3157
      %v3222 = vunpack.c.l.b16 %v3158
      %v3223 = vunpack.c.l.b16 %v3159
      %v3224 = vunpack.c.l.b16 %v3160
      %v3225 = vunpack.c.l.b16 %v3161
      %v3226 = vunpack.c.l.b16 %v3162
      %v3227 = vunpack.c.l.b16 %v3163
      %v3228 = vunpack.c.l.b16 %v3164
      %v3229 = vunpack.c.l.b16 %v3165
      %v3230 = vunpack.c.l.b16 %v3166
      %v3231 = vunpack.c.l.b16 %v3167
      %v3232 = vunpack.c.l.b16 %v3168
      %v3233 = vunpack.c.l.b16 %v3169
      %v3234 = vunpack.c.l.b16 %v3170
      %v3235 = vunpack.c.l.b16 %v3171
      %v3236 = vunpack.c.l.b16 %v3172
      %v3237 = vunpack.c.l.b16 %v3173
      %v3238 = vunpack.c.l.b16 %v3174
      %v3239 = vunpack.c.l.b16 %v3175
      %v3240 = vunpack.c.l.b16 %v3176
      %v3241 = vunpack.c.l.b16 %v3177
      %v3242 = vunpack.c.l.b16 %v3178
      %v3243 = vunpack.c.l.b16 %v3179
      %v3244 = vunpack.c.l.b16 %v3180
      %v3245 = vunpack.c.l.b16 %v3181
      %v3246 = vunpack.c.l.b16 %v3182
      %v3247 = vunpack.c.l.b16 %v3183
      %v3248 = vunpack.c.l.b16 %v3184
      %v3249 = vunpack.c.l.b16 %v3185
      %v3250 = vunpack.c.l.b16 %v3186
      %v3251 = vpack.c.b16 %v3220, %v3219
      %v3252 = vpack.c.b16 %v3222, %v3221
      %v3253 = vpack.c.b16 %v3224, %v3223
      %v3254 = vpack.c.b16 %v3226, %v3225
      %v3255 = vpack.c.b16 %v3228, %v3227
      %v3256 = vpack.c.b16 %v3230, %v3229
      %v3257 = vpack.c.b16 %v3232, %v3231
      %v3258 = vpack.c.b16 %v3234, %v3233
      %v3259 = vpack.c.b16 %v3236, %v3235
      %v3260 = vpack.c.b16 %v3238, %v3237
      %v3261 = vpack.c.b16 %v3240, %v3239
      %v3262 = vpack.c.b16 %v3242, %v3241
      %v3263 = vpack.c.b16 %v3244, %v3243
      %v3264 = vpack.c.b16 %v3246, %v3245
      %v3265 = vpack.c.b16 %v3248, %v3247
      %v3266 = vpack.c.b16 %v3250, %v3249
      %3283 = vmatpush.bf16.msra.mxu0 %v3258
      %3284 = vmatpush.bf16.msra.mxu0 %v3257
      %3285 = vmatpush.bf16.msra.mxu0 %v3256
      %3286 = vmatpush.bf16.msra.mxu0 %v3255
      %3287 = vmatpush.bf16.msra.mxu0 %v3254
      %3288 = vmatpush.bf16.msra.mxu0 %v3253
      %3289 = vmatpush.bf16.msra.mxu0 %v3252
      %3290 = vmatpush.bf16.msra.mxu0 %v3251
      %3291 = vmatmul.bf16.gmra.mxu0 %v3153
      %v3292 = vpop.f32.mrf.mxu0
      %v3293 = vadd.f32 0.0, %v3292
      %v3294 = vpop.f32.mrf.mxu0
      %v3295 = vadd.f32 0.0, %v3294
      %3296 = vdwg.mxu0
      %3297 = vmatpush.bf16.msra.mxu0 %v3266
      %3298 = vmatpush.bf16.msra.mxu0 %v3265
      %3299 = vmatpush.bf16.msra.mxu0 %v3264
      %3300 = vmatpush.bf16.msra.mxu0 %v3263
      %3301 = vmatpush.bf16.msra.mxu0 %v3262
      %3302 = vmatpush.bf16.msra.mxu0 %v3261
      %3303 = vmatpush.bf16.msra.mxu0 %v3260
      %3304 = vmatpush.bf16.msra.mxu0 %v3259
      %3305 = vmatmul.bf16.gmra.mxu0 %v3154
      %v3306 = vpop.f32.mrf.mxu0
      %v3307 = vadd.f32 %v3293, %v3306
      %v3308 = vpop.f32.mrf.mxu0
      %v3309 = vadd.f32 %v3295, %v3308
      %3310 = vdwg.mxu0
      %v3311 = vld [vmem:[%s26] sm:$0x1]
      %v3313 = vperm.slane %v3311, 0
      %v3315 = vmul.f32 %v3307, %v3313
      %v3316 = vmul.f32 %v3309, %v3313
      %v3317 = vld [vmem:[%s27] sm:$0x1]
      %v3319 = vperm.slane %v3317, 0
      %v3321 = vadd.f32 %v3315, %v3319
      %v3322 = vadd.f32 %v3316, %v3319
      %v3323 = vadd.f32 %v3321, %v2725
      %v3324 = vadd.f32 %v3322, %v2726
      %v3325 = vmax.f32 %v3323, 0.0
      %v3326 = vmax.f32 %v3324, 0.0
      %v3327 = vpack.c.bf16 %v3326, %v3325
      %v3328 = vld [vmem:[%s8] sm:$0xf]
      %v3329 = vld [vmem:[%s8 + $0x4] sm:$0xf]
      %v3330 = vld [vmem:[%s8 + $0x8] sm:$0xf]
      %v3331 = vld [vmem:[%s8 + $0xc] sm:$0xf]
      %v3332 = vld [vmem:[%s8 + $0x10] sm:$0xf]
      %v3333 = vld [vmem:[%s8 + $0x14] sm:$0xf]
      %v3334 = vld [vmem:[%s8 + $0x18] sm:$0xf]
      %v3335 = vld [vmem:[%s8 + $0x1c] sm:$0xf]
      %v3344 = vunpack.c.l.b16 %v3328
      %v3345 = vunpack.c.l.b16 %v3329
      %v3346 = vunpack.c.l.b16 %v3330
      %v3347 = vunpack.c.l.b16 %v3331
      %v3348 = vunpack.c.l.b16 %v3332
      %v3349 = vunpack.c.l.b16 %v3333
      %v3350 = vunpack.c.l.b16 %v3334
      %v3351 = vunpack.c.l.b16 %v3335
      %v3352 = vpack.c.b16 %v3345, %v3344
      %v3353 = vpack.c.b16 %v3347, %v3346
      %v3354 = vpack.c.b16 %v3349, %v3348
      %v3355 = vpack.c.b16 %v3351, %v3350
      %v3357 = vsel %vm2216, %v3352, 0
      %v3360 = vsel %vm2216, %v3353, 0
      %v3363 = vsel %vm2216, %v3354, 0
      %v3366 = vsel %vm2216, %v3355, 0
      %3368 = vmatpush.bf16.msra.mxu0 0
      %3369 = vmatpush.bf16.msra.mxu0 0
      %3370 = vmatpush.bf16.msra.mxu0 0
      %3371 = vmatpush.bf16.msra.mxu0 0
      %3372 = vmatpush.bf16.msra.mxu0 0
      %3373 = vmatpush.bf16.msra.mxu0 0
      %3374 = vmatpush.bf16.msra.mxu0 0
      %3375 = vmatpush.bf16.msra.mxu0 %v3327
      %3376 = vmatmul.bf16.gmra.mxu0 %v3357
      %v3377 = vpop.f32.mrf.mxu0
      %v3378 = vadd.f32 0.0, %v3377
      %v3379 = vpop.f32.mrf.mxu0
      %v3380 = vadd.f32 0.0, %v3379
      %3381 = vmatmul.bf16.gmra.mxu0 %v3360
      %v3382 = vpop.f32.mrf.mxu0
      %v3383 = vadd.f32 0.0, %v3382
      %v3384 = vpop.f32.mrf.mxu0
      %v3385 = vadd.f32 0.0, %v3384
      %3386 = vmatmul.bf16.gmra.mxu0 %v3363
      %v3387 = vpop.f32.mrf.mxu0
      %v3388 = vadd.f32 0.0, %v3387
      %v3389 = vpop.f32.mrf.mxu0
      %v3390 = vadd.f32 0.0, %v3389
      %3391 = vmatmul.bf16.gmra.mxu0 %v3366
      %v3392 = vpop.f32.mrf.mxu0
      %v3393 = vadd.f32 0.0, %v3392
      %v3394 = vpop.f32.mrf.mxu0
      %v3395 = vadd.f32 0.0, %v3394
      %3396 = vdwg.mxu0
      %v3397 = vld [vmem:[%s9] sm:$0xff]
      %v3398 = vld [vmem:[%s9 + $0x8] sm:$0xff]
      %v3399 = vld [vmem:[%s9 + $0x10] sm:$0xff]
      %v3400 = vld [vmem:[%s9 + $0x18] sm:$0xff]
      %v3401 = vld [vmem:[%s9 + $0x20] sm:$0xff]
      %v3402 = vld [vmem:[%s9 + $0x28] sm:$0xff]
      %v3403 = vld [vmem:[%s9 + $0x30] sm:$0xff]
      %v3404 = vld [vmem:[%s9 + $0x38] sm:$0xff]
      %v3405 = vmul.f32 %v3378, %v3397
      %v3406 = vmul.f32 %v3380, %v3398
      %v3407 = vmul.f32 %v3383, %v3399
      %v3408 = vmul.f32 %v3385, %v3400
      %v3409 = vmul.f32 %v3388, %v3401
      %v3410 = vmul.f32 %v3390, %v3402
      %v3411 = vmul.f32 %v3393, %v3403
      %v3412 = vmul.f32 %v3395, %v3404
      %v3413 = vadd.f32 %v3405, 0.0
      %v3414 = vadd.f32 %v3406, 0.0
      %v3415 = vadd.f32 %v3407, 0.0
      %v3416 = vadd.f32 %v3408, 0.0
      %v3417 = vadd.f32 %v3409, 0.0
      %v3418 = vadd.f32 %v3410, 0.0
      %v3419 = vadd.f32 %v3411, 0.0
      %v3420 = vadd.f32 %v3412, 0.0
      %s3421 = scalar_lea.vmem %s8, 128
      %v3422 = vld [vmem:[%s3421] sm:$0xf]
      %v3423 = vld [vmem:[%s3421 + $0x4] sm:$0xf]
      %v3424 = vld [vmem:[%s3421 + $0x8] sm:$0xf]
      %v3425 = vld [vmem:[%s3421 + $0xc] sm:$0xf]
      %v3426 = vld [vmem:[%s3421 + $0x10] sm:$0xf]
      %v3427 = vld [vmem:[%s3421 + $0x14] sm:$0xf]
      %v3428 = vld [vmem:[%s3421 + $0x18] sm:$0xf]
      %v3429 = vld [vmem:[%s3421 + $0x1c] sm:$0xf]
      %v3438 = vunpack.c.l.b16 %v3422
      %v3439 = vunpack.c.l.b16 %v3423
      %v3440 = vunpack.c.l.b16 %v3424
      %v3441 = vunpack.c.l.b16 %v3425
      %v3442 = vunpack.c.l.b16 %v3426
      %v3443 = vunpack.c.l.b16 %v3427
      %v3444 = vunpack.c.l.b16 %v3428
      %v3445 = vunpack.c.l.b16 %v3429
      %v3446 = vpack.c.b16 %v3439, %v3438
      %v3447 = vpack.c.b16 %v3441, %v3440
      %v3448 = vpack.c.b16 %v3443, %v3442
      %v3449 = vpack.c.b16 %v3445, %v3444
      %v3451 = vsel %vm2216, %v3446, 0
      %v3454 = vsel %vm2216, %v3447, 0
      %v3457 = vsel %vm2216, %v3448, 0
      %v3460 = vsel %vm2216, %v3449, 0
      %3462 = vmatpush.bf16.msra.mxu0 0
      %3463 = vmatpush.bf16.msra.mxu0 0
      %3464 = vmatpush.bf16.msra.mxu0 0
      %3465 = vmatpush.bf16.msra.mxu0 0
      %3466 = vmatpush.bf16.msra.mxu0 0
      %3467 = vmatpush.bf16.msra.mxu0 0
      %3468 = vmatpush.bf16.msra.mxu0 0
      %3469 = vmatpush.bf16.msra.mxu0 %v3327
      %3470 = vmatmul.bf16.gmra.mxu0 %v3451
      %v3471 = vpop.f32.mrf.mxu0
      %v3472 = vadd.f32 0.0, %v3471
      %v3473 = vpop.f32.mrf.mxu0
      %v3474 = vadd.f32 0.0, %v3473
      %3475 = vmatmul.bf16.gmra.mxu0 %v3454
      %v3476 = vpop.f32.mrf.mxu0
      %v3477 = vadd.f32 0.0, %v3476
      %v3478 = vpop.f32.mrf.mxu0
      %v3479 = vadd.f32 0.0, %v3478
      %3480 = vmatmul.bf16.gmra.mxu0 %v3457
      %v3481 = vpop.f32.mrf.mxu0
      %v3482 = vadd.f32 0.0, %v3481
      %v3483 = vpop.f32.mrf.mxu0
      %v3484 = vadd.f32 0.0, %v3483
      %3485 = vmatmul.bf16.gmra.mxu0 %v3460
      %v3486 = vpop.f32.mrf.mxu0
      %v3487 = vadd.f32 0.0, %v3486
      %v3488 = vpop.f32.mrf.mxu0
      %v3489 = vadd.f32 0.0, %v3488
      %3490 = vdwg.mxu0
      %s3491 = scalar_lea.vmem %s9, 256
      %v3492 = vld [vmem:[%s3491] sm:$0xff]
      %v3493 = vld [vmem:[%s3491 + $0x8] sm:$0xff]
      %v3494 = vld [vmem:[%s3491 + $0x10] sm:$0xff]
      %v3495 = vld [vmem:[%s3491 + $0x18] sm:$0xff]
      %v3496 = vld [vmem:[%s3491 + $0x20] sm:$0xff]
      %v3497 = vld [vmem:[%s3491 + $0x28] sm:$0xff]
      %v3498 = vld [vmem:[%s3491 + $0x30] sm:$0xff]
      %v3499 = vld [vmem:[%s3491 + $0x38] sm:$0xff]
      %v3500 = vmul.f32 %v3472, %v3492
      %v3501 = vmul.f32 %v3474, %v3493
      %v3502 = vmul.f32 %v3477, %v3494
      %v3503 = vmul.f32 %v3479, %v3495
      %v3504 = vmul.f32 %v3482, %v3496
      %v3505 = vmul.f32 %v3484, %v3497
      %v3506 = vmul.f32 %v3487, %v3498
      %v3507 = vmul.f32 %v3489, %v3499
      %v3508 = vadd.f32 %v3413, %v3500
      %v3509 = vadd.f32 %v3414, %v3501
      %v3510 = vadd.f32 %v3415, %v3502
      %v3511 = vadd.f32 %v3416, %v3503
      %v3512 = vadd.f32 %v3417, %v3504
      %v3513 = vadd.f32 %v3418, %v3505
      %v3514 = vadd.f32 %v3419, %v3506
      %v3515 = vadd.f32 %v3420, %v3507
      %s3516 = scalar_lea.vmem %s8, 256
      %v3517 = vld [vmem:[%s3516] sm:$0xf]
      %v3518 = vld [vmem:[%s3516 + $0x4] sm:$0xf]
      %v3519 = vld [vmem:[%s3516 + $0x8] sm:$0xf]
      %v3520 = vld [vmem:[%s3516 + $0xc] sm:$0xf]
      %v3521 = vld [vmem:[%s3516 + $0x10] sm:$0xf]
      %v3522 = vld [vmem:[%s3516 + $0x14] sm:$0xf]
      %v3523 = vld [vmem:[%s3516 + $0x18] sm:$0xf]
      %v3524 = vld [vmem:[%s3516 + $0x1c] sm:$0xf]
      %v3533 = vunpack.c.l.b16 %v3517
      %v3534 = vunpack.c.l.b16 %v3518
      %v3535 = vunpack.c.l.b16 %v3519
      %v3536 = vunpack.c.l.b16 %v3520
      %v3537 = vunpack.c.l.b16 %v3521
      %v3538 = vunpack.c.l.b16 %v3522
      %v3539 = vunpack.c.l.b16 %v3523
      %v3540 = vunpack.c.l.b16 %v3524
      %v3541 = vpack.c.b16 %v3534, %v3533
      %v3542 = vpack.c.b16 %v3536, %v3535
      %v3543 = vpack.c.b16 %v3538, %v3537
      %v3544 = vpack.c.b16 %v3540, %v3539
      %v3546 = vsel %vm2216, %v3541, 0
      %v3549 = vsel %vm2216, %v3542, 0
      %v3552 = vsel %vm2216, %v3543, 0
      %v3555 = vsel %vm2216, %v3544, 0
      %3557 = vmatpush.bf16.msra.mxu0 0
      %3558 = vmatpush.bf16.msra.mxu0 0
      %3559 = vmatpush.bf16.msra.mxu0 0
      %3560 = vmatpush.bf16.msra.mxu0 0
      %3561 = vmatpush.bf16.msra.mxu0 0
      %3562 = vmatpush.bf16.msra.mxu0 0
      %3563 = vmatpush.bf16.msra.mxu0 0
      %3564 = vmatpush.bf16.msra.mxu0 %v3327
      %3565 = vmatmul.bf16.gmra.mxu0 %v3546
      %v3566 = vpop.f32.mrf.mxu0
      %v3567 = vadd.f32 0.0, %v3566
      %v3568 = vpop.f32.mrf.mxu0
      %v3569 = vadd.f32 0.0, %v3568
      %3570 = vmatmul.bf16.gmra.mxu0 %v3549
      %v3571 = vpop.f32.mrf.mxu0
      %v3572 = vadd.f32 0.0, %v3571
      %v3573 = vpop.f32.mrf.mxu0
      %v3574 = vadd.f32 0.0, %v3573
      %3575 = vmatmul.bf16.gmra.mxu0 %v3552
      %v3576 = vpop.f32.mrf.mxu0
      %v3577 = vadd.f32 0.0, %v3576
      %v3578 = vpop.f32.mrf.mxu0
      %v3579 = vadd.f32 0.0, %v3578
      %3580 = vmatmul.bf16.gmra.mxu0 %v3555
      %v3581 = vpop.f32.mrf.mxu0
      %v3582 = vadd.f32 0.0, %v3581
      %v3583 = vpop.f32.mrf.mxu0
      %v3584 = vadd.f32 0.0, %v3583
      %3585 = vdwg.mxu0
      %s3586 = scalar_lea.vmem %s9, 512
      %v3587 = vld [vmem:[%s3586] sm:$0xff]
      %v3588 = vld [vmem:[%s3586 + $0x8] sm:$0xff]
      %v3589 = vld [vmem:[%s3586 + $0x10] sm:$0xff]
      %v3590 = vld [vmem:[%s3586 + $0x18] sm:$0xff]
      %v3591 = vld [vmem:[%s3586 + $0x20] sm:$0xff]
      %v3592 = vld [vmem:[%s3586 + $0x28] sm:$0xff]
      %v3593 = vld [vmem:[%s3586 + $0x30] sm:$0xff]
      %v3594 = vld [vmem:[%s3586 + $0x38] sm:$0xff]
      %v3595 = vmul.f32 %v3567, %v3587
      %v3596 = vmul.f32 %v3569, %v3588
      %v3597 = vmul.f32 %v3572, %v3589
      %v3598 = vmul.f32 %v3574, %v3590
      %v3599 = vmul.f32 %v3577, %v3591
      %v3600 = vmul.f32 %v3579, %v3592
      %v3601 = vmul.f32 %v3582, %v3593
      %v3602 = vmul.f32 %v3584, %v3594
      %v3603 = vadd.f32 %v3508, %v3595
      %v3604 = vadd.f32 %v3509, %v3596
      %v3605 = vadd.f32 %v3510, %v3597
      %v3606 = vadd.f32 %v3511, %v3598
      %v3607 = vadd.f32 %v3512, %v3599
      %v3608 = vadd.f32 %v3513, %v3600
      %v3609 = vadd.f32 %v3514, %v3601
      %v3610 = vadd.f32 %v3515, %v3602
      %s3611 = scalar_lea.vmem %s8, 384
      %v3612 = vld [vmem:[%s3611] sm:$0xf]
      %v3613 = vld [vmem:[%s3611 + $0x4] sm:$0xf]
      %v3614 = vld [vmem:[%s3611 + $0x8] sm:$0xf]
      %v3615 = vld [vmem:[%s3611 + $0xc] sm:$0xf]
      %v3616 = vld [vmem:[%s3611 + $0x10] sm:$0xf]
      %v3617 = vld [vmem:[%s3611 + $0x14] sm:$0xf]
      %v3618 = vld [vmem:[%s3611 + $0x18] sm:$0xf]
      %v3619 = vld [vmem:[%s3611 + $0x1c] sm:$0xf]
      %v3628 = vunpack.c.l.b16 %v3612
      %v3629 = vunpack.c.l.b16 %v3613
      %v3630 = vunpack.c.l.b16 %v3614
      %v3631 = vunpack.c.l.b16 %v3615
      %v3632 = vunpack.c.l.b16 %v3616
      %v3633 = vunpack.c.l.b16 %v3617
      %v3634 = vunpack.c.l.b16 %v3618
      %v3635 = vunpack.c.l.b16 %v3619
      %v3636 = vpack.c.b16 %v3629, %v3628
      %v3637 = vpack.c.b16 %v3631, %v3630
      %v3638 = vpack.c.b16 %v3633, %v3632
      %v3639 = vpack.c.b16 %v3635, %v3634
      %v3641 = vsel %vm2216, %v3636, 0
      %v3644 = vsel %vm2216, %v3637, 0
      %v3647 = vsel %vm2216, %v3638, 0
      %v3650 = vsel %vm2216, %v3639, 0
      %3652 = vmatpush.bf16.msra.mxu0 0
      %3653 = vmatpush.bf16.msra.mxu0 0
      %3654 = vmatpush.bf16.msra.mxu0 0
      %3655 = vmatpush.bf16.msra.mxu0 0
      %3656 = vmatpush.bf16.msra.mxu0 0
      %3657 = vmatpush.bf16.msra.mxu0 0
      %3658 = vmatpush.bf16.msra.mxu0 0
      %3659 = vmatpush.bf16.msra.mxu0 %v3327
      %3660 = vmatmul.bf16.gmra.mxu0 %v3641
      %v3661 = vpop.f32.mrf.mxu0
      %v3662 = vadd.f32 0.0, %v3661
      %v3663 = vpop.f32.mrf.mxu0
      %v3664 = vadd.f32 0.0, %v3663
      %3665 = vmatmul.bf16.gmra.mxu0 %v3644
      %v3666 = vpop.f32.mrf.mxu0
      %v3667 = vadd.f32 0.0, %v3666
      %v3668 = vpop.f32.mrf.mxu0
      %v3669 = vadd.f32 0.0, %v3668
      %3670 = vmatmul.bf16.gmra.mxu0 %v3647
      %v3671 = vpop.f32.mrf.mxu0
      %v3672 = vadd.f32 0.0, %v3671
      %v3673 = vpop.f32.mrf.mxu0
      %v3674 = vadd.f32 0.0, %v3673
      %3675 = vmatmul.bf16.gmra.mxu0 %v3650
      %v3676 = vpop.f32.mrf.mxu0
      %v3677 = vadd.f32 0.0, %v3676
      %v3678 = vpop.f32.mrf.mxu0
      %v3679 = vadd.f32 0.0, %v3678
      %3680 = vdwg.mxu0
      %s3681 = scalar_lea.vmem %s9, 768
      %v3682 = vld [vmem:[%s3681] sm:$0xff]
      %v3683 = vld [vmem:[%s3681 + $0x8] sm:$0xff]
      %v3684 = vld [vmem:[%s3681 + $0x10] sm:$0xff]
      %v3685 = vld [vmem:[%s3681 + $0x18] sm:$0xff]
      %v3686 = vld [vmem:[%s3681 + $0x20] sm:$0xff]
      %v3687 = vld [vmem:[%s3681 + $0x28] sm:$0xff]
      %v3688 = vld [vmem:[%s3681 + $0x30] sm:$0xff]
      %v3689 = vld [vmem:[%s3681 + $0x38] sm:$0xff]
      %v3690 = vmul.f32 %v3662, %v3682
      %v3691 = vmul.f32 %v3664, %v3683
      %v3692 = vmul.f32 %v3667, %v3684
      %v3693 = vmul.f32 %v3669, %v3685
      %v3694 = vmul.f32 %v3672, %v3686
      %v3695 = vmul.f32 %v3674, %v3687
      %v3696 = vmul.f32 %v3677, %v3688
      %v3697 = vmul.f32 %v3679, %v3689
      %v3698 = vadd.f32 %v3603, %v3690
      %v3699 = vadd.f32 %v3604, %v3691
      %v3700 = vadd.f32 %v3605, %v3692
      %v3701 = vadd.f32 %v3606, %v3693
      %v3702 = vadd.f32 %v3607, %v3694
      %v3703 = vadd.f32 %v3608, %v3695
      %v3704 = vadd.f32 %v3609, %v3696
      %v3705 = vadd.f32 %v3610, %v3697
      %v3706 = vld [vmem:[%s10] sm:$0x1]
      %v3708 = vperm.slane %v3706, 0
      %v3710 = vadd.f32 %v3698, %v3708
      %v3711 = vadd.f32 %v3699, %v3708
      %v3712 = vadd.f32 %v3700, %v3708
      %v3713 = vadd.f32 %v3701, %v3708
      %v3714 = vadd.f32 %v3702, %v3708
      %v3715 = vadd.f32 %v3703, %v3708
      %v3716 = vadd.f32 %v3704, %v3708
      %v3717 = vadd.f32 %v3705, %v3708
      %v3718 = vpack.c.bf16 %v3711, %v3710
      %v3719 = vpack.c.bf16 %v3713, %v3712
      %v3720 = vpack.c.bf16 %v3715, %v3714
      %v3721 = vpack.c.bf16 %v3717, %v3716
      %v3722 = vld [vmem:[%s11] sm:$0xf]
      %v3723 = vld [vmem:[%s11 + $0x4] sm:$0xf]
      %v3724 = vld [vmem:[%s11 + $0x8] sm:$0xf]
      %v3725 = vld [vmem:[%s11 + $0xc] sm:$0xf]
      %v3726 = vld [vmem:[%s11 + $0x10] sm:$0xf]
      %v3727 = vld [vmem:[%s11 + $0x14] sm:$0xf]
      %v3728 = vld [vmem:[%s11 + $0x18] sm:$0xf]
      %v3729 = vld [vmem:[%s11 + $0x1c] sm:$0xf]
      %v3730 = vld [vmem:[%s11 + $0x20] sm:$0xf]
      %v3731 = vld [vmem:[%s11 + $0x24] sm:$0xf]
      %v3732 = vld [vmem:[%s11 + $0x28] sm:$0xf]
      %v3733 = vld [vmem:[%s11 + $0x2c] sm:$0xf]
      %v3734 = vld [vmem:[%s11 + $0x30] sm:$0xf]
      %v3735 = vld [vmem:[%s11 + $0x34] sm:$0xf]
      %v3736 = vld [vmem:[%s11 + $0x38] sm:$0xf]
      %v3737 = vld [vmem:[%s11 + $0x3c] sm:$0xf]
      %v3738 = vld [vmem:[%s12] sm:$0x1]
      %v3740 = vperm.slane %v3738, 0
      %v3758 = vunpack.c.l.b16 %v3722
      %v3759 = vunpack.c.l.b16 %v3723
      %v3760 = vunpack.c.l.b16 %v3724
      %v3761 = vunpack.c.l.b16 %v3725
      %v3762 = vunpack.c.l.b16 %v3726
      %v3763 = vunpack.c.l.b16 %v3727
      %v3764 = vunpack.c.l.b16 %v3728
      %v3765 = vunpack.c.l.b16 %v3729
      %v3766 = vunpack.c.l.b16 %v3730
      %v3767 = vunpack.c.l.b16 %v3731
      %v3768 = vunpack.c.l.b16 %v3732
      %v3769 = vunpack.c.l.b16 %v3733
      %v3770 = vunpack.c.l.b16 %v3734
      %v3771 = vunpack.c.l.b16 %v3735
      %v3772 = vunpack.c.l.b16 %v3736
      %v3773 = vunpack.c.l.b16 %v3737
      %v3774 = vpack.c.b16 %v3759, %v3758
      %v3775 = vpack.c.b16 %v3761, %v3760
      %v3776 = vpack.c.b16 %v3763, %v3762
      %v3777 = vpack.c.b16 %v3765, %v3764
      %v3778 = vpack.c.b16 %v3767, %v3766
      %v3779 = vpack.c.b16 %v3769, %v3768
      %v3780 = vpack.c.b16 %v3771, %v3770
      %v3781 = vpack.c.b16 %v3773, %v3772
      %3790 = vmatpush.bf16.msra.mxu0 %v3781
      %3791 = vmatpush.bf16.msra.mxu0 %v3780
      %3792 = vmatpush.bf16.msra.mxu0 %v3779
      %3793 = vmatpush.bf16.msra.mxu0 %v3778
      %3794 = vmatpush.bf16.msra.mxu0 %v3777
      %3795 = vmatpush.bf16.msra.mxu0 %v3776
      %3796 = vmatpush.bf16.msra.mxu0 %v3775
      %3797 = vmatpush.bf16.msra.mxu0 %v3774
      %3798 = vmatmul.bf16.gmra.mxu0 %v3718
      %v3799 = vpop.f32.mrf.mxu0
      %v3800 = vadd.f32 %v3740, %v3799
      %v3801 = vpop.f32.mrf.mxu0
      %v3802 = vadd.f32 %v3740, %v3801
      %3803 = vmatmul.bf16.gmra.mxu0 %v3719
      %v3804 = vpop.f32.mrf.mxu0
      %v3805 = vadd.f32 %v3740, %v3804
      %v3806 = vpop.f32.mrf.mxu0
      %v3807 = vadd.f32 %v3740, %v3806
      %3808 = vmatmul.bf16.gmra.mxu0 %v3720
      %v3809 = vpop.f32.mrf.mxu0
      %v3810 = vadd.f32 %v3740, %v3809
      %v3811 = vpop.f32.mrf.mxu0
      %v3812 = vadd.f32 %v3740, %v3811
      %3813 = vmatmul.bf16.gmra.mxu0 %v3721
      %v3814 = vpop.f32.mrf.mxu0
      %v3815 = vadd.f32 %v3740, %v3814
      %v3816 = vpop.f32.mrf.mxu0
      %v3817 = vadd.f32 %v3740, %v3816
      %3818 = vdwg.mxu0
      %v3819 = vtanh.pop %v3800
      %v3820 = vtanh.pop %v3802
      %v3821 = vtanh.pop %v3805
      %v3822 = vtanh.pop %v3807
      %v3823 = vtanh.pop %v3810
      %v3824 = vtanh.pop %v3812
      %v3825 = vtanh.pop %v3815
      %v3826 = vtanh.pop %v3817
      %v3827 = vld [vmem:[%s860] sm:$0xff]
      %v3828 = vld [vmem:[%s860 + $0x8] sm:$0xff]
      %v3829 = vld [vmem:[%s860 + $0x10] sm:$0xff]
      %v3830 = vld [vmem:[%s860 + $0x18] sm:$0xff]
      %v3831 = vld [vmem:[%s860 + $0x20] sm:$0xff]
      %v3832 = vld [vmem:[%s860 + $0x28] sm:$0xff]
      %v3833 = vld [vmem:[%s860 + $0x30] sm:$0xff]
      %v3834 = vld [vmem:[%s860 + $0x38] sm:$0xff]
      %v3835 = vadd.f32 %v3827, %v3819
      %v3836 = vadd.f32 %v3828, %v3820
      %v3837 = vadd.f32 %v3829, %v3821
      %v3838 = vadd.f32 %v3830, %v3822
      %v3839 = vadd.f32 %v3831, %v3823
      %v3840 = vadd.f32 %v3832, %v3824
      %v3841 = vadd.f32 %v3833, %v3825
      %v3842 = vadd.f32 %v3834, %v3826
      %v3843 = vmax.f32 %v3835, 0.0
      %v3844 = vmax.f32 %v3836, 0.0
      %v3845 = vmax.f32 %v3837, 0.0
      %v3846 = vmax.f32 %v3838, 0.0
      %v3847 = vmax.f32 %v3839, 0.0
      %v3848 = vmax.f32 %v3840, 0.0
      %v3849 = vmax.f32 %v3841, 0.0
      %v3850 = vmax.f32 %v3842, 0.0
      %v3851 = vmin.f32 %v3843, 1.0
      %v3852 = vmin.f32 %v3844, 1.0
      %v3853 = vmin.f32 %v3845, 1.0
      %v3854 = vmin.f32 %v3846, 1.0
      %v3855 = vmin.f32 %v3847, 1.0
      %v3856 = vmin.f32 %v3848, 1.0
      %v3857 = vmin.f32 %v3849, 1.0
      %v3858 = vmin.f32 %v3850, 1.0
      %3859 = vst [vmem:[%s865] sm:$0xff] %v3851
      %3860 = vst [vmem:[%s865 + $0x8] sm:$0xff] %v3852
      %3861 = vst [vmem:[%s865 + $0x10] sm:$0xff] %v3853
      %3862 = vst [vmem:[%s865 + $0x18] sm:$0xff] %v3854
      %3863 = vst [vmem:[%s865 + $0x20] sm:$0xff] %v3855
      %3864 = vst [vmem:[%s865 + $0x28] sm:$0xff] %v3856
      %3865 = vst [vmem:[%s865 + $0x30] sm:$0xff] %v3857
      %3866 = vst [vmem:[%s865 + $0x38] sm:$0xff] %v3858
      %v3867 = vld [vmem:[%s8 + $0x20] sm:$0xf]
      %v3868 = vld [vmem:[%s8 + $0x24] sm:$0xf]
      %v3869 = vld [vmem:[%s8 + $0x28] sm:$0xf]
      %v3870 = vld [vmem:[%s8 + $0x2c] sm:$0xf]
      %v3871 = vld [vmem:[%s8 + $0x30] sm:$0xf]
      %v3872 = vld [vmem:[%s8 + $0x34] sm:$0xf]
      %v3873 = vld [vmem:[%s8 + $0x38] sm:$0xf]
      %v3874 = vld [vmem:[%s8 + $0x3c] sm:$0xf]
      %v3883 = vunpack.c.l.b16 %v3867
      %v3884 = vunpack.c.l.b16 %v3868
      %v3885 = vunpack.c.l.b16 %v3869
      %v3886 = vunpack.c.l.b16 %v3870
      %v3887 = vunpack.c.l.b16 %v3871
      %v3888 = vunpack.c.l.b16 %v3872
      %v3889 = vunpack.c.l.b16 %v3873
      %v3890 = vunpack.c.l.b16 %v3874
      %v3891 = vpack.c.b16 %v3884, %v3883
      %v3892 = vpack.c.b16 %v3886, %v3885
      %v3893 = vpack.c.b16 %v3888, %v3887
      %v3894 = vpack.c.b16 %v3890, %v3889
      %v3896 = vsel %vm2216, %v3891, 0
      %v3899 = vsel %vm2216, %v3892, 0
      %v3902 = vsel %vm2216, %v3893, 0
      %v3905 = vsel %vm2216, %v3894, 0
      %3907 = vmatpush.bf16.msra.mxu0 0
      %3908 = vmatpush.bf16.msra.mxu0 0
      %3909 = vmatpush.bf16.msra.mxu0 0
      %3910 = vmatpush.bf16.msra.mxu0 0
      %3911 = vmatpush.bf16.msra.mxu0 0
      %3912 = vmatpush.bf16.msra.mxu0 0
      %3913 = vmatpush.bf16.msra.mxu0 0
      %3914 = vmatpush.bf16.msra.mxu0 %v3327
      %3915 = vmatmul.bf16.gmra.mxu0 %v3896
      %v3916 = vpop.f32.mrf.mxu0
      %v3917 = vadd.f32 0.0, %v3916
      %v3918 = vpop.f32.mrf.mxu0
      %v3919 = vadd.f32 0.0, %v3918
      %3920 = vmatmul.bf16.gmra.mxu0 %v3899
      %v3921 = vpop.f32.mrf.mxu0
      %v3922 = vadd.f32 0.0, %v3921
      %v3923 = vpop.f32.mrf.mxu0
      %v3924 = vadd.f32 0.0, %v3923
      %3925 = vmatmul.bf16.gmra.mxu0 %v3902
      %v3926 = vpop.f32.mrf.mxu0
      %v3927 = vadd.f32 0.0, %v3926
      %v3928 = vpop.f32.mrf.mxu0
      %v3929 = vadd.f32 0.0, %v3928
      %3930 = vmatmul.bf16.gmra.mxu0 %v3905
      %v3931 = vpop.f32.mrf.mxu0
      %v3932 = vadd.f32 0.0, %v3931
      %v3933 = vpop.f32.mrf.mxu0
      %v3934 = vadd.f32 0.0, %v3933
      %3935 = vdwg.mxu0
      %v3936 = vld [vmem:[%s9 + $0x40] sm:$0xff]
      %v3937 = vld [vmem:[%s9 + $0x48] sm:$0xff]
      %v3938 = vld [vmem:[%s9 + $0x50] sm:$0xff]
      %v3939 = vld [vmem:[%s9 + $0x58] sm:$0xff]
      %v3940 = vld [vmem:[%s9 + $0x60] sm:$0xff]
      %v3941 = vld [vmem:[%s9 + $0x68] sm:$0xff]
      %v3942 = vld [vmem:[%s9 + $0x70] sm:$0xff]
      %v3943 = vld [vmem:[%s9 + $0x78] sm:$0xff]
      %v3944 = vmul.f32 %v3917, %v3936
      %v3945 = vmul.f32 %v3919, %v3937
      %v3946 = vmul.f32 %v3922, %v3938
      %v3947 = vmul.f32 %v3924, %v3939
      %v3948 = vmul.f32 %v3927, %v3940
      %v3949 = vmul.f32 %v3929, %v3941
      %v3950 = vmul.f32 %v3932, %v3942
      %v3951 = vmul.f32 %v3934, %v3943
      %v3952 = vadd.f32 %v3944, 0.0
      %v3953 = vadd.f32 %v3945, 0.0
      %v3954 = vadd.f32 %v3946, 0.0
      %v3955 = vadd.f32 %v3947, 0.0
      %v3956 = vadd.f32 %v3948, 0.0
      %v3957 = vadd.f32 %v3949, 0.0
      %v3958 = vadd.f32 %v3950, 0.0
      %v3959 = vadd.f32 %v3951, 0.0
      %v3960 = vld [vmem:[%s3421 + $0x20] sm:$0xf]
      %v3961 = vld [vmem:[%s3421 + $0x24] sm:$0xf]
      %v3962 = vld [vmem:[%s3421 + $0x28] sm:$0xf]
      %v3963 = vld [vmem:[%s3421 + $0x2c] sm:$0xf]
      %v3964 = vld [vmem:[%s3421 + $0x30] sm:$0xf]
      %v3965 = vld [vmem:[%s3421 + $0x34] sm:$0xf]
      %v3966 = vld [vmem:[%s3421 + $0x38] sm:$0xf]
      %v3967 = vld [vmem:[%s3421 + $0x3c] sm:$0xf]
      %v3976 = vunpack.c.l.b16 %v3960
      %v3977 = vunpack.c.l.b16 %v3961
      %v3978 = vunpack.c.l.b16 %v3962
      %v3979 = vunpack.c.l.b16 %v3963
      %v3980 = vunpack.c.l.b16 %v3964
      %v3981 = vunpack.c.l.b16 %v3965
      %v3982 = vunpack.c.l.b16 %v3966
      %v3983 = vunpack.c.l.b16 %v3967
      %v3984 = vpack.c.b16 %v3977, %v3976
      %v3985 = vpack.c.b16 %v3979, %v3978
      %v3986 = vpack.c.b16 %v3981, %v3980
      %v3987 = vpack.c.b16 %v3983, %v3982
      %v3989 = vsel %vm2216, %v3984, 0
      %v3992 = vsel %vm2216, %v3985, 0
      %v3995 = vsel %vm2216, %v3986, 0
      %v3998 = vsel %vm2216, %v3987, 0
      %4000 = vmatpush.bf16.msra.mxu0 0
      %4001 = vmatpush.bf16.msra.mxu0 0
      %4002 = vmatpush.bf16.msra.mxu0 0
      %4003 = vmatpush.bf16.msra.mxu0 0
      %4004 = vmatpush.bf16.msra.mxu0 0
      %4005 = vmatpush.bf16.msra.mxu0 0
      %4006 = vmatpush.bf16.msra.mxu0 0
      %4007 = vmatpush.bf16.msra.mxu0 %v3327
      %4008 = vmatmul.bf16.gmra.mxu0 %v3989
      %v4009 = vpop.f32.mrf.mxu0
      %v4010 = vadd.f32 0.0, %v4009
      %v4011 = vpop.f32.mrf.mxu0
      %v4012 = vadd.f32 0.0, %v4011
      %4013 = vmatmul.bf16.gmra.mxu0 %v3992
      %v4014 = vpop.f32.mrf.mxu0
      %v4015 = vadd.f32 0.0, %v4014
      %v4016 = vpop.f32.mrf.mxu0
      %v4017 = vadd.f32 0.0, %v4016
      %4018 = vmatmul.bf16.gmra.mxu0 %v3995
      %v4019 = vpop.f32.mrf.mxu0
      %v4020 = vadd.f32 0.0, %v4019
      %v4021 = vpop.f32.mrf.mxu0
      %v4022 = vadd.f32 0.0, %v4021
      %4023 = vmatmul.bf16.gmra.mxu0 %v3998
      %v4024 = vpop.f32.mrf.mxu0
      %v4025 = vadd.f32 0.0, %v4024
      %v4026 = vpop.f32.mrf.mxu0
      %v4027 = vadd.f32 0.0, %v4026
      %4028 = vdwg.mxu0
      %v4029 = vld [vmem:[%s3491 + $0x40] sm:$0xff]
      %v4030 = vld [vmem:[%s3491 + $0x48] sm:$0xff]
      %v4031 = vld [vmem:[%s3491 + $0x50] sm:$0xff]
      %v4032 = vld [vmem:[%s3491 + $0x58] sm:$0xff]
      %v4033 = vld [vmem:[%s3491 + $0x60] sm:$0xff]
      %v4034 = vld [vmem:[%s3491 + $0x68] sm:$0xff]
      %v4035 = vld [vmem:[%s3491 + $0x70] sm:$0xff]
      %v4036 = vld [vmem:[%s3491 + $0x78] sm:$0xff]
      %v4037 = vmul.f32 %v4010, %v4029
      %v4038 = vmul.f32 %v4012, %v4030
      %v4039 = vmul.f32 %v4015, %v4031
      %v4040 = vmul.f32 %v4017, %v4032
      %v4041 = vmul.f32 %v4020, %v4033
      %v4042 = vmul.f32 %v4022, %v4034
      %v4043 = vmul.f32 %v4025, %v4035
      %v4044 = vmul.f32 %v4027, %v4036
      %v4045 = vadd.f32 %v3952, %v4037
      %v4046 = vadd.f32 %v3953, %v4038
      %v4047 = vadd.f32 %v3954, %v4039
      %v4048 = vadd.f32 %v3955, %v4040
      %v4049 = vadd.f32 %v3956, %v4041
      %v4050 = vadd.f32 %v3957, %v4042
      %v4051 = vadd.f32 %v3958, %v4043
      %v4052 = vadd.f32 %v3959, %v4044
      %v4053 = vld [vmem:[%s3516 + $0x20] sm:$0xf]
      %v4054 = vld [vmem:[%s3516 + $0x24] sm:$0xf]
      %v4055 = vld [vmem:[%s3516 + $0x28] sm:$0xf]
      %v4056 = vld [vmem:[%s3516 + $0x2c] sm:$0xf]
      %v4057 = vld [vmem:[%s3516 + $0x30] sm:$0xf]
      %v4058 = vld [vmem:[%s3516 + $0x34] sm:$0xf]
      %v4059 = vld [vmem:[%s3516 + $0x38] sm:$0xf]
      %v4060 = vld [vmem:[%s3516 + $0x3c] sm:$0xf]
      %v4069 = vunpack.c.l.b16 %v4053
      %v4070 = vunpack.c.l.b16 %v4054
      %v4071 = vunpack.c.l.b16 %v4055
      %v4072 = vunpack.c.l.b16 %v4056
      %v4073 = vunpack.c.l.b16 %v4057
      %v4074 = vunpack.c.l.b16 %v4058
      %v4075 = vunpack.c.l.b16 %v4059
      %v4076 = vunpack.c.l.b16 %v4060
      %v4077 = vpack.c.b16 %v4070, %v4069
      %v4078 = vpack.c.b16 %v4072, %v4071
      %v4079 = vpack.c.b16 %v4074, %v4073
      %v4080 = vpack.c.b16 %v4076, %v4075
      %v4082 = vsel %vm2216, %v4077, 0
      %v4085 = vsel %vm2216, %v4078, 0
      %v4088 = vsel %vm2216, %v4079, 0
      %v4091 = vsel %vm2216, %v4080, 0
      %4093 = vmatpush.bf16.msra.mxu0 0
      %4094 = vmatpush.bf16.msra.mxu0 0
      %4095 = vmatpush.bf16.msra.mxu0 0
      %4096 = vmatpush.bf16.msra.mxu0 0
      %4097 = vmatpush.bf16.msra.mxu0 0
      %4098 = vmatpush.bf16.msra.mxu0 0
      %4099 = vmatpush.bf16.msra.mxu0 0
      %4100 = vmatpush.bf16.msra.mxu0 %v3327
      %4101 = vmatmul.bf16.gmra.mxu0 %v4082
      %v4102 = vpop.f32.mrf.mxu0
      %v4103 = vadd.f32 0.0, %v4102
      %v4104 = vpop.f32.mrf.mxu0
      %v4105 = vadd.f32 0.0, %v4104
      %4106 = vmatmul.bf16.gmra.mxu0 %v4085
      %v4107 = vpop.f32.mrf.mxu0
      %v4108 = vadd.f32 0.0, %v4107
      %v4109 = vpop.f32.mrf.mxu0
      %v4110 = vadd.f32 0.0, %v4109
      %4111 = vmatmul.bf16.gmra.mxu0 %v4088
      %v4112 = vpop.f32.mrf.mxu0
      %v4113 = vadd.f32 0.0, %v4112
      %v4114 = vpop.f32.mrf.mxu0
      %v4115 = vadd.f32 0.0, %v4114
      %4116 = vmatmul.bf16.gmra.mxu0 %v4091
      %v4117 = vpop.f32.mrf.mxu0
      %v4118 = vadd.f32 0.0, %v4117
      %v4119 = vpop.f32.mrf.mxu0
      %v4120 = vadd.f32 0.0, %v4119
      %4121 = vdwg.mxu0
      %v4122 = vld [vmem:[%s3586 + $0x40] sm:$0xff]
      %v4123 = vld [vmem:[%s3586 + $0x48] sm:$0xff]
      %v4124 = vld [vmem:[%s3586 + $0x50] sm:$0xff]
      %v4125 = vld [vmem:[%s3586 + $0x58] sm:$0xff]
      %v4126 = vld [vmem:[%s3586 + $0x60] sm:$0xff]
      %v4127 = vld [vmem:[%s3586 + $0x68] sm:$0xff]
      %v4128 = vld [vmem:[%s3586 + $0x70] sm:$0xff]
      %v4129 = vld [vmem:[%s3586 + $0x78] sm:$0xff]
      %v4130 = vmul.f32 %v4103, %v4122
      %v4131 = vmul.f32 %v4105, %v4123
      %v4132 = vmul.f32 %v4108, %v4124
      %v4133 = vmul.f32 %v4110, %v4125
      %v4134 = vmul.f32 %v4113, %v4126
      %v4135 = vmul.f32 %v4115, %v4127
      %v4136 = vmul.f32 %v4118, %v4128
      %v4137 = vmul.f32 %v4120, %v4129
      %v4138 = vadd.f32 %v4045, %v4130
      %v4139 = vadd.f32 %v4046, %v4131
      %v4140 = vadd.f32 %v4047, %v4132
      %v4141 = vadd.f32 %v4048, %v4133
      %v4142 = vadd.f32 %v4049, %v4134
      %v4143 = vadd.f32 %v4050, %v4135
      %v4144 = vadd.f32 %v4051, %v4136
      %v4145 = vadd.f32 %v4052, %v4137
      %v4146 = vld [vmem:[%s3611 + $0x20] sm:$0xf]
      %v4147 = vld [vmem:[%s3611 + $0x24] sm:$0xf]
      %v4148 = vld [vmem:[%s3611 + $0x28] sm:$0xf]
      %v4149 = vld [vmem:[%s3611 + $0x2c] sm:$0xf]
      %v4150 = vld [vmem:[%s3611 + $0x30] sm:$0xf]
      %v4151 = vld [vmem:[%s3611 + $0x34] sm:$0xf]
      %v4152 = vld [vmem:[%s3611 + $0x38] sm:$0xf]
      %v4153 = vld [vmem:[%s3611 + $0x3c] sm:$0xf]
      %v4162 = vunpack.c.l.b16 %v4146
      %v4163 = vunpack.c.l.b16 %v4147
      %v4164 = vunpack.c.l.b16 %v4148
      %v4165 = vunpack.c.l.b16 %v4149
      %v4166 = vunpack.c.l.b16 %v4150
      %v4167 = vunpack.c.l.b16 %v4151
      %v4168 = vunpack.c.l.b16 %v4152
      %v4169 = vunpack.c.l.b16 %v4153
      %v4170 = vpack.c.b16 %v4163, %v4162
      %v4171 = vpack.c.b16 %v4165, %v4164
      %v4172 = vpack.c.b16 %v4167, %v4166
      %v4173 = vpack.c.b16 %v4169, %v4168
      %v4175 = vsel %vm2216, %v4170, 0
      %v4178 = vsel %vm2216, %v4171, 0
      %v4181 = vsel %vm2216, %v4172, 0
      %v4184 = vsel %vm2216, %v4173, 0
      %4186 = vmatpush.bf16.msra.mxu0 0
      %4187 = vmatpush.bf16.msra.mxu0 0
      %4188 = vmatpush.bf16.msra.mxu0 0
      %4189 = vmatpush.bf16.msra.mxu0 0
      %4190 = vmatpush.bf16.msra.mxu0 0
      %4191 = vmatpush.bf16.msra.mxu0 0
      %4192 = vmatpush.bf16.msra.mxu0 0
      %4193 = vmatpush.bf16.msra.mxu0 %v3327
      %4194 = vmatmul.bf16.gmra.mxu0 %v4175
      %v4195 = vpop.f32.mrf.mxu0
      %v4196 = vadd.f32 0.0, %v4195
      %v4197 = vpop.f32.mrf.mxu0
      %v4198 = vadd.f32 0.0, %v4197
      %4199 = vmatmul.bf16.gmra.mxu0 %v4178
      %v4200 = vpop.f32.mrf.mxu0
      %v4201 = vadd.f32 0.0, %v4200
      %v4202 = vpop.f32.mrf.mxu0
      %v4203 = vadd.f32 0.0, %v4202
      %4204 = vmatmul.bf16.gmra.mxu0 %v4181
      %v4205 = vpop.f32.mrf.mxu0
      %v4206 = vadd.f32 0.0, %v4205
      %v4207 = vpop.f32.mrf.mxu0
      %v4208 = vadd.f32 0.0, %v4207
      %4209 = vmatmul.bf16.gmra.mxu0 %v4184
      %v4210 = vpop.f32.mrf.mxu0
      %v4211 = vadd.f32 0.0, %v4210
      %v4212 = vpop.f32.mrf.mxu0
      %v4213 = vadd.f32 0.0, %v4212
      %4214 = vdwg.mxu0
      %v4215 = vld [vmem:[%s3681 + $0x40] sm:$0xff]
      %v4216 = vld [vmem:[%s3681 + $0x48] sm:$0xff]
      %v4217 = vld [vmem:[%s3681 + $0x50] sm:$0xff]
      %v4218 = vld [vmem:[%s3681 + $0x58] sm:$0xff]
      %v4219 = vld [vmem:[%s3681 + $0x60] sm:$0xff]
      %v4220 = vld [vmem:[%s3681 + $0x68] sm:$0xff]
      %v4221 = vld [vmem:[%s3681 + $0x70] sm:$0xff]
      %v4222 = vld [vmem:[%s3681 + $0x78] sm:$0xff]
      %v4223 = vmul.f32 %v4196, %v4215
      %v4224 = vmul.f32 %v4198, %v4216
      %v4225 = vmul.f32 %v4201, %v4217
      %v4226 = vmul.f32 %v4203, %v4218
      %v4227 = vmul.f32 %v4206, %v4219
      %v4228 = vmul.f32 %v4208, %v4220
      %v4229 = vmul.f32 %v4211, %v4221
      %v4230 = vmul.f32 %v4213, %v4222
      %v4231 = vadd.f32 %v4138, %v4223
      %v4232 = vadd.f32 %v4139, %v4224
      %v4233 = vadd.f32 %v4140, %v4225
      %v4234 = vadd.f32 %v4141, %v4226
      %v4235 = vadd.f32 %v4142, %v4227
      %v4236 = vadd.f32 %v4143, %v4228
      %v4237 = vadd.f32 %v4144, %v4229
      %v4238 = vadd.f32 %v4145, %v4230
      %v4239 = vld [vmem:[%s10] sm:$0x1]
      %v4241 = vperm.slane %v4239, 0
      %v4243 = vadd.f32 %v4231, %v4241
      %v4244 = vadd.f32 %v4232, %v4241
      %v4245 = vadd.f32 %v4233, %v4241
      %v4246 = vadd.f32 %v4234, %v4241
      %v4247 = vadd.f32 %v4235, %v4241
      %v4248 = vadd.f32 %v4236, %v4241
      %v4249 = vadd.f32 %v4237, %v4241
      %v4250 = vadd.f32 %v4238, %v4241
      %v4251 = vpack.c.bf16 %v4244, %v4243
      %v4252 = vpack.c.bf16 %v4246, %v4245
      %v4253 = vpack.c.bf16 %v4248, %v4247
      %v4254 = vpack.c.bf16 %v4250, %v4249
      %v4255 = vld [vmem:[%s11] sm:$0xf]
      %v4256 = vld [vmem:[%s11 + $0x4] sm:$0xf]
      %v4257 = vld [vmem:[%s11 + $0x8] sm:$0xf]
      %v4258 = vld [vmem:[%s11 + $0xc] sm:$0xf]
      %v4259 = vld [vmem:[%s11 + $0x10] sm:$0xf]
      %v4260 = vld [vmem:[%s11 + $0x14] sm:$0xf]
      %v4261 = vld [vmem:[%s11 + $0x18] sm:$0xf]
      %v4262 = vld [vmem:[%s11 + $0x1c] sm:$0xf]
      %v4263 = vld [vmem:[%s11 + $0x20] sm:$0xf]
      %v4264 = vld [vmem:[%s11 + $0x24] sm:$0xf]
      %v4265 = vld [vmem:[%s11 + $0x28] sm:$0xf]
      %v4266 = vld [vmem:[%s11 + $0x2c] sm:$0xf]
      %v4267 = vld [vmem:[%s11 + $0x30] sm:$0xf]
      %v4268 = vld [vmem:[%s11 + $0x34] sm:$0xf]
      %v4269 = vld [vmem:[%s11 + $0x38] sm:$0xf]
      %v4270 = vld [vmem:[%s11 + $0x3c] sm:$0xf]
      %v4271 = vld [vmem:[%s12] sm:$0x1]
      %v4273 = vperm.slane %v4271, 0
      %v4291 = vunpack.c.l.b16 %v4255
      %v4292 = vunpack.c.l.b16 %v4256
      %v4293 = vunpack.c.l.b16 %v4257
      %v4294 = vunpack.c.l.b16 %v4258
      %v4295 = vunpack.c.l.b16 %v4259
      %v4296 = vunpack.c.l.b16 %v4260
      %v4297 = vunpack.c.l.b16 %v4261
      %v4298 = vunpack.c.l.b16 %v4262
      %v4299 = vunpack.c.l.b16 %v4263
      %v4300 = vunpack.c.l.b16 %v4264
      %v4301 = vunpack.c.l.b16 %v4265
      %v4302 = vunpack.c.l.b16 %v4266
      %v4303 = vunpack.c.l.b16 %v4267
      %v4304 = vunpack.c.l.b16 %v4268
      %v4305 = vunpack.c.l.b16 %v4269
      %v4306 = vunpack.c.l.b16 %v4270
      %v4307 = vpack.c.b16 %v4292, %v4291
      %v4308 = vpack.c.b16 %v4294, %v4293
      %v4309 = vpack.c.b16 %v4296, %v4295
      %v4310 = vpack.c.b16 %v4298, %v4297
      %v4311 = vpack.c.b16 %v4300, %v4299
      %v4312 = vpack.c.b16 %v4302, %v4301
      %v4313 = vpack.c.b16 %v4304, %v4303
      %v4314 = vpack.c.b16 %v4306, %v4305
      %4323 = vmatpush.bf16.msra.mxu0 %v4314
      %4324 = vmatpush.bf16.msra.mxu0 %v4313
      %4325 = vmatpush.bf16.msra.mxu0 %v4312
      %4326 = vmatpush.bf16.msra.mxu0 %v4311
      %4327 = vmatpush.bf16.msra.mxu0 %v4310
      %4328 = vmatpush.bf16.msra.mxu0 %v4309
      %4329 = vmatpush.bf16.msra.mxu0 %v4308
      %4330 = vmatpush.bf16.msra.mxu0 %v4307
      %4331 = vmatmul.bf16.gmra.mxu0 %v4251
      %v4332 = vpop.f32.mrf.mxu0
      %v4333 = vadd.f32 %v4273, %v4332
      %v4334 = vpop.f32.mrf.mxu0
      %v4335 = vadd.f32 %v4273, %v4334
      %4336 = vmatmul.bf16.gmra.mxu0 %v4252
      %v4337 = vpop.f32.mrf.mxu0
      %v4338 = vadd.f32 %v4273, %v4337
      %v4339 = vpop.f32.mrf.mxu0
      %v4340 = vadd.f32 %v4273, %v4339
      %4341 = vmatmul.bf16.gmra.mxu0 %v4253
      %v4342 = vpop.f32.mrf.mxu0
      %v4343 = vadd.f32 %v4273, %v4342
      %v4344 = vpop.f32.mrf.mxu0
      %v4345 = vadd.f32 %v4273, %v4344
      %4346 = vmatmul.bf16.gmra.mxu0 %v4254
      %v4347 = vpop.f32.mrf.mxu0
      %v4348 = vadd.f32 %v4273, %v4347
      %v4349 = vpop.f32.mrf.mxu0
      %v4350 = vadd.f32 %v4273, %v4349
      %4351 = vdwg.mxu0
      %v4352 = vtanh.pop %v4333
      %v4353 = vtanh.pop %v4335
      %v4354 = vtanh.pop %v4338
      %v4355 = vtanh.pop %v4340
      %v4356 = vtanh.pop %v4343
      %v4357 = vtanh.pop %v4345
      %v4358 = vtanh.pop %v4348
      %v4359 = vtanh.pop %v4350
      %v4360 = vld [vmem:[%s860 + $0x40] sm:$0xff]
      %v4361 = vld [vmem:[%s860 + $0x48] sm:$0xff]
      %v4362 = vld [vmem:[%s860 + $0x50] sm:$0xff]
      %v4363 = vld [vmem:[%s860 + $0x58] sm:$0xff]
      %v4364 = vld [vmem:[%s860 + $0x60] sm:$0xff]
      %v4365 = vld [vmem:[%s860 + $0x68] sm:$0xff]
      %v4366 = vld [vmem:[%s860 + $0x70] sm:$0xff]
      %v4367 = vld [vmem:[%s860 + $0x78] sm:$0xff]
      %v4368 = vadd.f32 %v4360, %v4352
      %v4369 = vadd.f32 %v4361, %v4353
      %v4370 = vadd.f32 %v4362, %v4354
      %v4371 = vadd.f32 %v4363, %v4355
      %v4372 = vadd.f32 %v4364, %v4356
      %v4373 = vadd.f32 %v4365, %v4357
      %v4374 = vadd.f32 %v4366, %v4358
      %v4375 = vadd.f32 %v4367, %v4359
      %v4376 = vmax.f32 %v4368, 0.0
      %v4377 = vmax.f32 %v4369, 0.0
      %v4378 = vmax.f32 %v4370, 0.0
      %v4379 = vmax.f32 %v4371, 0.0
      %v4380 = vmax.f32 %v4372, 0.0
      %v4381 = vmax.f32 %v4373, 0.0
      %v4382 = vmax.f32 %v4374, 0.0
      %v4383 = vmax.f32 %v4375, 0.0
      %v4384 = vmin.f32 %v4376, 1.0
      %v4385 = vmin.f32 %v4377, 1.0
      %v4386 = vmin.f32 %v4378, 1.0
      %v4387 = vmin.f32 %v4379, 1.0
      %v4388 = vmin.f32 %v4380, 1.0
      %v4389 = vmin.f32 %v4381, 1.0
      %v4390 = vmin.f32 %v4382, 1.0
      %v4391 = vmin.f32 %v4383, 1.0
      %4392 = vst [vmem:[%s865 + $0x40] sm:$0xff] %v4384
      %4393 = vst [vmem:[%s865 + $0x48] sm:$0xff] %v4385
      %4394 = vst [vmem:[%s865 + $0x50] sm:$0xff] %v4386
      %4395 = vst [vmem:[%s865 + $0x58] sm:$0xff] %v4387
      %4396 = vst [vmem:[%s865 + $0x60] sm:$0xff] %v4388
      %4397 = vst [vmem:[%s865 + $0x68] sm:$0xff] %v4389
      %4398 = vst [vmem:[%s865 + $0x70] sm:$0xff] %v4390
      %4399 = vst [vmem:[%s865 + $0x78] sm:$0xff] %v4391
      %v4400 = vld [vmem:[%s8 + $0x40] sm:$0xf]
      %v4401 = vld [vmem:[%s8 + $0x44] sm:$0xf]
      %v4402 = vld [vmem:[%s8 + $0x48] sm:$0xf]
      %v4403 = vld [vmem:[%s8 + $0x4c] sm:$0xf]
      %v4404 = vld [vmem:[%s8 + $0x50] sm:$0xf]
      %v4405 = vld [vmem:[%s8 + $0x54] sm:$0xf]
      %v4406 = vld [vmem:[%s8 + $0x58] sm:$0xf]
      %v4407 = vld [vmem:[%s8 + $0x5c] sm:$0xf]
      %v4416 = vunpack.c.l.b16 %v4400
      %v4417 = vunpack.c.l.b16 %v4401
      %v4418 = vunpack.c.l.b16 %v4402
      %v4419 = vunpack.c.l.b16 %v4403
      %v4420 = vunpack.c.l.b16 %v4404
      %v4421 = vunpack.c.l.b16 %v4405
      %v4422 = vunpack.c.l.b16 %v4406
      %v4423 = vunpack.c.l.b16 %v4407
      %v4424 = vpack.c.b16 %v4417, %v4416
      %v4425 = vpack.c.b16 %v4419, %v4418
      %v4426 = vpack.c.b16 %v4421, %v4420
      %v4427 = vpack.c.b16 %v4423, %v4422
      %v4429 = vsel %vm2216, %v4424, 0
      %v4432 = vsel %vm2216, %v4425, 0
      %v4435 = vsel %vm2216, %v4426, 0
      %v4438 = vsel %vm2216, %v4427, 0
      %4440 = vmatpush.bf16.msra.mxu0 0
      %4441 = vmatpush.bf16.msra.mxu0 0
      %4442 = vmatpush.bf16.msra.mxu0 0
      %4443 = vmatpush.bf16.msra.mxu0 0
      %4444 = vmatpush.bf16.msra.mxu0 0
      %4445 = vmatpush.bf16.msra.mxu0 0
      %4446 = vmatpush.bf16.msra.mxu0 0
      %4447 = vmatpush.bf16.msra.mxu0 %v3327
      %4448 = vmatmul.bf16.gmra.mxu0 %v4429
      %v4449 = vpop.f32.mrf.mxu0
      %v4450 = vadd.f32 0.0, %v4449
      %v4451 = vpop.f32.mrf.mxu0
      %v4452 = vadd.f32 0.0, %v4451
      %4453 = vmatmul.bf16.gmra.mxu0 %v4432
      %v4454 = vpop.f32.mrf.mxu0
      %v4455 = vadd.f32 0.0, %v4454
      %v4456 = vpop.f32.mrf.mxu0
      %v4457 = vadd.f32 0.0, %v4456
      %4458 = vmatmul.bf16.gmra.mxu0 %v4435
      %v4459 = vpop.f32.mrf.mxu0
      %v4460 = vadd.f32 0.0, %v4459
      %v4461 = vpop.f32.mrf.mxu0
      %v4462 = vadd.f32 0.0, %v4461
      %4463 = vmatmul.bf16.gmra.mxu0 %v4438
      %v4464 = vpop.f32.mrf.mxu0
      %v4465 = vadd.f32 0.0, %v4464
      %v4466 = vpop.f32.mrf.mxu0
      %v4467 = vadd.f32 0.0, %v4466
      %4468 = vdwg.mxu0
      %v4469 = vld [vmem:[%s9 + $0x80] sm:$0xff]
      %v4470 = vld [vmem:[%s9 + $0x88] sm:$0xff]
      %v4471 = vld [vmem:[%s9 + $0x90] sm:$0xff]
      %v4472 = vld [vmem:[%s9 + $0x98] sm:$0xff]
      %v4473 = vld [vmem:[%s9 + $0xa0] sm:$0xff]
      %v4474 = vld [vmem:[%s9 + $0xa8] sm:$0xff]
      %v4475 = vld [vmem:[%s9 + $0xb0] sm:$0xff]
      %v4476 = vld [vmem:[%s9 + $0xb8] sm:$0xff]
      %v4477 = vmul.f32 %v4450, %v4469
      %v4478 = vmul.f32 %v4452, %v4470
      %v4479 = vmul.f32 %v4455, %v4471
      %v4480 = vmul.f32 %v4457, %v4472
      %v4481 = vmul.f32 %v4460, %v4473
      %v4482 = vmul.f32 %v4462, %v4474
      %v4483 = vmul.f32 %v4465, %v4475
      %v4484 = vmul.f32 %v4467, %v4476
      %v4485 = vadd.f32 %v4477, 0.0
      %v4486 = vadd.f32 %v4478, 0.0
      %v4487 = vadd.f32 %v4479, 0.0
      %v4488 = vadd.f32 %v4480, 0.0
      %v4489 = vadd.f32 %v4481, 0.0
      %v4490 = vadd.f32 %v4482, 0.0
      %v4491 = vadd.f32 %v4483, 0.0
      %v4492 = vadd.f32 %v4484, 0.0
      %v4493 = vld [vmem:[%s3421 + $0x40] sm:$0xf]
      %v4494 = vld [vmem:[%s3421 + $0x44] sm:$0xf]
      %v4495 = vld [vmem:[%s3421 + $0x48] sm:$0xf]
      %v4496 = vld [vmem:[%s3421 + $0x4c] sm:$0xf]
      %v4497 = vld [vmem:[%s3421 + $0x50] sm:$0xf]
      %v4498 = vld [vmem:[%s3421 + $0x54] sm:$0xf]
      %v4499 = vld [vmem:[%s3421 + $0x58] sm:$0xf]
      %v4500 = vld [vmem:[%s3421 + $0x5c] sm:$0xf]
      %v4509 = vunpack.c.l.b16 %v4493
      %v4510 = vunpack.c.l.b16 %v4494
      %v4511 = vunpack.c.l.b16 %v4495
      %v4512 = vunpack.c.l.b16 %v4496
      %v4513 = vunpack.c.l.b16 %v4497
      %v4514 = vunpack.c.l.b16 %v4498
      %v4515 = vunpack.c.l.b16 %v4499
      %v4516 = vunpack.c.l.b16 %v4500
      %v4517 = vpack.c.b16 %v4510, %v4509
      %v4518 = vpack.c.b16 %v4512, %v4511
      %v4519 = vpack.c.b16 %v4514, %v4513
      %v4520 = vpack.c.b16 %v4516, %v4515
      %v4522 = vsel %vm2216, %v4517, 0
      %v4525 = vsel %vm2216, %v4518, 0
      %v4528 = vsel %vm2216, %v4519, 0
      %v4531 = vsel %vm2216, %v4520, 0
      %4533 = vmatpush.bf16.msra.mxu0 0
      %4534 = vmatpush.bf16.msra.mxu0 0
      %4535 = vmatpush.bf16.msra.mxu0 0
      %4536 = vmatpush.bf16.msra.mxu0 0
      %4537 = vmatpush.bf16.msra.mxu0 0
      %4538 = vmatpush.bf16.msra.mxu0 0
      %4539 = vmatpush.bf16.msra.mxu0 0
      %4540 = vmatpush.bf16.msra.mxu0 %v3327
      %4541 = vmatmul.bf16.gmra.mxu0 %v4522
      %v4542 = vpop.f32.mrf.mxu0
      %v4543 = vadd.f32 0.0, %v4542
      %v4544 = vpop.f32.mrf.mxu0
      %v4545 = vadd.f32 0.0, %v4544
      %4546 = vmatmul.bf16.gmra.mxu0 %v4525
      %v4547 = vpop.f32.mrf.mxu0
      %v4548 = vadd.f32 0.0, %v4547
      %v4549 = vpop.f32.mrf.mxu0
      %v4550 = vadd.f32 0.0, %v4549
      %4551 = vmatmul.bf16.gmra.mxu0 %v4528
      %v4552 = vpop.f32.mrf.mxu0
      %v4553 = vadd.f32 0.0, %v4552
      %v4554 = vpop.f32.mrf.mxu0
      %v4555 = vadd.f32 0.0, %v4554
      %4556 = vmatmul.bf16.gmra.mxu0 %v4531
      %v4557 = vpop.f32.mrf.mxu0
      %v4558 = vadd.f32 0.0, %v4557
      %v4559 = vpop.f32.mrf.mxu0
      %v4560 = vadd.f32 0.0, %v4559
      %4561 = vdwg.mxu0
      %v4562 = vld [vmem:[%s3491 + $0x80] sm:$0xff]
      %v4563 = vld [vmem:[%s3491 + $0x88] sm:$0xff]
      %v4564 = vld [vmem:[%s3491 + $0x90] sm:$0xff]
      %v4565 = vld [vmem:[%s3491 + $0x98] sm:$0xff]
      %v4566 = vld [vmem:[%s3491 + $0xa0] sm:$0xff]
      %v4567 = vld [vmem:[%s3491 + $0xa8] sm:$0xff]
      %v4568 = vld [vmem:[%s3491 + $0xb0] sm:$0xff]
      %v4569 = vld [vmem:[%s3491 + $0xb8] sm:$0xff]
      %v4570 = vmul.f32 %v4543, %v4562
      %v4571 = vmul.f32 %v4545, %v4563
      %v4572 = vmul.f32 %v4548, %v4564
      %v4573 = vmul.f32 %v4550, %v4565
      %v4574 = vmul.f32 %v4553, %v4566
      %v4575 = vmul.f32 %v4555, %v4567
      %v4576 = vmul.f32 %v4558, %v4568
      %v4577 = vmul.f32 %v4560, %v4569
      %v4578 = vadd.f32 %v4485, %v4570
      %v4579 = vadd.f32 %v4486, %v4571
      %v4580 = vadd.f32 %v4487, %v4572
      %v4581 = vadd.f32 %v4488, %v4573
      %v4582 = vadd.f32 %v4489, %v4574
      %v4583 = vadd.f32 %v4490, %v4575
      %v4584 = vadd.f32 %v4491, %v4576
      %v4585 = vadd.f32 %v4492, %v4577
      %v4586 = vld [vmem:[%s3516 + $0x40] sm:$0xf]
      %v4587 = vld [vmem:[%s3516 + $0x44] sm:$0xf]
      %v4588 = vld [vmem:[%s3516 + $0x48] sm:$0xf]
      %v4589 = vld [vmem:[%s3516 + $0x4c] sm:$0xf]
      %v4590 = vld [vmem:[%s3516 + $0x50] sm:$0xf]
      %v4591 = vld [vmem:[%s3516 + $0x54] sm:$0xf]
      %v4592 = vld [vmem:[%s3516 + $0x58] sm:$0xf]
      %v4593 = vld [vmem:[%s3516 + $0x5c] sm:$0xf]
      %v4602 = vunpack.c.l.b16 %v4586
      %v4603 = vunpack.c.l.b16 %v4587
      %v4604 = vunpack.c.l.b16 %v4588
      %v4605 = vunpack.c.l.b16 %v4589
      %v4606 = vunpack.c.l.b16 %v4590
      %v4607 = vunpack.c.l.b16 %v4591
      %v4608 = vunpack.c.l.b16 %v4592
      %v4609 = vunpack.c.l.b16 %v4593
      %v4610 = vpack.c.b16 %v4603, %v4602
      %v4611 = vpack.c.b16 %v4605, %v4604
      %v4612 = vpack.c.b16 %v4607, %v4606
      %v4613 = vpack.c.b16 %v4609, %v4608
      %v4615 = vsel %vm2216, %v4610, 0
      %v4618 = vsel %vm2216, %v4611, 0
      %v4621 = vsel %vm2216, %v4612, 0
      %v4624 = vsel %vm2216, %v4613, 0
      %4626 = vmatpush.bf16.msra.mxu0 0
      %4627 = vmatpush.bf16.msra.mxu0 0
      %4628 = vmatpush.bf16.msra.mxu0 0
      %4629 = vmatpush.bf16.msra.mxu0 0
      %4630 = vmatpush.bf16.msra.mxu0 0
      %4631 = vmatpush.bf16.msra.mxu0 0
      %4632 = vmatpush.bf16.msra.mxu0 0
      %4633 = vmatpush.bf16.msra.mxu0 %v3327
      %4634 = vmatmul.bf16.gmra.mxu0 %v4615
      %v4635 = vpop.f32.mrf.mxu0
      %v4636 = vadd.f32 0.0, %v4635
      %v4637 = vpop.f32.mrf.mxu0
      %v4638 = vadd.f32 0.0, %v4637
      %4639 = vmatmul.bf16.gmra.mxu0 %v4618
      %v4640 = vpop.f32.mrf.mxu0
      %v4641 = vadd.f32 0.0, %v4640
      %v4642 = vpop.f32.mrf.mxu0
      %v4643 = vadd.f32 0.0, %v4642
      %4644 = vmatmul.bf16.gmra.mxu0 %v4621
      %v4645 = vpop.f32.mrf.mxu0
      %v4646 = vadd.f32 0.0, %v4645
      %v4647 = vpop.f32.mrf.mxu0
      %v4648 = vadd.f32 0.0, %v4647
      %4649 = vmatmul.bf16.gmra.mxu0 %v4624
      %v4650 = vpop.f32.mrf.mxu0
      %v4651 = vadd.f32 0.0, %v4650
      %v4652 = vpop.f32.mrf.mxu0
      %v4653 = vadd.f32 0.0, %v4652
      %4654 = vdwg.mxu0
      %v4655 = vld [vmem:[%s3586 + $0x80] sm:$0xff]
      %v4656 = vld [vmem:[%s3586 + $0x88] sm:$0xff]
      %v4657 = vld [vmem:[%s3586 + $0x90] sm:$0xff]
      %v4658 = vld [vmem:[%s3586 + $0x98] sm:$0xff]
      %v4659 = vld [vmem:[%s3586 + $0xa0] sm:$0xff]
      %v4660 = vld [vmem:[%s3586 + $0xa8] sm:$0xff]
      %v4661 = vld [vmem:[%s3586 + $0xb0] sm:$0xff]
      %v4662 = vld [vmem:[%s3586 + $0xb8] sm:$0xff]
      %v4663 = vmul.f32 %v4636, %v4655
      %v4664 = vmul.f32 %v4638, %v4656
      %v4665 = vmul.f32 %v4641, %v4657
      %v4666 = vmul.f32 %v4643, %v4658
      %v4667 = vmul.f32 %v4646, %v4659
      %v4668 = vmul.f32 %v4648, %v4660
      %v4669 = vmul.f32 %v4651, %v4661
      %v4670 = vmul.f32 %v4653, %v4662
      %v4671 = vadd.f32 %v4578, %v4663
      %v4672 = vadd.f32 %v4579, %v4664
      %v4673 = vadd.f32 %v4580, %v4665
      %v4674 = vadd.f32 %v4581, %v4666
      %v4675 = vadd.f32 %v4582, %v4667
      %v4676 = vadd.f32 %v4583, %v4668
      %v4677 = vadd.f32 %v4584, %v4669
      %v4678 = vadd.f32 %v4585, %v4670
      %v4679 = vld [vmem:[%s3611 + $0x40] sm:$0xf]
      %v4680 = vld [vmem:[%s3611 + $0x44] sm:$0xf]
      %v4681 = vld [vmem:[%s3611 + $0x48] sm:$0xf]
      %v4682 = vld [vmem:[%s3611 + $0x4c] sm:$0xf]
      %v4683 = vld [vmem:[%s3611 + $0x50] sm:$0xf]
      %v4684 = vld [vmem:[%s3611 + $0x54] sm:$0xf]
      %v4685 = vld [vmem:[%s3611 + $0x58] sm:$0xf]
      %v4686 = vld [vmem:[%s3611 + $0x5c] sm:$0xf]
      %v4695 = vunpack.c.l.b16 %v4679
      %v4696 = vunpack.c.l.b16 %v4680
      %v4697 = vunpack.c.l.b16 %v4681
      %v4698 = vunpack.c.l.b16 %v4682
      %v4699 = vunpack.c.l.b16 %v4683
      %v4700 = vunpack.c.l.b16 %v4684
      %v4701 = vunpack.c.l.b16 %v4685
      %v4702 = vunpack.c.l.b16 %v4686
      %v4703 = vpack.c.b16 %v4696, %v4695
      %v4704 = vpack.c.b16 %v4698, %v4697
      %v4705 = vpack.c.b16 %v4700, %v4699
      %v4706 = vpack.c.b16 %v4702, %v4701
      %v4708 = vsel %vm2216, %v4703, 0
      %v4711 = vsel %vm2216, %v4704, 0
      %v4714 = vsel %vm2216, %v4705, 0
      %v4717 = vsel %vm2216, %v4706, 0
      %4719 = vmatpush.bf16.msra.mxu0 0
      %4720 = vmatpush.bf16.msra.mxu0 0
      %4721 = vmatpush.bf16.msra.mxu0 0
      %4722 = vmatpush.bf16.msra.mxu0 0
      %4723 = vmatpush.bf16.msra.mxu0 0
      %4724 = vmatpush.bf16.msra.mxu0 0
      %4725 = vmatpush.bf16.msra.mxu0 0
      %4726 = vmatpush.bf16.msra.mxu0 %v3327
      %4727 = vmatmul.bf16.gmra.mxu0 %v4708
      %v4728 = vpop.f32.mrf.mxu0
      %v4729 = vadd.f32 0.0, %v4728
      %v4730 = vpop.f32.mrf.mxu0
      %v4731 = vadd.f32 0.0, %v4730
      %4732 = vmatmul.bf16.gmra.mxu0 %v4711
      %v4733 = vpop.f32.mrf.mxu0
      %v4734 = vadd.f32 0.0, %v4733
      %v4735 = vpop.f32.mrf.mxu0
      %v4736 = vadd.f32 0.0, %v4735
      %4737 = vmatmul.bf16.gmra.mxu0 %v4714
      %v4738 = vpop.f32.mrf.mxu0
      %v4739 = vadd.f32 0.0, %v4738
      %v4740 = vpop.f32.mrf.mxu0
      %v4741 = vadd.f32 0.0, %v4740
      %4742 = vmatmul.bf16.gmra.mxu0 %v4717
      %v4743 = vpop.f32.mrf.mxu0
      %v4744 = vadd.f32 0.0, %v4743
      %v4745 = vpop.f32.mrf.mxu0
      %v4746 = vadd.f32 0.0, %v4745
      %4747 = vdwg.mxu0
      %v4748 = vld [vmem:[%s3681 + $0x80] sm:$0xff]
      %v4749 = vld [vmem:[%s3681 + $0x88] sm:$0xff]
      %v4750 = vld [vmem:[%s3681 + $0x90] sm:$0xff]
      %v4751 = vld [vmem:[%s3681 + $0x98] sm:$0xff]
      %v4752 = vld [vmem:[%s3681 + $0xa0] sm:$0xff]
      %v4753 = vld [vmem:[%s3681 + $0xa8] sm:$0xff]
      %v4754 = vld [vmem:[%s3681 + $0xb0] sm:$0xff]
      %v4755 = vld [vmem:[%s3681 + $0xb8] sm:$0xff]
      %v4756 = vmul.f32 %v4729, %v4748
      %v4757 = vmul.f32 %v4731, %v4749
      %v4758 = vmul.f32 %v4734, %v4750
      %v4759 = vmul.f32 %v4736, %v4751
      %v4760 = vmul.f32 %v4739, %v4752
      %v4761 = vmul.f32 %v4741, %v4753
      %v4762 = vmul.f32 %v4744, %v4754
      %v4763 = vmul.f32 %v4746, %v4755
      %v4764 = vadd.f32 %v4671, %v4756
      %v4765 = vadd.f32 %v4672, %v4757
      %v4766 = vadd.f32 %v4673, %v4758
      %v4767 = vadd.f32 %v4674, %v4759
      %v4768 = vadd.f32 %v4675, %v4760
      %v4769 = vadd.f32 %v4676, %v4761
      %v4770 = vadd.f32 %v4677, %v4762
      %v4771 = vadd.f32 %v4678, %v4763
      %v4772 = vld [vmem:[%s10] sm:$0x1]
      %v4774 = vperm.slane %v4772, 0
      %v4776 = vadd.f32 %v4764, %v4774
      %v4777 = vadd.f32 %v4765, %v4774
      %v4778 = vadd.f32 %v4766, %v4774
      %v4779 = vadd.f32 %v4767, %v4774
      %v4780 = vadd.f32 %v4768, %v4774
      %v4781 = vadd.f32 %v4769, %v4774
      %v4782 = vadd.f32 %v4770, %v4774
      %v4783 = vadd.f32 %v4771, %v4774
      %v4784 = vpack.c.bf16 %v4777, %v4776
      %v4785 = vpack.c.bf16 %v4779, %v4778
      %v4786 = vpack.c.bf16 %v4781, %v4780
      %v4787 = vpack.c.bf16 %v4783, %v4782
      %v4788 = vld [vmem:[%s11] sm:$0xf]
      %v4789 = vld [vmem:[%s11 + $0x4] sm:$0xf]
      %v4790 = vld [vmem:[%s11 + $0x8] sm:$0xf]
      %v4791 = vld [vmem:[%s11 + $0xc] sm:$0xf]
      %v4792 = vld [vmem:[%s11 + $0x10] sm:$0xf]
      %v4793 = vld [vmem:[%s11 + $0x14] sm:$0xf]
      %v4794 = vld [vmem:[%s11 + $0x18] sm:$0xf]
      %v4795 = vld [vmem:[%s11 + $0x1c] sm:$0xf]
      %v4796 = vld [vmem:[%s11 + $0x20] sm:$0xf]
      %v4797 = vld [vmem:[%s11 + $0x24] sm:$0xf]
      %v4798 = vld [vmem:[%s11 + $0x28] sm:$0xf]
      %v4799 = vld [vmem:[%s11 + $0x2c] sm:$0xf]
      %v4800 = vld [vmem:[%s11 + $0x30] sm:$0xf]
      %v4801 = vld [vmem:[%s11 + $0x34] sm:$0xf]
      %v4802 = vld [vmem:[%s11 + $0x38] sm:$0xf]
      %v4803 = vld [vmem:[%s11 + $0x3c] sm:$0xf]
      %v4804 = vld [vmem:[%s12] sm:$0x1]
      %v4806 = vperm.slane %v4804, 0
      %v4824 = vunpack.c.l.b16 %v4788
      %v4825 = vunpack.c.l.b16 %v4789
      %v4826 = vunpack.c.l.b16 %v4790
      %v4827 = vunpack.c.l.b16 %v4791
      %v4828 = vunpack.c.l.b16 %v4792
      %v4829 = vunpack.c.l.b16 %v4793
      %v4830 = vunpack.c.l.b16 %v4794
      %v4831 = vunpack.c.l.b16 %v4795
      %v4832 = vunpack.c.l.b16 %v4796
      %v4833 = vunpack.c.l.b16 %v4797
      %v4834 = vunpack.c.l.b16 %v4798
      %v4835 = vunpack.c.l.b16 %v4799
      %v4836 = vunpack.c.l.b16 %v4800
      %v4837 = vunpack.c.l.b16 %v4801
      %v4838 = vunpack.c.l.b16 %v4802
      %v4839 = vunpack.c.l.b16 %v4803
      %v4840 = vpack.c.b16 %v4825, %v4824
      %v4841 = vpack.c.b16 %v4827, %v4826
      %v4842 = vpack.c.b16 %v4829, %v4828
      %v4843 = vpack.c.b16 %v4831, %v4830
      %v4844 = vpack.c.b16 %v4833, %v4832
      %v4845 = vpack.c.b16 %v4835, %v4834
      %v4846 = vpack.c.b16 %v4837, %v4836
      %v4847 = vpack.c.b16 %v4839, %v4838
      %4856 = vmatpush.bf16.msra.mxu0 %v4847
      %4857 = vmatpush.bf16.msra.mxu0 %v4846
      %4858 = vmatpush.bf16.msra.mxu0 %v4845
      %4859 = vmatpush.bf16.msra.mxu0 %v4844
      %4860 = vmatpush.bf16.msra.mxu0 %v4843
      %4861 = vmatpush.bf16.msra.mxu0 %v4842
      %4862 = vmatpush.bf16.msra.mxu0 %v4841
      %4863 = vmatpush.bf16.msra.mxu0 %v4840
      %4864 = vmatmul.bf16.gmra.mxu0 %v4784
      %v4865 = vpop.f32.mrf.mxu0
      %v4866 = vadd.f32 %v4806, %v4865
      %v4867 = vpop.f32.mrf.mxu0
      %v4868 = vadd.f32 %v4806, %v4867
      %4869 = vmatmul.bf16.gmra.mxu0 %v4785
      %v4870 = vpop.f32.mrf.mxu0
      %v4871 = vadd.f32 %v4806, %v4870
      %v4872 = vpop.f32.mrf.mxu0
      %v4873 = vadd.f32 %v4806, %v4872
      %4874 = vmatmul.bf16.gmra.mxu0 %v4786
      %v4875 = vpop.f32.mrf.mxu0
      %v4876 = vadd.f32 %v4806, %v4875
      %v4877 = vpop.f32.mrf.mxu0
      %v4878 = vadd.f32 %v4806, %v4877
      %4879 = vmatmul.bf16.gmra.mxu0 %v4787
      %v4880 = vpop.f32.mrf.mxu0
      %v4881 = vadd.f32 %v4806, %v4880
      %v4882 = vpop.f32.mrf.mxu0
      %v4883 = vadd.f32 %v4806, %v4882
      %4884 = vdwg.mxu0
      %v4885 = vtanh.pop %v4866
      %v4886 = vtanh.pop %v4868
      %v4887 = vtanh.pop %v4871
      %v4888 = vtanh.pop %v4873
      %v4889 = vtanh.pop %v4876
      %v4890 = vtanh.pop %v4878
      %v4891 = vtanh.pop %v4881
      %v4892 = vtanh.pop %v4883
      %v4893 = vld [vmem:[%s860 + $0x80] sm:$0xff]
      %v4894 = vld [vmem:[%s860 + $0x88] sm:$0xff]
      %v4895 = vld [vmem:[%s860 + $0x90] sm:$0xff]
      %v4896 = vld [vmem:[%s860 + $0x98] sm:$0xff]
      %v4897 = vld [vmem:[%s860 + $0xa0] sm:$0xff]
      %v4898 = vld [vmem:[%s860 + $0xa8] sm:$0xff]
      %v4899 = vld [vmem:[%s860 + $0xb0] sm:$0xff]
      %v4900 = vld [vmem:[%s860 + $0xb8] sm:$0xff]
      %v4901 = vadd.f32 %v4893, %v4885
      %v4902 = vadd.f32 %v4894, %v4886
      %v4903 = vadd.f32 %v4895, %v4887
      %v4904 = vadd.f32 %v4896, %v4888
      %v4905 = vadd.f32 %v4897, %v4889
      %v4906 = vadd.f32 %v4898, %v4890
      %v4907 = vadd.f32 %v4899, %v4891
      %v4908 = vadd.f32 %v4900, %v4892
      %v4909 = vmax.f32 %v4901, 0.0
      %v4910 = vmax.f32 %v4902, 0.0
      %v4911 = vmax.f32 %v4903, 0.0
      %v4912 = vmax.f32 %v4904, 0.0
      %v4913 = vmax.f32 %v4905, 0.0
      %v4914 = vmax.f32 %v4906, 0.0
      %v4915 = vmax.f32 %v4907, 0.0
      %v4916 = vmax.f32 %v4908, 0.0
      %v4917 = vmin.f32 %v4909, 1.0
      %v4918 = vmin.f32 %v4910, 1.0
      %v4919 = vmin.f32 %v4911, 1.0
      %v4920 = vmin.f32 %v4912, 1.0
      %v4921 = vmin.f32 %v4913, 1.0
      %v4922 = vmin.f32 %v4914, 1.0
      %v4923 = vmin.f32 %v4915, 1.0
      %v4924 = vmin.f32 %v4916, 1.0
      %4925 = vst [vmem:[%s865 + $0x80] sm:$0xff] %v4917
      %4926 = vst [vmem:[%s865 + $0x88] sm:$0xff] %v4918
      %4927 = vst [vmem:[%s865 + $0x90] sm:$0xff] %v4919
      %4928 = vst [vmem:[%s865 + $0x98] sm:$0xff] %v4920
      %4929 = vst [vmem:[%s865 + $0xa0] sm:$0xff] %v4921
      %4930 = vst [vmem:[%s865 + $0xa8] sm:$0xff] %v4922
      %4931 = vst [vmem:[%s865 + $0xb0] sm:$0xff] %v4923
      %4932 = vst [vmem:[%s865 + $0xb8] sm:$0xff] %v4924
      %v4933 = vld [vmem:[%s8 + $0x60] sm:$0xf]
      %v4934 = vld [vmem:[%s8 + $0x64] sm:$0xf]
      %v4935 = vld [vmem:[%s8 + $0x68] sm:$0xf]
      %v4936 = vld [vmem:[%s8 + $0x6c] sm:$0xf]
      %v4937 = vld [vmem:[%s8 + $0x70] sm:$0xf]
      %v4938 = vld [vmem:[%s8 + $0x74] sm:$0xf]
      %v4939 = vld [vmem:[%s8 + $0x78] sm:$0xf]
      %v4940 = vld [vmem:[%s8 + $0x7c] sm:$0xf]
      %v4949 = vunpack.c.l.b16 %v4933
      %v4950 = vunpack.c.l.b16 %v4934
      %v4951 = vunpack.c.l.b16 %v4935
      %v4952 = vunpack.c.l.b16 %v4936
      %v4953 = vunpack.c.l.b16 %v4937
      %v4954 = vunpack.c.l.b16 %v4938
      %v4955 = vunpack.c.l.b16 %v4939
      %v4956 = vunpack.c.l.b16 %v4940
      %v4957 = vpack.c.b16 %v4950, %v4949
      %v4958 = vpack.c.b16 %v4952, %v4951
      %v4959 = vpack.c.b16 %v4954, %v4953
      %v4960 = vpack.c.b16 %v4956, %v4955
      %v4962 = vsel %vm2216, %v4957, 0
      %v4965 = vsel %vm2216, %v4958, 0
      %v4968 = vsel %vm2216, %v4959, 0
      %v4971 = vsel %vm2216, %v4960, 0
      %4973 = vmatpush.bf16.msra.mxu0 0
      %4974 = vmatpush.bf16.msra.mxu0 0
      %4975 = vmatpush.bf16.msra.mxu0 0
      %4976 = vmatpush.bf16.msra.mxu0 0
      %4977 = vmatpush.bf16.msra.mxu0 0
      %4978 = vmatpush.bf16.msra.mxu0 0
      %4979 = vmatpush.bf16.msra.mxu0 0
      %4980 = vmatpush.bf16.msra.mxu0 %v3327
      %4981 = vmatmul.bf16.gmra.mxu0 %v4962
      %v4982 = vpop.f32.mrf.mxu0
      %v4983 = vadd.f32 0.0, %v4982
      %v4984 = vpop.f32.mrf.mxu0
      %v4985 = vadd.f32 0.0, %v4984
      %4986 = vmatmul.bf16.gmra.mxu0 %v4965
      %v4987 = vpop.f32.mrf.mxu0
      %v4988 = vadd.f32 0.0, %v4987
      %v4989 = vpop.f32.mrf.mxu0
      %v4990 = vadd.f32 0.0, %v4989
      %4991 = vmatmul.bf16.gmra.mxu0 %v4968
      %v4992 = vpop.f32.mrf.mxu0
      %v4993 = vadd.f32 0.0, %v4992
      %v4994 = vpop.f32.mrf.mxu0
      %v4995 = vadd.f32 0.0, %v4994
      %4996 = vmatmul.bf16.gmra.mxu0 %v4971
      %v4997 = vpop.f32.mrf.mxu0
      %v4998 = vadd.f32 0.0, %v4997
      %v4999 = vpop.f32.mrf.mxu0
      %v5000 = vadd.f32 0.0, %v4999
      %5001 = vdwg.mxu0
      %v5002 = vld [vmem:[%s9 + $0xc0] sm:$0xff]
      %v5003 = vld [vmem:[%s9 + $0xc8] sm:$0xff]
      %v5004 = vld [vmem:[%s9 + $0xd0] sm:$0xff]
      %v5005 = vld [vmem:[%s9 + $0xd8] sm:$0xff]
      %v5006 = vld [vmem:[%s9 + $0xe0] sm:$0xff]
      %v5007 = vld [vmem:[%s9 + $0xe8] sm:$0xff]
      %v5008 = vld [vmem:[%s9 + $0xf0] sm:$0xff]
      %v5009 = vld [vmem:[%s9 + $0xf8] sm:$0xff]
      %v5010 = vmul.f32 %v4983, %v5002
      %v5011 = vmul.f32 %v4985, %v5003
      %v5012 = vmul.f32 %v4988, %v5004
      %v5013 = vmul.f32 %v4990, %v5005
      %v5014 = vmul.f32 %v4993, %v5006
      %v5015 = vmul.f32 %v4995, %v5007
      %v5016 = vmul.f32 %v4998, %v5008
      %v5017 = vmul.f32 %v5000, %v5009
      %v5018 = vadd.f32 %v5010, 0.0
      %v5019 = vadd.f32 %v5011, 0.0
      %v5020 = vadd.f32 %v5012, 0.0
      %v5021 = vadd.f32 %v5013, 0.0
      %v5022 = vadd.f32 %v5014, 0.0
      %v5023 = vadd.f32 %v5015, 0.0
      %v5024 = vadd.f32 %v5016, 0.0
      %v5025 = vadd.f32 %v5017, 0.0
      %v5026 = vld [vmem:[%s3421 + $0x60] sm:$0xf]
      %v5027 = vld [vmem:[%s3421 + $0x64] sm:$0xf]
      %v5028 = vld [vmem:[%s3421 + $0x68] sm:$0xf]
      %v5029 = vld [vmem:[%s3421 + $0x6c] sm:$0xf]
      %v5030 = vld [vmem:[%s3421 + $0x70] sm:$0xf]
      %v5031 = vld [vmem:[%s3421 + $0x74] sm:$0xf]
      %v5032 = vld [vmem:[%s3421 + $0x78] sm:$0xf]
      %v5033 = vld [vmem:[%s3421 + $0x7c] sm:$0xf]
      %v5042 = vunpack.c.l.b16 %v5026
      %v5043 = vunpack.c.l.b16 %v5027
      %v5044 = vunpack.c.l.b16 %v5028
      %v5045 = vunpack.c.l.b16 %v5029
      %v5046 = vunpack.c.l.b16 %v5030
      %v5047 = vunpack.c.l.b16 %v5031
      %v5048 = vunpack.c.l.b16 %v5032
      %v5049 = vunpack.c.l.b16 %v5033
      %v5050 = vpack.c.b16 %v5043, %v5042
      %v5051 = vpack.c.b16 %v5045, %v5044
      %v5052 = vpack.c.b16 %v5047, %v5046
      %v5053 = vpack.c.b16 %v5049, %v5048
      %v5055 = vsel %vm2216, %v5050, 0
      %v5058 = vsel %vm2216, %v5051, 0
      %v5061 = vsel %vm2216, %v5052, 0
      %v5064 = vsel %vm2216, %v5053, 0
      %5066 = vmatpush.bf16.msra.mxu0 0
      %5067 = vmatpush.bf16.msra.mxu0 0
      %5068 = vmatpush.bf16.msra.mxu0 0
      %5069 = vmatpush.bf16.msra.mxu0 0
      %5070 = vmatpush.bf16.msra.mxu0 0
      %5071 = vmatpush.bf16.msra.mxu0 0
      %5072 = vmatpush.bf16.msra.mxu0 0
      %5073 = vmatpush.bf16.msra.mxu0 %v3327
      %5074 = vmatmul.bf16.gmra.mxu0 %v5055
      %v5075 = vpop.f32.mrf.mxu0
      %v5076 = vadd.f32 0.0, %v5075
      %v5077 = vpop.f32.mrf.mxu0
      %v5078 = vadd.f32 0.0, %v5077
      %5079 = vmatmul.bf16.gmra.mxu0 %v5058
      %v5080 = vpop.f32.mrf.mxu0
      %v5081 = vadd.f32 0.0, %v5080
      %v5082 = vpop.f32.mrf.mxu0
      %v5083 = vadd.f32 0.0, %v5082
      %5084 = vmatmul.bf16.gmra.mxu0 %v5061
      %v5085 = vpop.f32.mrf.mxu0
      %v5086 = vadd.f32 0.0, %v5085
      %v5087 = vpop.f32.mrf.mxu0
      %v5088 = vadd.f32 0.0, %v5087
      %5089 = vmatmul.bf16.gmra.mxu0 %v5064
      %v5090 = vpop.f32.mrf.mxu0
      %v5091 = vadd.f32 0.0, %v5090
      %v5092 = vpop.f32.mrf.mxu0
      %v5093 = vadd.f32 0.0, %v5092
      %5094 = vdwg.mxu0
      %v5095 = vld [vmem:[%s3491 + $0xc0] sm:$0xff]
      %v5096 = vld [vmem:[%s3491 + $0xc8] sm:$0xff]
      %v5097 = vld [vmem:[%s3491 + $0xd0] sm:$0xff]
      %v5098 = vld [vmem:[%s3491 + $0xd8] sm:$0xff]
      %v5099 = vld [vmem:[%s3491 + $0xe0] sm:$0xff]
      %v5100 = vld [vmem:[%s3491 + $0xe8] sm:$0xff]
      %v5101 = vld [vmem:[%s3491 + $0xf0] sm:$0xff]
      %v5102 = vld [vmem:[%s3491 + $0xf8] sm:$0xff]
      %v5103 = vmul.f32 %v5076, %v5095
      %v5104 = vmul.f32 %v5078, %v5096
      %v5105 = vmul.f32 %v5081, %v5097
      %v5106 = vmul.f32 %v5083, %v5098
      %v5107 = vmul.f32 %v5086, %v5099
      %v5108 = vmul.f32 %v5088, %v5100
      %v5109 = vmul.f32 %v5091, %v5101
      %v5110 = vmul.f32 %v5093, %v5102
      %v5111 = vadd.f32 %v5018, %v5103
      %v5112 = vadd.f32 %v5019, %v5104
      %v5113 = vadd.f32 %v5020, %v5105
      %v5114 = vadd.f32 %v5021, %v5106
      %v5115 = vadd.f32 %v5022, %v5107
      %v5116 = vadd.f32 %v5023, %v5108
      %v5117 = vadd.f32 %v5024, %v5109
      %v5118 = vadd.f32 %v5025, %v5110
      %v5119 = vld [vmem:[%s3516 + $0x60] sm:$0xf]
      %v5120 = vld [vmem:[%s3516 + $0x64] sm:$0xf]
      %v5121 = vld [vmem:[%s3516 + $0x68] sm:$0xf]
      %v5122 = vld [vmem:[%s3516 + $0x6c] sm:$0xf]
      %v5123 = vld [vmem:[%s3516 + $0x70] sm:$0xf]
      %v5124 = vld [vmem:[%s3516 + $0x74] sm:$0xf]
      %v5125 = vld [vmem:[%s3516 + $0x78] sm:$0xf]
      %v5126 = vld [vmem:[%s3516 + $0x7c] sm:$0xf]
      %v5135 = vunpack.c.l.b16 %v5119
      %v5136 = vunpack.c.l.b16 %v5120
      %v5137 = vunpack.c.l.b16 %v5121
      %v5138 = vunpack.c.l.b16 %v5122
      %v5139 = vunpack.c.l.b16 %v5123
      %v5140 = vunpack.c.l.b16 %v5124
      %v5141 = vunpack.c.l.b16 %v5125
      %v5142 = vunpack.c.l.b16 %v5126
      %v5143 = vpack.c.b16 %v5136, %v5135
      %v5144 = vpack.c.b16 %v5138, %v5137
      %v5145 = vpack.c.b16 %v5140, %v5139
      %v5146 = vpack.c.b16 %v5142, %v5141
      %v5148 = vsel %vm2216, %v5143, 0
      %v5151 = vsel %vm2216, %v5144, 0
      %v5154 = vsel %vm2216, %v5145, 0
      %v5157 = vsel %vm2216, %v5146, 0
      %5159 = vmatpush.bf16.msra.mxu0 0
      %5160 = vmatpush.bf16.msra.mxu0 0
      %5161 = vmatpush.bf16.msra.mxu0 0
      %5162 = vmatpush.bf16.msra.mxu0 0
      %5163 = vmatpush.bf16.msra.mxu0 0
      %5164 = vmatpush.bf16.msra.mxu0 0
      %5165 = vmatpush.bf16.msra.mxu0 0
      %5166 = vmatpush.bf16.msra.mxu0 %v3327
      %5167 = vmatmul.bf16.gmra.mxu0 %v5148
      %v5168 = vpop.f32.mrf.mxu0
      %v5169 = vadd.f32 0.0, %v5168
      %v5170 = vpop.f32.mrf.mxu0
      %v5171 = vadd.f32 0.0, %v5170
      %5172 = vmatmul.bf16.gmra.mxu0 %v5151
      %v5173 = vpop.f32.mrf.mxu0
      %v5174 = vadd.f32 0.0, %v5173
      %v5175 = vpop.f32.mrf.mxu0
      %v5176 = vadd.f32 0.0, %v5175
      %5177 = vmatmul.bf16.gmra.mxu0 %v5154
      %v5178 = vpop.f32.mrf.mxu0
      %v5179 = vadd.f32 0.0, %v5178
      %v5180 = vpop.f32.mrf.mxu0
      %v5181 = vadd.f32 0.0, %v5180
      %5182 = vmatmul.bf16.gmra.mxu0 %v5157
      %v5183 = vpop.f32.mrf.mxu0
      %v5184 = vadd.f32 0.0, %v5183
      %v5185 = vpop.f32.mrf.mxu0
      %v5186 = vadd.f32 0.0, %v5185
      %5187 = vdwg.mxu0
      %v5188 = vld [vmem:[%s3586 + $0xc0] sm:$0xff]
      %v5189 = vld [vmem:[%s3586 + $0xc8] sm:$0xff]
      %v5190 = vld [vmem:[%s3586 + $0xd0] sm:$0xff]
      %v5191 = vld [vmem:[%s3586 + $0xd8] sm:$0xff]
      %v5192 = vld [vmem:[%s3586 + $0xe0] sm:$0xff]
      %v5193 = vld [vmem:[%s3586 + $0xe8] sm:$0xff]
      %v5194 = vld [vmem:[%s3586 + $0xf0] sm:$0xff]
      %v5195 = vld [vmem:[%s3586 + $0xf8] sm:$0xff]
      %v5196 = vmul.f32 %v5169, %v5188
      %v5197 = vmul.f32 %v5171, %v5189
      %v5198 = vmul.f32 %v5174, %v5190
      %v5199 = vmul.f32 %v5176, %v5191
      %v5200 = vmul.f32 %v5179, %v5192
      %v5201 = vmul.f32 %v5181, %v5193
      %v5202 = vmul.f32 %v5184, %v5194
      %v5203 = vmul.f32 %v5186, %v5195
      %v5204 = vadd.f32 %v5111, %v5196
      %v5205 = vadd.f32 %v5112, %v5197
      %v5206 = vadd.f32 %v5113, %v5198
      %v5207 = vadd.f32 %v5114, %v5199
      %v5208 = vadd.f32 %v5115, %v5200
      %v5209 = vadd.f32 %v5116, %v5201
      %v5210 = vadd.f32 %v5117, %v5202
      %v5211 = vadd.f32 %v5118, %v5203
      %v5212 = vld [vmem:[%s3611 + $0x60] sm:$0xf]
      %v5213 = vld [vmem:[%s3611 + $0x64] sm:$0xf]
      %v5214 = vld [vmem:[%s3611 + $0x68] sm:$0xf]
      %v5215 = vld [vmem:[%s3611 + $0x6c] sm:$0xf]
      %v5216 = vld [vmem:[%s3611 + $0x70] sm:$0xf]
      %v5217 = vld [vmem:[%s3611 + $0x74] sm:$0xf]
      %v5218 = vld [vmem:[%s3611 + $0x78] sm:$0xf]
      %v5219 = vld [vmem:[%s3611 + $0x7c] sm:$0xf]
      %v5228 = vunpack.c.l.b16 %v5212
      %v5229 = vunpack.c.l.b16 %v5213
      %v5230 = vunpack.c.l.b16 %v5214
      %v5231 = vunpack.c.l.b16 %v5215
      %v5232 = vunpack.c.l.b16 %v5216
      %v5233 = vunpack.c.l.b16 %v5217
      %v5234 = vunpack.c.l.b16 %v5218
      %v5235 = vunpack.c.l.b16 %v5219
      %v5236 = vpack.c.b16 %v5229, %v5228
      %v5237 = vpack.c.b16 %v5231, %v5230
      %v5238 = vpack.c.b16 %v5233, %v5232
      %v5239 = vpack.c.b16 %v5235, %v5234
      %v5241 = vsel %vm2216, %v5236, 0
      %v5244 = vsel %vm2216, %v5237, 0
      %v5247 = vsel %vm2216, %v5238, 0
      %v5250 = vsel %vm2216, %v5239, 0
      %5252 = vmatpush.bf16.msra.mxu0 0
      %5253 = vmatpush.bf16.msra.mxu0 0
      %5254 = vmatpush.bf16.msra.mxu0 0
      %5255 = vmatpush.bf16.msra.mxu0 0
      %5256 = vmatpush.bf16.msra.mxu0 0
      %5257 = vmatpush.bf16.msra.mxu0 0
      %5258 = vmatpush.bf16.msra.mxu0 0
      %5259 = vmatpush.bf16.msra.mxu0 %v3327
      %5260 = vmatmul.bf16.gmra.mxu0 %v5241
      %v5261 = vpop.f32.mrf.mxu0
      %v5262 = vadd.f32 0.0, %v5261
      %v5263 = vpop.f32.mrf.mxu0
      %v5264 = vadd.f32 0.0, %v5263
      %5265 = vmatmul.bf16.gmra.mxu0 %v5244
      %v5266 = vpop.f32.mrf.mxu0
      %v5267 = vadd.f32 0.0, %v5266
      %v5268 = vpop.f32.mrf.mxu0
      %v5269 = vadd.f32 0.0, %v5268
      %5270 = vmatmul.bf16.gmra.mxu0 %v5247
      %v5271 = vpop.f32.mrf.mxu0
      %v5272 = vadd.f32 0.0, %v5271
      %v5273 = vpop.f32.mrf.mxu0
      %v5274 = vadd.f32 0.0, %v5273
      %5275 = vmatmul.bf16.gmra.mxu0 %v5250
      %v5276 = vpop.f32.mrf.mxu0
      %v5277 = vadd.f32 0.0, %v5276
      %v5278 = vpop.f32.mrf.mxu0
      %v5279 = vadd.f32 0.0, %v5278
      %5280 = vdwg.mxu0
      %v5281 = vld [vmem:[%s3681 + $0xc0] sm:$0xff]
      %v5282 = vld [vmem:[%s3681 + $0xc8] sm:$0xff]
      %v5283 = vld [vmem:[%s3681 + $0xd0] sm:$0xff]
      %v5284 = vld [vmem:[%s3681 + $0xd8] sm:$0xff]
      %v5285 = vld [vmem:[%s3681 + $0xe0] sm:$0xff]
      %v5286 = vld [vmem:[%s3681 + $0xe8] sm:$0xff]
      %v5287 = vld [vmem:[%s3681 + $0xf0] sm:$0xff]
      %v5288 = vld [vmem:[%s3681 + $0xf8] sm:$0xff]
      %v5289 = vmul.f32 %v5262, %v5281
      %v5290 = vmul.f32 %v5264, %v5282
      %v5291 = vmul.f32 %v5267, %v5283
      %v5292 = vmul.f32 %v5269, %v5284
      %v5293 = vmul.f32 %v5272, %v5285
      %v5294 = vmul.f32 %v5274, %v5286
      %v5295 = vmul.f32 %v5277, %v5287
      %v5296 = vmul.f32 %v5279, %v5288
      %v5297 = vadd.f32 %v5204, %v5289
      %v5298 = vadd.f32 %v5205, %v5290
      %v5299 = vadd.f32 %v5206, %v5291
      %v5300 = vadd.f32 %v5207, %v5292
      %v5301 = vadd.f32 %v5208, %v5293
      %v5302 = vadd.f32 %v5209, %v5294
      %v5303 = vadd.f32 %v5210, %v5295
      %v5304 = vadd.f32 %v5211, %v5296
      %v5305 = vld [vmem:[%s10] sm:$0x1]
      %v5307 = vperm.slane %v5305, 0
      %v5309 = vadd.f32 %v5297, %v5307
      %v5310 = vadd.f32 %v5298, %v5307
      %v5311 = vadd.f32 %v5299, %v5307
      %v5312 = vadd.f32 %v5300, %v5307
      %v5313 = vadd.f32 %v5301, %v5307
      %v5314 = vadd.f32 %v5302, %v5307
      %v5315 = vadd.f32 %v5303, %v5307
      %v5316 = vadd.f32 %v5304, %v5307
      %v5317 = vpack.c.bf16 %v5310, %v5309
      %v5318 = vpack.c.bf16 %v5312, %v5311
      %v5319 = vpack.c.bf16 %v5314, %v5313
      %v5320 = vpack.c.bf16 %v5316, %v5315
      %v5321 = vld [vmem:[%s11] sm:$0xf]
      %v5322 = vld [vmem:[%s11 + $0x4] sm:$0xf]
      %v5323 = vld [vmem:[%s11 + $0x8] sm:$0xf]
      %v5324 = vld [vmem:[%s11 + $0xc] sm:$0xf]
      %v5325 = vld [vmem:[%s11 + $0x10] sm:$0xf]
      %v5326 = vld [vmem:[%s11 + $0x14] sm:$0xf]
      %v5327 = vld [vmem:[%s11 + $0x18] sm:$0xf]
      %v5328 = vld [vmem:[%s11 + $0x1c] sm:$0xf]
      %v5329 = vld [vmem:[%s11 + $0x20] sm:$0xf]
      %v5330 = vld [vmem:[%s11 + $0x24] sm:$0xf]
      %v5331 = vld [vmem:[%s11 + $0x28] sm:$0xf]
      %v5332 = vld [vmem:[%s11 + $0x2c] sm:$0xf]
      %v5333 = vld [vmem:[%s11 + $0x30] sm:$0xf]
      %v5334 = vld [vmem:[%s11 + $0x34] sm:$0xf]
      %v5335 = vld [vmem:[%s11 + $0x38] sm:$0xf]
      %v5336 = vld [vmem:[%s11 + $0x3c] sm:$0xf]
      %v5337 = vld [vmem:[%s12] sm:$0x1]
      %v5339 = vperm.slane %v5337, 0
      %v5357 = vunpack.c.l.b16 %v5321
      %v5358 = vunpack.c.l.b16 %v5322
      %v5359 = vunpack.c.l.b16 %v5323
      %v5360 = vunpack.c.l.b16 %v5324
      %v5361 = vunpack.c.l.b16 %v5325
      %v5362 = vunpack.c.l.b16 %v5326
      %v5363 = vunpack.c.l.b16 %v5327
      %v5364 = vunpack.c.l.b16 %v5328
      %v5365 = vunpack.c.l.b16 %v5329
      %v5366 = vunpack.c.l.b16 %v5330
      %v5367 = vunpack.c.l.b16 %v5331
      %v5368 = vunpack.c.l.b16 %v5332
      %v5369 = vunpack.c.l.b16 %v5333
      %v5370 = vunpack.c.l.b16 %v5334
      %v5371 = vunpack.c.l.b16 %v5335
      %v5372 = vunpack.c.l.b16 %v5336
      %v5373 = vpack.c.b16 %v5358, %v5357
      %v5374 = vpack.c.b16 %v5360, %v5359
      %v5375 = vpack.c.b16 %v5362, %v5361
      %v5376 = vpack.c.b16 %v5364, %v5363
      %v5377 = vpack.c.b16 %v5366, %v5365
      %v5378 = vpack.c.b16 %v5368, %v5367
      %v5379 = vpack.c.b16 %v5370, %v5369
      %v5380 = vpack.c.b16 %v5372, %v5371
      %5389 = vmatpush.bf16.msra.mxu0 %v5380
      %5390 = vmatpush.bf16.msra.mxu0 %v5379
      %5391 = vmatpush.bf16.msra.mxu0 %v5378
      %5392 = vmatpush.bf16.msra.mxu0 %v5377
      %5393 = vmatpush.bf16.msra.mxu0 %v5376
      %5394 = vmatpush.bf16.msra.mxu0 %v5375
      %5395 = vmatpush.bf16.msra.mxu0 %v5374
      %5396 = vmatpush.bf16.msra.mxu0 %v5373
      %5397 = vmatmul.bf16.gmra.mxu0 %v5317
      %v5398 = vpop.f32.mrf.mxu0
      %v5399 = vadd.f32 %v5339, %v5398
      %v5400 = vpop.f32.mrf.mxu0
      %v5401 = vadd.f32 %v5339, %v5400
      %5402 = vmatmul.bf16.gmra.mxu0 %v5318
      %v5403 = vpop.f32.mrf.mxu0
      %v5404 = vadd.f32 %v5339, %v5403
      %v5405 = vpop.f32.mrf.mxu0
      %v5406 = vadd.f32 %v5339, %v5405
      %5407 = vmatmul.bf16.gmra.mxu0 %v5319
      %v5408 = vpop.f32.mrf.mxu0
      %v5409 = vadd.f32 %v5339, %v5408
      %v5410 = vpop.f32.mrf.mxu0
      %v5411 = vadd.f32 %v5339, %v5410
      %5412 = vmatmul.bf16.gmra.mxu0 %v5320
      %v5413 = vpop.f32.mrf.mxu0
      %v5414 = vadd.f32 %v5339, %v5413
      %v5415 = vpop.f32.mrf.mxu0
      %v5416 = vadd.f32 %v5339, %v5415
      %5417 = vdwg.mxu0
      %v5418 = vtanh.pop %v5399
      %v5419 = vtanh.pop %v5401
      %v5420 = vtanh.pop %v5404
      %v5421 = vtanh.pop %v5406
      %v5422 = vtanh.pop %v5409
      %v5423 = vtanh.pop %v5411
      %v5424 = vtanh.pop %v5414
      %v5425 = vtanh.pop %v5416
      %v5426 = vld [vmem:[%s860 + $0xc0] sm:$0xff]
      %v5427 = vld [vmem:[%s860 + $0xc8] sm:$0xff]
      %v5428 = vld [vmem:[%s860 + $0xd0] sm:$0xff]
      %v5429 = vld [vmem:[%s860 + $0xd8] sm:$0xff]
      %v5430 = vld [vmem:[%s860 + $0xe0] sm:$0xff]
      %v5431 = vld [vmem:[%s860 + $0xe8] sm:$0xff]
      %v5432 = vld [vmem:[%s860 + $0xf0] sm:$0xff]
      %v5433 = vld [vmem:[%s860 + $0xf8] sm:$0xff]
      %v5434 = vadd.f32 %v5426, %v5418
      %v5435 = vadd.f32 %v5427, %v5419
      %v5436 = vadd.f32 %v5428, %v5420
      %v5437 = vadd.f32 %v5429, %v5421
      %v5438 = vadd.f32 %v5430, %v5422
      %v5439 = vadd.f32 %v5431, %v5423
      %v5440 = vadd.f32 %v5432, %v5424
      %v5441 = vadd.f32 %v5433, %v5425
      %v5442 = vmax.f32 %v5434, 0.0
      %v5443 = vmax.f32 %v5435, 0.0
      %v5444 = vmax.f32 %v5436, 0.0
      %v5445 = vmax.f32 %v5437, 0.0
      %v5446 = vmax.f32 %v5438, 0.0
      %v5447 = vmax.f32 %v5439, 0.0
      %v5448 = vmax.f32 %v5440, 0.0
      %v5449 = vmax.f32 %v5441, 0.0
      %v5450 = vmin.f32 %v5442, 1.0
      %v5451 = vmin.f32 %v5443, 1.0
      %v5452 = vmin.f32 %v5444, 1.0
      %v5453 = vmin.f32 %v5445, 1.0
      %v5454 = vmin.f32 %v5446, 1.0
      %v5455 = vmin.f32 %v5447, 1.0
      %v5456 = vmin.f32 %v5448, 1.0
      %v5457 = vmin.f32 %v5449, 1.0
      %5458 = vst [vmem:[%s865 + $0xc0] sm:$0xff] %v5450
      %5459 = vst [vmem:[%s865 + $0xc8] sm:$0xff] %v5451
      %5460 = vst [vmem:[%s865 + $0xd0] sm:$0xff] %v5452
      %5461 = vst [vmem:[%s865 + $0xd8] sm:$0xff] %v5453
      %5462 = vst [vmem:[%s865 + $0xe0] sm:$0xff] %v5454
      %5463 = vst [vmem:[%s865 + $0xe8] sm:$0xff] %v5455
      %5464 = vst [vmem:[%s865 + $0xf0] sm:$0xff] %v5456
      %5465 = vst [vmem:[%s865 + $0xf8] sm:$0xff] %v5457
      %p5466 = scmp.lt.s32.totalorder %s39, 1
      %s5467 = scalar_select %p5466, %s39, 1
      %s5468 = smul.addr %s5467, 32
      %s5469 = smul.addr %s5468, 8
      %s5470 = scalar_lea.vmem %s28, %s5469
      // Predicated region
      $region133: #{residule_conv_v2_forward.1} parent=131 // pred_check
        %p5471 = pneg %p655
      $region134: #{residule_conv_v2_forward.1} parent=131 // pred_check_branch
        %5473 = sbr.rel (%p5471) target = $region136
      $region135: #{residule_conv_v2_forward.1} parent=131 // pred_region
        _
      $region136: #{residule_conv_v2_forward.1} parent=131 // pred_fallthru
        _
    $region132: #{residule_conv_v2_forward.1} parent=5 // pred_fallthru
      _
    %p5474 = scmp.le.s32.totalorder 2, %s34
    // Predicated region
    $region137: #{residule_conv_v2_forward.1} parent=5 // pred_check
      %p5475 = pneg %p5474
    $region138: #{residule_conv_v2_forward.1} parent=5 // pred_check_branch
      %5477 = sbr.rel (%p5475) target = $region140
    $region139: #{residule_conv_v2_forward.1} parent=5 // pred_region
      %s5478 = ssub.s32 %s34, 2
      // Predicated region
      $region141: #{residule_conv_v2_forward.1} parent=139 // pred_check
        %p5479 = pneg %p661
      $region142: #{residule_conv_v2_forward.1} parent=139 // pred_check_branch
        %5481 = sbr.rel (%p5479) target = $region144
      $region143: #{residule_conv_v2_forward.1} parent=139 // pred_region
        %p5482 = scmp.lt.s32.totalorder %s40, 1
        %s5483 = scalar_select %p5482, %s40, 1
        %s5484 = smul.addr %s5483, 32
        %s5485 = smul.addr %s5484, 8
        %s5486 = scalar_lea.vmem %s28, %s5485
      $region144: #{residule_conv_v2_forward.1} parent=139 // pred_fallthru
        _
    $region140: #{residule_conv_v2_forward.1} parent=5 // pred_fallthru
      _
  $region6: #{residule_conv_v2_forward.1} parent=0 // loop_footer
    %s38 = sadd.s32 1, %s34
  $region7: #{residule_conv_v2_forward.1} parent=0 // loop_footer_branch
    %33 = sbr.rel target = $region3
  $region8: #{residule_conv_v2_forward.1} parent=0 // loop_exit
    _

</llo_original>
